<compile_context>
chip_gen: v7x
topology: tpu7x:2x2x1
jax: 0.10.0
libtpu: 0.0.40
codegen_flags: <defaults>
</compile_context>

<pallas_src>
import functools

import jax
import jax.numpy as jnp
from jax import lax
from jax.experimental import pallas as pl
from jax.experimental.pallas import tpu as pltpu

# 32 MiB is ample for this module even at its production 256x256 input (row-tiled conv
# blocks are a few MiB); on v5e/v6e with much larger maps raise this together with tile_h.
_VMEM_LIMIT_BYTES = 32 * 1024 * 1024


# ----------------------------------------------------------------------------
# Conv (+bias+ReLU) kernel: VALID, stride-1, channels-last, KH pre-folded into C.
# ----------------------------------------------------------------------------
def _conv_relu_kernel(x_ref, w_ref, b_ref, o_ref, *, KW, WOP):
    """x_ref: (1, TH, WIP, KC) KH-folded input row tile; w_ref: (KW, KC, Cout);
    b_ref: (1, Cout) f32; o_ref: (1, TH, WOP, Cout)."""
    blk = x_ref[0]                                   # load the row tile once
    TH, _, KC = blk.shape
    cout = o_ref.shape[-1]
    acc = jnp.zeros((TH * WOP, cout), jnp.float32)
    for kw in range(KW):                             # kw shift = value slice, no reload
        patch = blk[:, kw:kw + WOP, :].reshape(TH * WOP, KC)
        acc = acc + jnp.dot(patch, w_ref[kw], preferred_element_type=jnp.float32)
    y = jnp.maximum(acc + b_ref[...], 0.0)
    o_ref[0] = y.reshape(TH, WOP, cout).astype(o_ref.dtype)


def conv2d_relu(x, w_k, b, valid_hw, *, tile_h=32):
    """VALID stride-1 conv + bias + ReLU on a (possibly padded) channels-last activation.

    x: (N, Hx, Wx, C); rows/cols beyond valid_hw may hold junk (VALID-safe).
    w_k: (KW, KH*C, Cout); b: (1, Cout) float32; valid_hw: true (H, W) extent of x.
    Returns (out, (HO, WO)): out is padded (N, HOP, WOP, Cout), (HO, WO) its valid extent.
    """
    N, Hx, Wx, C = x.shape
    Hv, Wv = valid_hw
    KW, KC, Cout = w_k.shape
    KH = KC // C
    HO, WO = Hv - KH + 1, Wv - KW + 1
    TH = min(tile_h, HO)
    GH = pl.cdiv(HO, TH)
    HOP = GH * TH                       # padded output rows (junk tail tracked by caller)
    WOP = pl.cdiv(WO, 8) * 8            # output cols padded to a sublane multiple
    WIP = WOP + KW - 1
    xf = fold_kh(x, KH, HOP, WIP)       # (N, HOP, WIP, KH*C), one fused XLA pass

    kernel = functools.partial(_conv_relu_kernel, KW=KW, WOP=WOP)
    out = pl.pallas_call(
        kernel,
        out_shape=jax.ShapeDtypeStruct((N, HOP, WOP, Cout), x.dtype),
        grid=(N, GH),
        in_specs=[
            pl.BlockSpec((1, TH, WIP, KC), lambda n, h: (n, h, 0, 0)),
            pl.BlockSpec((KW, KC, Cout), lambda n, h: (0, 0, 0)),
            pl.BlockSpec((1, Cout), lambda n, h: (0, 0)),
        ],
        out_specs=pl.BlockSpec((1, TH, WOP, Cout), lambda n, h: (n, h, 0, 0)),
        compiler_params=pltpu.CompilerParams(
            dimension_semantics=("parallel", "parallel"),
            vmem_limit_bytes=_VMEM_LIMIT_BYTES),
    )(xf, w_k, b)
    return out, (HO, WO)


# ----------------------------------------------------------------------------
# Fused conv3 + spatial-softmax kernel (conv output never goes to HBM).
# ----------------------------------------------------------------------------
def _conv3_softmax_kernel(x_ref, w_ref, b_ref, mask_ref, pos_ref, o_ref,
                          *, KW, WOP, inv_temp):
    """x_ref: (1, HO, WIP, KC) folded conv3 input; w_ref: (KW, KC, C3); b_ref: (1, C3);
    mask_ref: (1, HO*WOP) additive logit mask (0 valid / -1e30 padded col);
    pos_ref: (HO*WOP, 3) columns [1, pos_x, pos_y]; o_ref: (1, C3, 2) = [E[x], E[y]]."""
    blk = x_ref[0]
    HO, _, KC = blk.shape
    c3 = w_ref.shape[-1]
    acc = jnp.zeros((HO * WOP, c3), jnp.float32)
    for kw in range(KW):
        patch = blk[:, kw:kw + WOP, :].reshape(HO * WOP, KC)
        acc = acc + jnp.dot(patch, w_ref[kw], preferred_element_type=jnp.float32)
    feat = jnp.maximum(acc + b_ref[...], 0.0)         # (HWP, C3) spatial-major conv output
    # Lane-dense channel-major logits; padded columns get -1e30 so they vanish exactly.
    z = feat.T * inv_temp + mask_ref[...]             # (C3, HWP)
    m = jnp.max(z, axis=-1, keepdims=True)            # (C3, 1)
    e = jnp.exp(z - m)                                 # masked cols -> exp(-huge) == 0
    # [sum(e), sum(e*x), sum(e*y)] per channel as one MXU dot (idle unit otherwise).
    mom = jnp.dot(e, pos_ref[...], preferred_element_type=jnp.float32)   # (C3, 3)
    o_ref[0] = (mom[:, 1:3] / mom[:, 0:1]).astype(o_ref.dtype)           # exact divide


def conv3_spatial_softmax(x, w_k, b, valid_hw, temperature):
    N, Hx, Wx, C = x.shape
    Hv, Wv = valid_hw
    KW, KC, C3 = w_k.shape
    KH = KC // C
    HO, WO = Hv - KH + 1, Wv - KW + 1
    WOP = pl.cdiv(WO, 8) * 8
    WIP = WOP + KW - 1
    HWP = HO * WOP
    xf = fold_kh(x, KH, HO, WIP)                       # (N, HO, WIP, KC)
    pos3, mask = make_pos3_mask(HO, WO, WOP)           # (HWP, 3), (1, HWP) constants

    kernel = functools.partial(_conv3_softmax_kernel, KW=KW, WOP=WOP,
                               inv_temp=1.0 / float(temperature))
    out = pl.pallas_call(
        kernel,
        out_shape=jax.ShapeDtypeStruct((N, C3, 2), jnp.float32),
        grid=(N,),
        in_specs=[
            pl.BlockSpec((1, HO, WIP, KC), lambda n: (n, 0, 0, 0)),
            pl.BlockSpec((KW, KC, C3), lambda n: (0, 0, 0)),
            pl.BlockSpec((1, C3), lambda n: (0, 0)),
            pl.BlockSpec((1, HWP), lambda n: (0, 0)),
            pl.BlockSpec((HWP, 3), lambda n: (0, 0)),
        ],
        out_specs=pl.BlockSpec((1, C3, 2), lambda n: (n, 0, 0)),
        compiler_params=pltpu.CompilerParams(
            dimension_semantics=("parallel",),
            vmem_limit_bytes=_VMEM_LIMIT_BYTES),
    )(xf, w_k, b, mask, pos3)
    # Row-major flatten of (C3, 2) == torch.cat([ex, ey], 1).view(-1, 2*C):
    # ordering [x0, y0, x1, y1, ...].
    return out.reshape(N, 2 * C3)


# ----------------------------------------------------------------------------
# Plain-JAX glue: layout transforms and parameter packing (hoisted, done once).
# ----------------------------------------------------------------------------
def fold_kh(x, KH, out_rows, out_cols):
    """Fold the KH kernel-row taps into the channel dim (single XLA pad/shift/concat):
    result[n, h, w, kh*C:(kh+1)*C] = x[n, h+kh, w, :] (zero where out of range).
    x: (N, Hx, Wx, C) -> (N, out_rows, out_cols, KH*C)."""
    N, Hx, Wx, C = x.shape
    need_h = out_rows + KH - 1
    pad_h = max(0, need_h - Hx)
    pad_w = max(0, out_cols - Wx)
    if pad_h or pad_w:
        x = jnp.pad(x, ((0, 0), (0, pad_h), (0, pad_w), (0, 0)))
    x = x[:, :need_h, :out_cols, :]
    return jnp.concatenate([x[:, kh:kh + out_rows] for kh in range(KH)], axis=-1)


def space_to_depth_2x2(x_nhwc):
    N, H, W, C = x_nhwc.shape
    assert H % 2 == 0 and W % 2 == 0
    x = x_nhwc.reshape(N, H // 2, 2, W // 2, 2, C)
    x = x.transpose(0, 1, 3, 2, 4, 5)
    return x.reshape(N, H // 2, W // 2, 4 * C)


def pack_stride2_weights(w_hwio):
    """Repack a 7x7 stride-2 conv weight into the equivalent 4x4 stride-1 conv weight
    acting on a 2x2 space-to-depth input (exact reformulation)."""
    KH, KW, Cin, Cout = w_hwio.shape
    Q = (KH + 1) // 2
    w2 = jnp.zeros((Q, Q, 4 * Cin, Cout), w_hwio.dtype)
    for qh in range(Q):
        for qw in range(Q):
            for ph in range(2):
                for pw in range(2):
                    kh, kw = 2 * qh + ph, 2 * qw + pw
                    if kh < KH and kw < KW:
                        cs = (ph * 2 + pw) * Cin
                        w2 = w2.at[qh, qw, cs:cs + Cin, :].set(w_hwio[kh, kw])
    return w2


def make_pos_flat(H, W):
    # Mirrors SpatialSoftmax.__init__ (meshgrid, 'xy' indexing).  The torch module
    # hardcodes a square 117x117 grid; here the grid matches the actual conv output so
    # small demo shapes stay self-consistent (square maps => same convention).
    pos_x, pos_y = jnp.meshgrid(jnp.linspace(-1.0, 1.0, H),
                                jnp.linspace(-1.0, 1.0, W))
    return pos_x.reshape(H * W), pos_y.reshape(H * W)


def make_pos3_mask(H, W, WOP):
    """pos3: (H*WOP, 3) columns [1, pos_x, pos_y] (zeros at padded cols);
    mask: (1, H*WOP) additive logit mask (0 valid, -1e30 padded col)."""
    px_f, py_f = make_pos_flat(H, W)
    px = px_f.reshape(H, W).astype(jnp.float32)
    py = py_f.reshape(H, W).astype(jnp.float32)
    ones = jnp.ones((H, W), jnp.float32)
    pad = ((0, 0), (0, WOP - W))
    ones_p = jnp.pad(ones, pad)
    pos3 = jnp.stack([ones_p, jnp.pad(px, pad), jnp.pad(py, pad)], axis=-1)
    pos3 = pos3.reshape(H * WOP, 3)
    mask = jnp.where(ones_p > 0.5, 0.0, -1e30).reshape(1, H * WOP)
    return pos3, mask


def init_params(key, inp_channels, out_size):
    final_c = out_size // 2
    shapes = [(64, inp_channels, 7, 7), (32, 64, 5, 5), (final_c, 32, 5, 5)]
    convs = []
    for i, s in enumerate(shapes):
        kw_, kb_ = jax.random.split(jax.random.fold_in(key, i))
        fan_in = s[1] * s[2] * s[3]
        w = jax.random.normal(kw_, s, jnp.float32) / jnp.sqrt(float(fan_in))
        b = 0.1 * jax.random.normal(kb_, (s[0],), jnp.float32)
        convs.append((w, b))
    return {"convs": convs, "temperature": 1.0}


def prepare_params(params, conv_dtype=jnp.bfloat16):
    """Hoisted weight packing (done once, outside the jitted forward):
    OIHW -> (KW, KH*Cin, Cout) in conv_dtype; biases -> (1, Cout) float32."""
    (w1, b1), (w2, b2), (w3, b3) = params["convs"]          # torch OIHW layout

    def to_k(w_hwio):                                        # (KH,KW,Cin,Cout) -> (KW, KH*Cin, Cout)
        KH, KW, Cin, Cout = w_hwio.shape
        return jnp.transpose(w_hwio, (1, 0, 2, 3)).reshape(KW, KH * Cin, Cout)

    w1p = pack_stride2_weights(jnp.transpose(w1, (2, 3, 1, 0)))   # 7x7 s2 -> 4x4 s1 on s2d
    ws = [to_k(w1p).astype(conv_dtype),
          to_k(jnp.transpose(w2, (2, 3, 1, 0))).astype(conv_dtype),
          to_k(jnp.transpose(w3, (2, 3, 1, 0))).astype(conv_dtype)]
    bs = [b1.reshape(1, -1).astype(jnp.float32),
          b2.reshape(1, -1).astype(jnp.float32),
          b3.reshape(1, -1).astype(jnp.float32)]
    return {"w": ws, "b": bs}


@functools.partial(jax.jit, static_argnames=("temperature",))
def spatial_softmax_image_encoder(img_nchw, packed, temperature=1.0):
    # TODO(synk): temperature is a learnable nn.Parameter in torch; it is baked in as a
    # static scalar here (inference-equivalent only).
    w1, w2, w3 = packed["w"]
    b1, b2, b3 = packed["b"]
    dt = w1.dtype
    x = jnp.transpose(img_nchw, (0, 2, 3, 1)).astype(dt)      # NCHW -> NHWC (+ bf16 cast)
    x = space_to_depth_2x2(x)                                  # conv1: 7x7 s2 == 4x4 s1 here
    N, H1, W1, _ = x.shape
    x, valid = conv2d_relu(x, w1, b1, (H1, W1))
    x, valid = conv2d_relu(x, w2, b2, valid)
    return conv3_spatial_softmax(x, w3, b3, valid, temperature)


# ----------------------------------------------------------------------------
# Pure-JAX reference (correctness check only)
# ----------------------------------------------------------------------------
def reference_forward(img_nchw, params):
    x = img_nchw
    for (w, b), s in zip(params["convs"], (2, 1, 1)):
        x = lax.conv_general_dilated(x, w, (s, s), "VALID",
                                     dimension_numbers=("NCHW", "OIHW", "NCHW"))
        x = jnp.maximum(x + b[None, :, None, None], 0.0)
    N, C, H, W = x.shape
    pos_x, pos_y = make_pos_flat(H, W)
    feat = x.reshape(N * C, H * W)
    p = jax.nn.softmax(feat / params["temperature"], axis=-1)
    ex = jnp.sum(pos_x[None, :] * p, axis=1, keepdims=True)
    ey = jnp.sum(pos_y[None, :] * p, axis=1, keepdims=True)
    return jnp.concatenate([ex, ey], axis=1).reshape(N, C * 2)


if __name__ == "__main__":
    key = jax.random.PRNGKey(0)
    N, inp_channels, H, W = 2, 4, 32, 32
    out_size = 16                                   # -> final_c = 8, output (N, 16)

    k_img, k_par = jax.random.split(key)
    img = jax.random.normal(k_img, (N, inp_channels, H, W), jnp.float32)
    params = init_params(k_par, inp_channels, out_size)

    ref = jax.block_until_ready(reference_forward(img, params))

    # Exact-parity path: f32 conv operands (same kernels, just a dtype choice).
    packed_f32 = prepare_params(params, jnp.float32)
    out_f32 = jax.block_until_ready(
        spatial_softmax_image_encoder(img, packed_f32, temperature=1.0))
    assert out_f32.shape == (N, out_size), out_f32.shape
    err_f32 = float(jnp.max(jnp.abs(out_f32 - ref)))
    assert err_f32 < 2e-3, f"f32 path max abs error {err_f32}"

    # Default fast path: bf16 conv operands, f32 accumulation (native MXU format).
    packed_bf16 = prepare_params(params, jnp.bfloat16)
    out_bf16 = jax.block_until_ready(
        spatial_softmax_image_encoder(img, packed_bf16, temperature=1.0))
    assert out_bf16.shape == (N, out_size), out_bf16.shape
    err_bf16 = float(jnp.max(jnp.abs(out_bf16 - ref)))
    assert err_bf16 < 1e-1, f"bf16 path max abs error {err_bf16}"

    print("KERNEL_OK")
</pallas_src>

<mosaic_0001>
module attributes {stable_mosaic.version = 11 : i64} {
  func.func @_conv_relu_kernel(%arg0: i32, %arg1: i32, %arg2: memref<1x13x19x64xf32, #tpu.memory_space<vmem>>, %arg3: memref<4x64x64xf32, #tpu.memory_space<vmem>>, %arg4: memref<1x64xf32, #tpu.memory_space<vmem>>, %arg5: memref<1x13x16x64xf32, #tpu.memory_space<vmem>>) attributes {dimension_semantics = [#tpu.dimension_semantics<parallel>, #tpu.dimension_semantics<parallel>], iteration_bounds = array<i64: 2, 1>, scalar_prefetch = 0 : i64, scratch_operands = 0 : i64, tpu.core_type = #tpu.core_type<tc>, window_params = [{transform_indices = @transform_0, window_bounds = array<i64: 1, 13, 19, 64>}, {pipeline_mode = #tpu.pipeline_mode<synchronous>, transform_indices = @transform_1, window_bounds = array<i64: 4, 64, 64>}, {pipeline_mode = #tpu.pipeline_mode<synchronous>, transform_indices = @transform_2, window_bounds = array<i64: 1, 64>}, {transform_indices = @transform_3, window_bounds = array<i64: 1, 13, 16, 64>}]} {
    %c0 = arith.constant 0 : index
    %c0_0 = arith.constant 0 : index
    %c0_1 = arith.constant 0 : index
    %c0_2 = arith.constant 0 : index
    %0 = vector.load %arg2[%c0, %c0_0, %c0_1, %c0_2] : memref<1x13x19x64xf32, #tpu.memory_space<vmem>>, vector<1x13x19x64xf32>
    %1 = vector.shape_cast %0 : vector<1x13x19x64xf32> to vector<13x19x64xf32>
    %cst = arith.constant 0.000000e+00 : f32
    %2 = vector.broadcast %cst : f32 to vector<208x64xf32>
    %3 = vector.extract_strided_slice %1 {offsets = [0, 0, 0], sizes = [13, 16, 64], strides = [1, 1, 1]} : vector<13x19x64xf32> to vector<13x16x64xf32>
    %4 = vector.shape_cast %3 : vector<13x16x64xf32> to vector<208x64xf32>
    %c0_3 = arith.constant 0 : index
    %c0_4 = arith.constant 0 : index
    %c0_5 = arith.constant 0 : index
    %5 = vector.load %arg3[%c0_3, %c0_4, %c0_5] : memref<4x64x64xf32, #tpu.memory_space<vmem>>, vector<1x64x64xf32>
    %6 = vector.shape_cast %5 : vector<1x64x64xf32> to vector<64x64xf32>
    %cst_6 = arith.constant dense<0.000000e+00> : vector<208x64xf32>
    %7 = tpu.matmul %4, %6, %cst_6 {dimension_numbers = #tpu.dot_dimension_numbers<[1], [0], [0], [1], [0, 0, 1, 1], [], []>} : vector<208x64xf32>, vector<64x64xf32>, vector<208x64xf32> -> vector<208x64xf32>
    %8 = arith.addf %2, %7 : vector<208x64xf32>
    %9 = vector.extract_strided_slice %1 {offsets = [0, 1, 0], sizes = [13, 16, 64], strides = [1, 1, 1]} : vector<13x19x64xf32> to vector<13x16x64xf32>
    %10 = vector.shape_cast %9 : vector<13x16x64xf32> to vector<208x64xf32>
    %c1 = arith.constant 1 : index
    %c0_7 = arith.constant 0 : index
    %c0_8 = arith.constant 0 : index
    %11 = vector.load %arg3[%c1, %c0_7, %c0_8] : memref<4x64x64xf32, #tpu.memory_space<vmem>>, vector<1x64x64xf32>
    %12 = vector.shape_cast %11 : vector<1x64x64xf32> to vector<64x64xf32>
    %cst_9 = arith.constant dense<0.000000e+00> : vector<208x64xf32>
    %13 = tpu.matmul %10, %12, %cst_9 {dimension_numbers = #tpu.dot_dimension_numbers<[1], [0], [0], [1], [0, 0, 1, 1], [], []>} : vector<208x64xf32>, vector<64x64xf32>, vector<208x64xf32> -> vector<208x64xf32>
    %14 = arith.addf %8, %13 : vector<208x64xf32>
    %15 = vector.extract_strided_slice %1 {offsets = [0, 2, 0], sizes = [13, 16, 64], strides = [1, 1, 1]} : vector<13x19x64xf32> to vector<13x16x64xf32>
    %16 = vector.shape_cast %15 : vector<13x16x64xf32> to vector<208x64xf32>
    %c2 = arith.constant 2 : index
    %c0_10 = arith.constant 0 : index
    %c0_11 = arith.constant 0 : index
    %17 = vector.load %arg3[%c2, %c0_10, %c0_11] : memref<4x64x64xf32, #tpu.memory_space<vmem>>, vector<1x64x64xf32>
    %18 = vector.shape_cast %17 : vector<1x64x64xf32> to vector<64x64xf32>
    %cst_12 = arith.constant dense<0.000000e+00> : vector<208x64xf32>
    %19 = tpu.matmul %16, %18, %cst_12 {dimension_numbers = #tpu.dot_dimension_numbers<[1], [0], [0], [1], [0, 0, 1, 1], [], []>} : vector<208x64xf32>, vector<64x64xf32>, vector<208x64xf32> -> vector<208x64xf32>
    %20 = arith.addf %14, %19 : vector<208x64xf32>
    %21 = vector.extract_strided_slice %1 {offsets = [0, 3, 0], sizes = [13, 16, 64], strides = [1, 1, 1]} : vector<13x19x64xf32> to vector<13x16x64xf32>
    %22 = vector.shape_cast %21 : vector<13x16x64xf32> to vector<208x64xf32>
    %c3 = arith.constant 3 : index
    %c0_13 = arith.constant 0 : index
    %c0_14 = arith.constant 0 : index
    %23 = vector.load %arg3[%c3, %c0_13, %c0_14] : memref<4x64x64xf32, #tpu.memory_space<vmem>>, vector<1x64x64xf32>
    %24 = vector.shape_cast %23 : vector<1x64x64xf32> to vector<64x64xf32>
    %cst_15 = arith.constant dense<0.000000e+00> : vector<208x64xf32>
    %25 = tpu.matmul %22, %24, %cst_15 {dimension_numbers = #tpu.dot_dimension_numbers<[1], [0], [0], [1], [0, 0, 1, 1], [], []>} : vector<208x64xf32>, vector<64x64xf32>, vector<208x64xf32> -> vector<208x64xf32>
    %26 = arith.addf %20, %25 : vector<208x64xf32>
    %c0_16 = arith.constant 0 : index
    %c0_17 = arith.constant 0 : index
    %27 = vector.load %arg4[%c0_16, %c0_17] : memref<1x64xf32, #tpu.memory_space<vmem>>, vector<1x64xf32>
    %28 = vector.broadcast %27 : vector<1x64xf32> to vector<208x64xf32>
    %29 = arith.addf %26, %28 : vector<208x64xf32>
    %cst_18 = arith.constant 0.000000e+00 : f32
    %30 = vector.broadcast %cst_18 : f32 to vector<208x64xf32>
    %31 = arith.maximumf %29, %30 : vector<208x64xf32>
    %32 = vector.shape_cast %31 : vector<208x64xf32> to vector<13x16x64xf32>
    %c0_19 = arith.constant 0 : index
    %c0_20 = arith.constant 0 : index
    %c0_21 = arith.constant 0 : index
    %c0_22 = arith.constant 0 : index
    %33 = vector.load %arg5[%c0_19, %c0_20, %c0_21, %c0_22] : memref<1x13x16x64xf32, #tpu.memory_space<vmem>>, vector<1x13x16x64xf32>
    %34 = vector.shape_cast %33 : vector<1x13x16x64xf32> to vector<13x16x64xf32>
    %35 = vector.shape_cast %32 : vector<13x16x64xf32> to vector<1x13x16x64xf32>
    tpu.vector_store %arg5[%c0_19, %c0_20, %c0_21, %c0_22], %35 {strides = array<i32>} : memref<1x13x16x64xf32, #tpu.memory_space<vmem>>, vector<1x13x16x64xf32>,
    return
  }
  func.func @transform_0(%arg0: i32, %arg1: i32) -> (i32, i32, i32, i32) {
    %c0_i32 = arith.constant 0 : i32
    %c0_i32_0 = arith.constant 0 : i32
    %c0_i32_1 = arith.constant 0 : i32
    return %arg0, %arg1, %c0_i32, %c0_i32_0 : i32, i32, i32, i32
  }
  func.func @transform_1(%arg0: i32, %arg1: i32) -> (i32, i32, i32) {
    %c0_i32 = arith.constant 0 : i32
    %c0_i32_0 = arith.constant 0 : i32
    %c0_i32_1 = arith.constant 0 : i32
    %c0_i32_2 = arith.constant 0 : i32
    return %c0_i32, %c0_i32_0, %c0_i32_1 : i32, i32, i32
  }
  func.func @transform_2(%arg0: i32, %arg1: i32) -> (i32, i32) {
    %c0_i32 = arith.constant 0 : i32
    %c0_i32_0 = arith.constant 0 : i32
    %c0_i32_1 = arith.constant 0 : i32
    return %c0_i32, %c0_i32_0 : i32, i32
  }
  func.func @transform_3(%arg0: i32, %arg1: i32) -> (i32, i32, i32, i32) {
    %c0_i32 = arith.constant 0 : i32
    %c0_i32_0 = arith.constant 0 : i32
    %c0_i32_1 = arith.constant 0 : i32
    return %arg0, %arg1, %c0_i32, %c0_i32_0 : i32, i32, i32, i32
  }
}

module attributes {stable_mosaic.version = 11 : i64} {
  func.func @_conv_relu_kernel(%arg0: i32, %arg1: i32, %arg2: memref<1x9x20x320xf32, #tpu.memory_space<vmem>>, %arg3: memref<5x320x32xf32, #tpu.memory_space<vmem>>, %arg4: memref<1x32xf32, #tpu.memory_space<vmem>>, %arg5: memref<1x9x16x32xf32, #tpu.memory_space<vmem>>) attributes {dimension_semantics = [#tpu.dimension_semantics<parallel>, #tpu.dimension_semantics<parallel>], iteration_bounds = array<i64: 2, 1>, scalar_prefetch = 0 : i64, scratch_operands = 0 : i64, tpu.core_type = #tpu.core_type<tc>, window_params = [{transform_indices = @transform_0, window_bounds = array<i64: 1, 9, 20, 320>}, {pipeline_mode = #tpu.pipeline_mode<synchronous>, transform_indices = @transform_1, window_bounds = array<i64: 5, 320, 32>}, {pipeline_mode = #tpu.pipeline_mode<synchronous>, transform_indices = @transform_2, window_bounds = array<i64: 1, 32>}, {transform_indices = @transform_3, window_bounds = array<i64: 1, 9, 16, 32>}]} {
    %c0 = arith.constant 0 : index
    %c0_0 = arith.constant 0 : index
    %c0_1 = arith.constant 0 : index
    %c0_2 = arith.constant 0 : index
    %0 = vector.load %arg2[%c0, %c0_0, %c0_1, %c0_2] : memref<1x9x20x320xf32, #tpu.memory_space<vmem>>, vector<1x9x20x320xf32>
    %1 = vector.shape_cast %0 : vector<1x9x20x320xf32> to vector<9x20x320xf32>
    %cst = arith.constant 0.000000e+00 : f32
    %2 = vector.broadcast %cst : f32 to vector<144x32xf32>
    %3 = vector.extract_strided_slice %1 {offsets = [0, 0, 0], sizes = [9, 16, 320], strides = [1, 1, 1]} : vector<9x20x320xf32> to vector<9x16x320xf32>
    %4 = vector.shape_cast %3 : vector<9x16x320xf32> to vector<144x320xf32>
    %c0_3 = arith.constant 0 : index
    %c0_4 = arith.constant 0 : index
    %c0_5 = arith.constant 0 : index
    %5 = vector.load %arg3[%c0_3, %c0_4, %c0_5] : memref<5x320x32xf32, #tpu.memory_space<vmem>>, vector<1x320x32xf32>
    %6 = vector.shape_cast %5 : vector<1x320x32xf32> to vector<320x32xf32>
    %cst_6 = arith.constant dense<0.000000e+00> : vector<144x32xf32>
    %7 = tpu.matmul %4, %6, %cst_6 {dimension_numbers = #tpu.dot_dimension_numbers<[1], [0], [0], [1], [0, 0, 1, 1], [], []>} : vector<144x320xf32>, vector<320x32xf32>, vector<144x32xf32> -> vector<144x32xf32>
    %8 = arith.addf %2, %7 : vector<144x32xf32>
    %9 = vector.extract_strided_slice %1 {offsets = [0, 1, 0], sizes = [9, 16, 320], strides = [1, 1, 1]} : vector<9x20x320xf32> to vector<9x16x320xf32>
    %10 = vector.shape_cast %9 : vector<9x16x320xf32> to vector<144x320xf32>
    %c1 = arith.constant 1 : index
    %c0_7 = arith.constant 0 : index
    %c0_8 = arith.constant 0 : index
    %11 = vector.load %arg3[%c1, %c0_7, %c0_8] : memref<5x320x32xf32, #tpu.memory_space<vmem>>, vector<1x320x32xf32>
    %12 = vector.shape_cast %11 : vector<1x320x32xf32> to vector<320x32xf32>
    %cst_9 = arith.constant dense<0.000000e+00> : vector<144x32xf32>
    %13 = tpu.matmul %10, %12, %cst_9 {dimension_numbers = #tpu.dot_dimension_numbers<[1], [0], [0], [1], [0, 0, 1, 1], [], []>} : vector<144x320xf32>, vector<320x32xf32>, vector<144x32xf32> -> vector<144x32xf32>
    %14 = arith.addf %8, %13 : vector<144x32xf32>
    %15 = vector.extract_strided_slice %1 {offsets = [0, 2, 0], sizes = [9, 16, 320], strides = [1, 1, 1]} : vector<9x20x320xf32> to vector<9x16x320xf32>
    %16 = vector.shape_cast %15 : vector<9x16x320xf32> to vector<144x320xf32>
    %c2 = arith.constant 2 : index
    %c0_10 = arith.constant 0 : index
    %c0_11 = arith.constant 0 : index
    %17 = vector.load %arg3[%c2, %c0_10, %c0_11] : memref<5x320x32xf32, #tpu.memory_space<vmem>>, vector<1x320x32xf32>
    %18 = vector.shape_cast %17 : vector<1x320x32xf32> to vector<320x32xf32>
    %cst_12 = arith.constant dense<0.000000e+00> : vector<144x32xf32>
    %19 = tpu.matmul %16, %18, %cst_12 {dimension_numbers = #tpu.dot_dimension_numbers<[1], [0], [0], [1], [0, 0, 1, 1], [], []>} : vector<144x320xf32>, vector<320x32xf32>, vector<144x32xf32> -> vector<144x32xf32>
    %20 = arith.addf %14, %19 : vector<144x32xf32>
    %21 = vector.extract_strided_slice %1 {offsets = [0, 3, 0], sizes = [9, 16, 320], strides = [1, 1, 1]} : vector<9x20x320xf32> to vector<9x16x320xf32>
    %22 = vector.shape_cast %21 : vector<9x16x320xf32> to vector<144x320xf32>
    %c3 = arith.constant 3 : index
    %c0_13 = arith.constant 0 : index
    %c0_14 = arith.constant 0 : index
    %23 = vector.load %arg3[%c3, %c0_13, %c0_14] : memref<5x320x32xf32, #tpu.memory_space<vmem>>, vector<1x320x32xf32>
    %24 = vector.shape_cast %23 : vector<1x320x32xf32> to vector<320x32xf32>
    %cst_15 = arith.constant dense<0.000000e+00> : vector<144x32xf32>
    %25 = tpu.matmul %22, %24, %cst_15 {dimension_numbers = #tpu.dot_dimension_numbers<[1], [0], [0], [1], [0, 0, 1, 1], [], []>} : vector<144x320xf32>, vector<320x32xf32>, vector<144x32xf32> -> vector<144x32xf32>
    %26 = arith.addf %20, %25 : vector<144x32xf32>
    %27 = vector.extract_strided_slice %1 {offsets = [0, 4, 0], sizes = [9, 16, 320], strides = [1, 1, 1]} : vector<9x20x320xf32> to vector<9x16x320xf32>
    %28 = vector.shape_cast %27 : vector<9x16x320xf32> to vector<144x320xf32>
    %c4 = arith.constant 4 : index
    %c0_16 = arith.constant 0 : index
    %c0_17 = arith.constant 0 : index
    %29 = vector.load %arg3[%c4, %c0_16, %c0_17] : memref<5x320x32xf32, #tpu.memory_space<vmem>>, vector<1x320x32xf32>
    %30 = vector.shape_cast %29 : vector<1x320x32xf32> to vector<320x32xf32>
    %cst_18 = arith.constant dense<0.000000e+00> : vector<144x32xf32>
    %31 = tpu.matmul %28, %30, %cst_18 {dimension_numbers = #tpu.dot_dimension_numbers<[1], [0], [0], [1], [0, 0, 1, 1], [], []>} : vector<144x320xf32>, vector<320x32xf32>, vector<144x32xf32> -> vector<144x32xf32>
    %32 = arith.addf %26, %31 : vector<144x32xf32>
    %c0_19 = arith.constant 0 : index
    %c0_20 = arith.constant 0 : index
    %33 = vector.load %arg4[%c0_19, %c0_20] : memref<1x32xf32, #tpu.memory_space<vmem>>, vector<1x32xf32>
    %34 = vector.broadcast %33 : vector<1x32xf32> to vector<144x32xf32>
    %35 = arith.addf %32, %34 : vector<144x32xf32>
    %cst_21 = arith.constant 0.000000e+00 : f32
    %36 = vector.broadcast %cst_21 : f32 to vector<144x32xf32>
    %37 = arith.maximumf %35, %36 : vector<144x32xf32>
    %38 = vector.shape_cast %37 : vector<144x32xf32> to vector<9x16x32xf32>
    %c0_22 = arith.constant 0 : index
    %c0_23 = arith.constant 0 : index
    %c0_24 = arith.constant 0 : index
    %c0_25 = arith.constant 0 : index
    %39 = vector.load %arg5[%c0_22, %c0_23, %c0_24, %c0_25] : memref<1x9x16x32xf32, #tpu.memory_space<vmem>>, vector<1x9x16x32xf32>
    %40 = vector.shape_cast %39 : vector<1x9x16x32xf32> to vector<9x16x32xf32>
    %41 = vector.shape_cast %38 : vector<9x16x32xf32> to vector<1x9x16x32xf32>
    tpu.vector_store %arg5[%c0_22, %c0_23, %c0_24, %c0_25], %41 {strides = array<i32>} : memref<1x9x16x32xf32, #tpu.memory_space<vmem>>, vector<1x9x16x32xf32>,
    return
  }
  func.func @transform_0(%arg0: i32, %arg1: i32) -> (i32, i32, i32, i32) {
    %c0_i32 = arith.constant 0 : i32
    %c0_i32_0 = arith.constant 0 : i32
    %c0_i32_1 = arith.constant 0 : i32
    return %arg0, %arg1, %c0_i32, %c0_i32_0 : i32, i32, i32, i32
  }
  func.func @transform_1(%arg0: i32, %arg1: i32) -> (i32, i32, i32) {
    %c0_i32 = arith.constant 0 : i32
    %c0_i32_0 = arith.constant 0 : i32
    %c0_i32_1 = arith.constant 0 : i32
    %c0_i32_2 = arith.constant 0 : i32
    return %c0_i32, %c0_i32_0, %c0_i32_1 : i32, i32, i32
  }
  func.func @transform_2(%arg0: i32, %arg1: i32) -> (i32, i32) {
    %c0_i32 = arith.constant 0 : i32
    %c0_i32_0 = arith.constant 0 : i32
    %c0_i32_1 = arith.constant 0 : i32
    return %c0_i32, %c0_i32_0 : i32, i32
  }
  func.func @transform_3(%arg0: i32, %arg1: i32) -> (i32, i32, i32, i32) {
    %c0_i32 = arith.constant 0 : i32
    %c0_i32_0 = arith.constant 0 : i32
    %c0_i32_1 = arith.constant 0 : i32
    return %arg0, %arg1, %c0_i32, %c0_i32_0 : i32, i32, i32, i32
  }
}

module attributes {stable_mosaic.version = 11 : i64} {
  func.func @_conv3_softmax_kernel(%arg0: i32, %arg1: memref<1x5x12x160xf32, #tpu.memory_space<vmem>>, %arg2: memref<5x160x8xf32, #tpu.memory_space<vmem>>, %arg3: memref<1x8xf32, #tpu.memory_space<vmem>>, %arg4: memref<1x40xf32, #tpu.memory_space<vmem>>, %arg5: memref<40x3xf32, #tpu.memory_space<vmem>>, %arg6: memref<1x8x2xf32, #tpu.memory_space<vmem>>) attributes {dimension_semantics = [#tpu.dimension_semantics<parallel>], iteration_bounds = array<i64: 2>, scalar_prefetch = 0 : i64, scratch_operands = 0 : i64, tpu.core_type = #tpu.core_type<tc>, window_params = [{transform_indices = @transform_0, window_bounds = array<i64: 1, 5, 12, 160>}, {pipeline_mode = #tpu.pipeline_mode<synchronous>, transform_indices = @transform_1, window_bounds = array<i64: 5, 160, 8>}, {pipeline_mode = #tpu.pipeline_mode<synchronous>, transform_indices = @transform_2, window_bounds = array<i64: 1, 8>}, {pipeline_mode = #tpu.pipeline_mode<synchronous>, transform_indices = @transform_3, window_bounds = array<i64: 1, 40>}, {pipeline_mode = #tpu.pipeline_mode<synchronous>, transform_indices = @transform_4, window_bounds = array<i64: 40, 3>}, {transform_indices = @transform_5, window_bounds = array<i64: 1, 8, 2>}]} {
    %c0 = arith.constant 0 : index
    %c0_0 = arith.constant 0 : index
    %c0_1 = arith.constant 0 : index
    %c0_2 = arith.constant 0 : index
    %0 = vector.load %arg1[%c0, %c0_0, %c0_1, %c0_2] : memref<1x5x12x160xf32, #tpu.memory_space<vmem>>, vector<1x5x12x160xf32>
    %1 = vector.shape_cast %0 : vector<1x5x12x160xf32> to vector<5x12x160xf32>
    %cst = arith.constant 0.000000e+00 : f32
    %2 = vector.broadcast %cst : f32 to vector<40x8xf32>
    %3 = vector.extract_strided_slice %1 {offsets = [0, 0, 0], sizes = [5, 8, 160], strides = [1, 1, 1]} : vector<5x12x160xf32> to vector<5x8x160xf32>
    %4 = vector.shape_cast %3 : vector<5x8x160xf32> to vector<40x160xf32>
    %c0_3 = arith.constant 0 : index
    %c0_4 = arith.constant 0 : index
    %c0_5 = arith.constant 0 : index
    %5 = vector.load %arg2[%c0_3, %c0_4, %c0_5] : memref<5x160x8xf32, #tpu.memory_space<vmem>>, vector<1x160x8xf32>
    %6 = vector.shape_cast %5 : vector<1x160x8xf32> to vector<160x8xf32>
    %cst_6 = arith.constant dense<0.000000e+00> : vector<40x8xf32>
    %7 = tpu.matmul %4, %6, %cst_6 {dimension_numbers = #tpu.dot_dimension_numbers<[1], [0], [0], [1], [0, 0, 1, 1], [], []>} : vector<40x160xf32>, vector<160x8xf32>, vector<40x8xf32> -> vector<40x8xf32>
    %8 = arith.addf %2, %7 : vector<40x8xf32>
    %9 = vector.extract_strided_slice %1 {offsets = [0, 1, 0], sizes = [5, 8, 160], strides = [1, 1, 1]} : vector<5x12x160xf32> to vector<5x8x160xf32>
    %10 = vector.shape_cast %9 : vector<5x8x160xf32> to vector<40x160xf32>
    %c1 = arith.constant 1 : index
    %c0_7 = arith.constant 0 : index
    %c0_8 = arith.constant 0 : index
    %11 = vector.load %arg2[%c1, %c0_7, %c0_8] : memref<5x160x8xf32, #tpu.memory_space<vmem>>, vector<1x160x8xf32>
    %12 = vector.shape_cast %11 : vector<1x160x8xf32> to vector<160x8xf32>
    %cst_9 = arith.constant dense<0.000000e+00> : vector<40x8xf32>
    %13 = tpu.matmul %10, %12, %cst_9 {dimension_numbers = #tpu.dot_dimension_numbers<[1], [0], [0], [1], [0, 0, 1, 1], [], []>} : vector<40x160xf32>, vector<160x8xf32>, vector<40x8xf32> -> vector<40x8xf32>
    %14 = arith.addf %8, %13 : vector<40x8xf32>
    %15 = vector.extract_strided_slice %1 {offsets = [0, 2, 0], sizes = [5, 8, 160], strides = [1, 1, 1]} : vector<5x12x160xf32> to vector<5x8x160xf32>
    %16 = vector.shape_cast %15 : vector<5x8x160xf32> to vector<40x160xf32>
    %c2 = arith.constant 2 : index
    %c0_10 = arith.constant 0 : index
    %c0_11 = arith.constant 0 : index
    %17 = vector.load %arg2[%c2, %c0_10, %c0_11] : memref<5x160x8xf32, #tpu.memory_space<vmem>>, vector<1x160x8xf32>
    %18 = vector.shape_cast %17 : vector<1x160x8xf32> to vector<160x8xf32>
    %cst_12 = arith.constant dense<0.000000e+00> : vector<40x8xf32>
    %19 = tpu.matmul %16, %18, %cst_12 {dimension_numbers = #tpu.dot_dimension_numbers<[1], [0], [0], [1], [0, 0, 1, 1], [], []>} : vector<40x160xf32>, vector<160x8xf32>, vector<40x8xf32> -> vector<40x8xf32>
    %20 = arith.addf %14, %19 : vector<40x8xf32>
    %21 = vector.extract_strided_slice %1 {offsets = [0, 3, 0], sizes = [5, 8, 160], strides = [1, 1, 1]} : vector<5x12x160xf32> to vector<5x8x160xf32>
    %22 = vector.shape_cast %21 : vector<5x8x160xf32> to vector<40x160xf32>
    %c3 = arith.constant 3 : index
    %c0_13 = arith.constant 0 : index
    %c0_14 = arith.constant 0 : index
    %23 = vector.load %arg2[%c3, %c0_13, %c0_14] : memref<5x160x8xf32, #tpu.memory_space<vmem>>, vector<1x160x8xf32>
    %24 = vector.shape_cast %23 : vector<1x160x8xf32> to vector<160x8xf32>
    %cst_15 = arith.constant dense<0.000000e+00> : vector<40x8xf32>
    %25 = tpu.matmul %22, %24, %cst_15 {dimension_numbers = #tpu.dot_dimension_numbers<[1], [0], [0], [1], [0, 0, 1, 1], [], []>} : vector<40x160xf32>, vector<160x8xf32>, vector<40x8xf32> -> vector<40x8xf32>
    %26 = arith.addf %20, %25 : vector<40x8xf32>
    %27 = vector.extract_strided_slice %1 {offsets = [0, 4, 0], sizes = [5, 8, 160], strides = [1, 1, 1]} : vector<5x12x160xf32> to vector<5x8x160xf32>
    %28 = vector.shape_cast %27 : vector<5x8x160xf32> to vector<40x160xf32>
    %c4 = arith.constant 4 : index
    %c0_16 = arith.constant 0 : index
    %c0_17 = arith.constant 0 : index
    %29 = vector.load %arg2[%c4, %c0_16, %c0_17] : memref<5x160x8xf32, #tpu.memory_space<vmem>>, vector<1x160x8xf32>
    %30 = vector.shape_cast %29 : vector<1x160x8xf32> to vector<160x8xf32>
    %cst_18 = arith.constant dense<0.000000e+00> : vector<40x8xf32>
    %31 = tpu.matmul %28, %30, %cst_18 {dimension_numbers = #tpu.dot_dimension_numbers<[1], [0], [0], [1], [0, 0, 1, 1], [], []>} : vector<40x160xf32>, vector<160x8xf32>, vector<40x8xf32> -> vector<40x8xf32>
    %32 = arith.addf %26, %31 : vector<40x8xf32>
    %c0_19 = arith.constant 0 : index
    %c0_20 = arith.constant 0 : index
    %33 = vector.load %arg3[%c0_19, %c0_20] : memref<1x8xf32, #tpu.memory_space<vmem>>, vector<1x8xf32>
    %34 = vector.broadcast %33 : vector<1x8xf32> to vector<40x8xf32>
    %35 = arith.addf %32, %34 : vector<40x8xf32>
    %cst_21 = arith.constant 0.000000e+00 : f32
    %36 = vector.broadcast %cst_21 : f32 to vector<40x8xf32>
    %37 = arith.maximumf %35, %36 : vector<40x8xf32>
    %38 = tpu.transpose %37, [1, 0] : vector<40x8xf32> -> vector<8x40xf32>
    %cst_22 = arith.constant 1.000000e+00 : f32
    %39 = vector.broadcast %cst_22 : f32 to vector<8x40xf32>
    %40 = arith.mulf %38, %39 : vector<8x40xf32>
    %c0_23 = arith.constant 0 : index
    %c0_24 = arith.constant 0 : index
    %41 = vector.load %arg4[%c0_23, %c0_24] : memref<1x40xf32, #tpu.memory_space<vmem>>, vector<1x40xf32>
    %42 = vector.shape_cast %41 : vector<1x40xf32> to vector<1x40xf32>
    %43 = vector.broadcast %42 : vector<1x40xf32> to vector<8x40xf32>
    %44 = arith.addf %40, %43 : vector<8x40xf32>
    %cst_25 = arith.constant dense<0xFF800000> : vector<8xf32>
    %45 = vector.multi_reduction <maximumf>, %44, %cst_25 [1] : vector<8x40xf32> to vector<8xf32>
    %46 = vector.shape_cast %45 : vector<8xf32> to vector<8x1xf32>
    %47 = vector.broadcast %46 : vector<8x1xf32> to vector<8x40xf32>
    %48 = arith.subf %44, %47 : vector<8x40xf32>
    %49 = math.exp %48 : vector<8x40xf32>
    %c0_26 = arith.constant 0 : index
    %c0_27 = arith.constant 0 : index
    %50 = vector.load %arg5[%c0_26, %c0_27] : memref<40x3xf32, #tpu.memory_space<vmem>>, vector<40x3xf32>
    %cst_28 = arith.constant dense<0.000000e+00> : vector<8x3xf32>
    %51 = tpu.matmul %49, %50, %cst_28 {dimension_numbers = #tpu.dot_dimension_numbers<[1], [0], [0], [1], [0, 0, 1, 1], [], []>} : vector<8x40xf32>, vector<40x3xf32>, vector<8x3xf32> -> vector<8x3xf32>
    %52 = vector.extract_strided_slice %51 {offsets = [0, 1], sizes = [8, 2], strides = [1, 1]} : vector<8x3xf32> to vector<8x2xf32>
    %53 = vector.extract_strided_slice %51 {offsets = [0, 0], sizes = [8, 1], strides = [1, 1]} : vector<8x3xf32> to vector<8x1xf32>
    %54 = vector.broadcast %53 : vector<8x1xf32> to vector<8x2xf32>
    %55 = arith.divf %52, %54 : vector<8x2xf32>
    %c0_29 = arith.constant 0 : index
    %c0_30 = arith.constant 0 : index
    %c0_31 = arith.constant 0 : index
    %56 = vector.load %arg6[%c0_29, %c0_30, %c0_31] : memref<1x8x2xf32, #tpu.memory_space<vmem>>, vector<1x8x2xf32>
    %57 = vector.shape_cast %56 : vector<1x8x2xf32> to vector<8x2xf32>
    %58 = vector.shape_cast %55 : vector<8x2xf32> to vector<1x8x2xf32>
    tpu.vector_store %arg6[%c0_29, %c0_30, %c0_31], %58 {strides = array<i32>} : memref<1x8x2xf32, #tpu.memory_space<vmem>>, vector<1x8x2xf32>,
    return
  }
  func.func @transform_0(%arg0: i32) -> (i32, i32, i32, i32) {
    %c0_i32 = arith.constant 0 : i32
    %c0_i32_0 = arith.constant 0 : i32
    %c0_i32_1 = arith.constant 0 : i32
    %c0_i32_2 = arith.constant 0 : i32
    return %arg0, %c0_i32, %c0_i32_0, %c0_i32_1 : i32, i32, i32, i32
  }
  func.func @transform_1(%arg0: i32) -> (i32, i32, i32) {
    %c0_i32 = arith.constant 0 : i32
    %c0_i32_0 = arith.constant 0 : i32
    %c0_i32_1 = arith.constant 0 : i32
    %c0_i32_2 = arith.constant 0 : i32
    return %c0_i32, %c0_i32_0, %c0_i32_1 : i32, i32, i32
  }
  func.func @transform_2(%arg0: i32) -> (i32, i32) {
    %c0_i32 = arith.constant 0 : i32
    %c0_i32_0 = arith.constant 0 : i32
    %c0_i32_1 = arith.constant 0 : i32
    return %c0_i32, %c0_i32_0 : i32, i32
  }
  func.func @transform_3(%arg0: i32) -> (i32, i32) {
    %c0_i32 = arith.constant 0 : i32
    %c0_i32_0 = arith.constant 0 : i32
    %c0_i32_1 = arith.constant 0 : i32
    return %c0_i32, %c0_i32_0 : i32, i32
  }
  func.func @transform_4(%arg0: i32) -> (i32, i32) {
    %c0_i32 = arith.constant 0 : i32
    %c0_i32_0 = arith.constant 0 : i32
    %c0_i32_1 = arith.constant 0 : i32
    return %c0_i32, %c0_i32_0 : i32, i32
  }
  func.func @transform_5(%arg0: i32) -> (i32, i32, i32) {
    %c0_i32 = arith.constant 0 : i32
    %c0_i32_0 = arith.constant 0 : i32
    %c0_i32_1 = arith.constant 0 : i32
    return %arg0, %c0_i32, %c0_i32_0 : i32, i32, i32
  }
}

</mosaic_0001>

<llo_original>
// kernel: spatial_softmax_image_encoder.3
$region0: #{spatial_softmax_image_encoder.3}
  #allocation0 [shape = 'u32[]', space=smem, size = 0x4, offset = 0x4, fixed_abs, tag = 'smem constant byte address 0x4 - core index']
  #allocation1 [shape = 'u32[144,128]{1,0:T(1,128)}', space=vmem, size = 0x12000, scoped, tag = 'internal scratch']
  %s0 = inlined_call_operand.vmem [shape: f32[2,13,19,64], index: 0, kind: input, shape index: {}]
  %s1 = inlined_call_operand.vmem [shape: f32[4,64,64], index: 1, kind: input, shape index: {}]
  %s2 = inlined_call_operand.vmem [shape: f32[1,64], index: 2, kind: input, shape index: {}]
  %s3 = inlined_call_operand.vmem [shape: f32[2,13,16,64], index: 3, kind: output, shape index: {}]
  %s4 = sld [smem:[#allocation0]]
  $region45: #{spatial_softmax_image_encoder.3} parent=0
    _
  %s6 = ssub.s32 1, %s4
  %s7 = scalar_select 0, %s6, %s4
  loop: start=0, step=1, limit=4
  $region2: #{spatial_softmax_image_encoder.3} parent=0 // loop_pre_header
    _
  $region3: #{spatial_softmax_image_encoder.3} parent=0 // loop_header
    %s9 = sphi 0, %s13
    %p10 = scmp.ge.s32.totalorder %s9, 4
    %s16 = sphi 0, %s28
    %s17 = sphi 0, %s24
    %s18 = sphi 0, %s16
    %s19 = sphi 0, %s17
    %s20 = sphi 0, %s18
    %s21 = sphi 0, %s19
    %s33 = sphi 0, %s35
    %s36 = sphi 0, %s33
    %s37 = sphi 0, %s36
    %s53 = sphi 0, %s37
    %s57 = sphi 0, %s57
    %s59 = sphi 0, %s57
    %s60 = sphi 0, %s59
    %s74 = sphi 0, %s60
    %s78 = sphi 0, %s78
    %s80 = sphi 0, %s78
    %s81 = sphi 0, %s80
    %s95 = sphi 0, %s81
    %s103 = sphi 0, %s105
    %s106 = sphi 0, %s103
    %s107 = sphi 0, %s106
    %s123 = sphi 0, %s107
  $region4: #{spatial_softmax_image_encoder.3} parent=0 // loop_header_branch
    %12 = sbr.rel (%p10) target = $region8
  $region5: #{spatial_softmax_image_encoder.3} parent=0 // loop_body
    %s14 = ssub.s32 %s9, 1
    %s15 = ssub.s32 %s9, 2
    %s22 = sadd.s32 1, %s17
    %p23 = scmp.ge.s32.totalorder %s22, 1
    %s24 = scalar_select %p23, 0, %s22
    %s25 = sadd.s32 1, %s16
    %s26 = scalar_select %p23, %s25, %s16
    %p27 = scmp.ge.s32.totalorder %s26, 2
    %s28 = scalar_select %p27, 0, %s26
    %s29 = ssub.s32 %s16, %s28
    %s30 = ssub.s32 %s17, %s24
    %s31 = sor.u32 %s29, %s30
    %p32 = scmp.eq.s32.totalorder %s31, 0
    %s34 = sadd.s32 %s33, 1
    %s35 = scalar_select %p32, %s33, %s34
    %p38 = pneg %p32
    %p39 = scmp.eq.s32.totalorder %s9, 1
    %p40 = por %p38, %p39
    %p41 = scmp.ne.s32.totalorder %s33, %s36
    %p42 = scmp.eq.s32.totalorder %s9, 0
    %p43 = por %p41, %p42
    %p44 = scmp.ne.s32.totalorder %s33, %s36
    %p45 = scmp.eq.s32.totalorder %s14, 1
    %p46 = por %p44, %p45
    %p47 = scmp.ne.s32.totalorder %s36, %s37
    %p48 = scmp.eq.s32.totalorder %s14, 0
    %p49 = por %p47, %p48
    %p50 = scmp.ne.s32.totalorder %s36, %s37
    %p51 = scmp.eq.s32.totalorder %s15, 1
    %p52 = por %p50, %p51
    %p54 = scmp.ne.s32.totalorder %s37, %s53
    %p55 = scmp.eq.s32.totalorder %s15, 0
    %p56 = por %p54, %p55
    %s58 = sadd.s32 %s57, 1
    %p61 = scmp.eq.s32.totalorder %s9, 1
    %p62 = scmp.ne.s32.totalorder %s57, %s59
    %p63 = scmp.eq.s32.totalorder %s9, 0
    %p64 = por %p62, %p63
    %p65 = scmp.ne.s32.totalorder %s57, %s59
    %p66 = scmp.eq.s32.totalorder %s14, 1
    %p67 = por %p65, %p66
    %p68 = scmp.ne.s32.totalorder %s59, %s60
    %p69 = scmp.eq.s32.totalorder %s14, 0
    %p70 = por %p68, %p69
    %p71 = scmp.ne.s32.totalorder %s59, %s60
    %p72 = scmp.eq.s32.totalorder %s15, 1
    %p73 = por %p71, %p72
    %p75 = scmp.ne.s32.totalorder %s60, %s74
    %p76 = scmp.eq.s32.totalorder %s15, 0
    %p77 = por %p75, %p76
    %s79 = sadd.s32 %s78, 1
    %p82 = scmp.eq.s32.totalorder %s9, 1
    %p83 = scmp.ne.s32.totalorder %s78, %s80
    %p84 = scmp.eq.s32.totalorder %s9, 0
    %p85 = por %p83, %p84
    %p86 = scmp.ne.s32.totalorder %s78, %s80
    %p87 = scmp.eq.s32.totalorder %s14, 1
    %p88 = por %p86, %p87
    %p89 = scmp.ne.s32.totalorder %s80, %s81
    %p90 = scmp.eq.s32.totalorder %s14, 0
    %p91 = por %p89, %p90
    %p92 = scmp.ne.s32.totalorder %s80, %s81
    %p93 = scmp.eq.s32.totalorder %s15, 1
    %p94 = por %p92, %p93
    %p96 = scmp.ne.s32.totalorder %s81, %s95
    %p97 = scmp.eq.s32.totalorder %s15, 0
    %p98 = por %p96, %p97
    %s99 = ssub.s32 %s16, %s28
    %s100 = ssub.s32 %s17, %s24
    %s101 = sor.u32 %s99, %s100
    %p102 = scmp.eq.s32.totalorder %s101, 0
    %s104 = sadd.s32 %s103, 1
    %s105 = scalar_select %p102, %s103, %s104
    %p108 = pneg %p102
    %p109 = scmp.eq.s32.totalorder %s9, 1
    %p110 = por %p108, %p109
    %p111 = scmp.ne.s32.totalorder %s103, %s106
    %p112 = scmp.eq.s32.totalorder %s9, 0
    %p113 = por %p111, %p112
    %p114 = scmp.ne.s32.totalorder %s103, %s106
    %p115 = scmp.eq.s32.totalorder %s14, 1
    %p116 = por %p114, %p115
    %p117 = scmp.ne.s32.totalorder %s106, %s107
    %p118 = scmp.eq.s32.totalorder %s14, 0
    %p119 = por %p117, %p118
    %p120 = scmp.ne.s32.totalorder %s106, %s107
    %p121 = scmp.eq.s32.totalorder %s15, 1
    %p122 = por %p120, %p121
    %p124 = scmp.ne.s32.totalorder %s107, %s123
    %p125 = scmp.eq.s32.totalorder %s15, 0
    %p126 = por %p124, %p125
    %p127 = scmp.le.s32.totalorder 1, %s9
    %p128 = scmp.lt.s32.totalorder %s9, 3
    %p129 = pnand %p127, %p128
    %p130 = pneg %p129
    // Predicated region
    $region9: #{spatial_softmax_image_encoder.3} parent=5 // pred_check
      _
    $region10: #{spatial_softmax_image_encoder.3} parent=5 // pred_check_branch
      %132 = sbr.rel (%p129) target = $region12
    $region11: #{spatial_softmax_image_encoder.3} parent=5 // pred_region
      %s133 = ssub.s32 %s9, 1
      // Predicated region
      $region13: #{spatial_softmax_image_encoder.3} parent=11 // pred_check
        %p134 = pneg %p70
      $region14: #{spatial_softmax_image_encoder.3} parent=11 // pred_check_branch
        %136 = sbr.rel (%p134) target = $region16
      $region15: #{spatial_softmax_image_encoder.3} parent=11 // pred_region
        _
      $region16: #{spatial_softmax_image_encoder.3} parent=11 // pred_fallthru
        _
      // Predicated region
      $region17: #{spatial_softmax_image_encoder.3} parent=11 // pred_check
        %p137 = pneg %p91
      $region18: #{spatial_softmax_image_encoder.3} parent=11 // pred_check_branch
        %139 = sbr.rel (%p137) target = $region20
      $region19: #{spatial_softmax_image_encoder.3} parent=11 // pred_region
        _
      $region20: #{spatial_softmax_image_encoder.3} parent=11 // pred_fallthru
        _
    $region12: #{spatial_softmax_image_encoder.3} parent=5 // pred_fallthru
      _
    %p140 = scmp.lt.s32.totalorder %s9, 2
    // Predicated region
    $region21: #{spatial_softmax_image_encoder.3} parent=5 // pred_check
      %p141 = pneg %p140
    $region22: #{spatial_softmax_image_encoder.3} parent=5 // pred_check_branch
      %143 = sbr.rel (%p141) target = $region24
    $region23: #{spatial_softmax_image_encoder.3} parent=5 // pred_region
      // Predicated region
      $region25: #{spatial_softmax_image_encoder.3} parent=23 // pred_check
        %p144 = pneg %p43
      $region26: #{spatial_softmax_image_encoder.3} parent=23 // pred_check_branch
        %146 = sbr.rel (%p144) target = $region28
      $region27: #{spatial_softmax_image_encoder.3} parent=23 // pred_region
        %s147 = smul.u32 13, %s17
        %p148 = scmp.lt.s32.totalorder %s16, 1
        %s149 = scalar_select %p148, %s16, 1
        %p150 = scmp.lt.s32.totalorder %s147, 12
        %s151 = scalar_select %p150, %s147, 12
        %s152 = smul.addr %s151, 3
        %s153 = smul.addr %s149, 39
        %s154 = sadd.s32 %s152, %s153
        %s155 = smul.addr %s154, 8
        %s156 = scalar_lea.vmem %s0, %s155
        %s157 = smul.u32 13, %s17
      $region28: #{spatial_softmax_image_encoder.3} parent=23 // pred_fallthru
        _
    $region24: #{spatial_softmax_image_encoder.3} parent=5 // pred_fallthru
      _
    %p158 = scmp.le.s32.totalorder 1, %s9
    %p159 = scmp.lt.s32.totalorder %s9, 3
    %p160 = pnand %p158, %p159
    %p161 = pneg %p160
    // Predicated region
    $region29: #{spatial_softmax_image_encoder.3} parent=5 // pred_check
      _
    $region30: #{spatial_softmax_image_encoder.3} parent=5 // pred_check_branch
      %163 = sbr.rel (%p160) target = $region32
    $region31: #{spatial_softmax_image_encoder.3} parent=5 // pred_region
      %s164 = ssub.s32 %s9, 1
      %s165 = smul.u32 13, %s19
      %p166 = scmp.lt.s32.totalorder %s18, 1
      %s167 = scalar_select %p166, %s18, 1
      %p168 = scmp.lt.s32.totalorder %s165, 12
      %s169 = scalar_select %p168, %s165, 12
      %s170 = smul.addr %s169, 3
      %s171 = smul.addr %s167, 39
      %s172 = sadd.s32 %s170, %s171
      %s173 = smul.addr %s172, 8
      %s174 = scalar_lea.vmem %s0, %s173
      %p175 = pneg %p49
      %p176 = pneg %p46
      %p177 = pneg %p70
      %p178 = pneg %p67
      %p179 = pneg %p91
      %p180 = pneg %p88
      %p181 = pneg %p119
      %p182 = pneg %p116
      %s183 = smul.u32 13, %s19
      %p184 = scmp.lt.s32.totalorder %s18, 1
      %s185 = scalar_select %p184, %s18, 1
      %p186 = scmp.lt.s32.totalorder %s183, 12
      %s187 = scalar_select %p186, %s183, 12
      %s188 = smul.addr %s187, 2
      %s189 = smul.addr %s185, 26
      %s190 = sadd.s32 %s188, %s189
      %s191 = smul.addr %s190, 8
      %s192 = scalar_lea.vmem %s3, %s191
      %s193 = smul.u32 13, %s19
      %p194 = scmp.lt.s32.totalorder %s18, 1
      %s195 = scalar_select %p194, %s18, 1
      %p196 = scmp.lt.s32.totalorder %s193, 12
      %s197 = scalar_select %p196, %s193, 12
      %s198 = smul.addr %s197, 3
      %s199 = smul.addr %s195, 39
      %s200 = sadd.s32 %s198, %s199
      %s201 = smul.addr %s200, 8
      %s202 = scalar_lea.vmem %s0, %s201
      %s203 = smul.u32 13, %s19
      %s204 = smul.u32 13, %s19
      %p205 = scmp.lt.s32.totalorder %s18, 1
      %s206 = scalar_select %p205, %s18, 1
      %p207 = scmp.lt.s32.totalorder %s204, 12
      %s208 = scalar_select %p207, %s204, 12
      %s209 = smul.addr %s208, 2
      %s210 = smul.addr %s206, 26
      %s211 = sadd.s32 %s209, %s210
      %s212 = smul.addr %s211, 8
      %s213 = scalar_lea.vmem %s3, %s212
      %s214 = smul.u32 13, %s19
      %v215 = vld [vmem:[%s202] sm:$0xff]
      %v216 = vld [vmem:[%s202 + $0x8] sm:$0xff]
      %v217 = vld [vmem:[%s202 + $0x10] sm:$0x7]
      %v218 = vld [vmem:[%s202 + $0x18] sm:$0xff]
      %v219 = vld [vmem:[%s202 + $0x20] sm:$0xff]
      %v220 = vld [vmem:[%s202 + $0x28] sm:$0x7]
      %v221 = vld [vmem:[%s202 + $0x30] sm:$0xff]
      %v222 = vld [vmem:[%s202 + $0x38] sm:$0xff]
      %v223 = vld [vmem:[%s202 + $0x40] sm:$0x7]
      %v224 = vld [vmem:[%s202 + $0x48] sm:$0xff]
      %v225 = vld [vmem:[%s202 + $0x50] sm:$0xff]
      %v226 = vld [vmem:[%s202 + $0x58] sm:$0x7]
      %v227 = vld [vmem:[%s202 + $0x60] sm:$0xff]
      %v228 = vld [vmem:[%s202 + $0x68] sm:$0xff]
      %v229 = vld [vmem:[%s202 + $0x70] sm:$0x7]
      %v230 = vld [vmem:[%s202 + $0x78] sm:$0xff]
      %v231 = vld [vmem:[%s202 + $0x80] sm:$0xff]
      %v232 = vld [vmem:[%s202 + $0x88] sm:$0x7]
      %v233 = vld [vmem:[%s202 + $0x90] sm:$0xff]
      %v234 = vld [vmem:[%s202 + $0x98] sm:$0xff]
      %v235 = vld [vmem:[%s202 + $0xa0] sm:$0x7]
      %v236 = vld [vmem:[%s202 + $0xa8] sm:$0xff]
      %v237 = vld [vmem:[%s202 + $0xb0] sm:$0xff]
      %v238 = vld [vmem:[%s202 + $0xb8] sm:$0x7]
      %v239 = vld [vmem:[%s202 + $0xc0] sm:$0xff]
      %v240 = vld [vmem:[%s202 + $0xc8] sm:$0xff]
      %v241 = vld [vmem:[%s202 + $0xd0] sm:$0x7]
      %v242 = vld [vmem:[%s202 + $0xd8] sm:$0xff]
      %v243 = vld [vmem:[%s202 + $0xe0] sm:$0xff]
      %v244 = vld [vmem:[%s202 + $0xe8] sm:$0x7]
      %v245 = vld [vmem:[%s202 + $0xf0] sm:$0xff]
      %v246 = vld [vmem:[%s202 + $0xf8] sm:$0xff]
      %v247 = vld [vmem:[%s202 + $0x100] sm:$0x7]
      %v248 = vld [vmem:[%s202 + $0x108] sm:$0xff]
      %v249 = vld [vmem:[%s202 + $0x110] sm:$0xff]
      %v250 = vld [vmem:[%s202 + $0x118] sm:$0x7]
      %v251 = vld [vmem:[%s202 + $0x120] sm:$0xff]
      %v252 = vld [vmem:[%s202 + $0x128] sm:$0xff]
      %v253 = vld [vmem:[%s202 + $0x130] sm:$0x7]
      %v254 = vld [vmem:[%s1] sm:$0xff]
      %v255 = vld [vmem:[%s1 + $0x8] sm:$0xff]
      %v256 = vld [vmem:[%s1 + $0x10] sm:$0xff]
      %v257 = vld [vmem:[%s1 + $0x18] sm:$0xff]
      %v258 = vld [vmem:[%s1 + $0x20] sm:$0xff]
      %v259 = vld [vmem:[%s1 + $0x28] sm:$0xff]
      %v260 = vld [vmem:[%s1 + $0x30] sm:$0xff]
      %v261 = vld [vmem:[%s1 + $0x38] sm:$0xff]
      %vm301 = vcmask 1046528
      %v302 = vrot.slane %v215, 1
      %v303 = vrot.slane %v216, 1
      %v304 = vsel %vm301, %v302, %v303
      %v305 = vrot.slane %v217, 1
      %v306 = vsel %vm301, %v303, %v305
      %v307 = vrot.slane %v218, 1
      %v308 = vrot.slane %v219, 1
      %v309 = vsel %vm301, %v307, %v308
      %v310 = vrot.slane %v220, 1
      %v311 = vsel %vm301, %v308, %v310
      %v312 = vrot.slane %v221, 1
      %v313 = vrot.slane %v222, 1
      %v314 = vsel %vm301, %v312, %v313
      %v315 = vrot.slane %v223, 1
      %v316 = vsel %vm301, %v313, %v315
      %v317 = vrot.slane %v224, 1
      %v318 = vrot.slane %v225, 1
      %v319 = vsel %vm301, %v317, %v318
      %v320 = vrot.slane %v226, 1
      %v321 = vsel %vm301, %v318, %v320
      %v322 = vrot.slane %v227, 1
      %v323 = vrot.slane %v228, 1
      %v324 = vsel %vm301, %v322, %v323
      %v325 = vrot.slane %v229, 1
      %v326 = vsel %vm301, %v323, %v325
      %v327 = vrot.slane %v230, 1
      %v328 = vrot.slane %v231, 1
      %v329 = vsel %vm301, %v327, %v328
      %v330 = vrot.slane %v232, 1
      %v331 = vsel %vm301, %v328, %v330
      %v332 = vrot.slane %v233, 1
      %v333 = vrot.slane %v234, 1
      %v334 = vsel %vm301, %v332, %v333
      %v335 = vrot.slane %v235, 1
      %v336 = vsel %vm301, %v333, %v335
      %v337 = vrot.slane %v236, 1
      %v338 = vrot.slane %v237, 1
      %v339 = vsel %vm301, %v337, %v338
      %v340 = vrot.slane %v238, 1
      %v341 = vsel %vm301, %v338, %v340
      %v342 = vrot.slane %v239, 1
      %v343 = vrot.slane %v240, 1
      %v344 = vsel %vm301, %v342, %v343
      %v345 = vrot.slane %v241, 1
      %v346 = vsel %vm301, %v343, %v345
      %v347 = vrot.slane %v242, 1
      %v348 = vrot.slane %v243, 1
      %v349 = vsel %vm301, %v347, %v348
      %v350 = vrot.slane %v244, 1
      %v351 = vsel %vm301, %v348, %v350
      %v352 = vrot.slane %v245, 1
      %v353 = vrot.slane %v246, 1
      %v354 = vsel %vm301, %v352, %v353
      %v355 = vrot.slane %v247, 1
      %v356 = vsel %vm301, %v353, %v355
      %v357 = vrot.slane %v248, 1
      %v358 = vrot.slane %v249, 1
      %v359 = vsel %vm301, %v357, %v358
      %v360 = vrot.slane %v250, 1
      %v361 = vsel %vm301, %v358, %v360
      %v362 = vrot.slane %v251, 1
      %v363 = vrot.slane %v252, 1
      %v364 = vsel %vm301, %v362, %v363
      %v365 = vrot.slane %v253, 1
      %v366 = vsel %vm301, %v363, %v365
      %s367 = scalar_lea.vmem %s1, 64
      %v368 = vld [vmem:[%s367] sm:$0xff]
      %v369 = vld [vmem:[%s367 + $0x8] sm:$0xff]
      %v370 = vld [vmem:[%s367 + $0x10] sm:$0xff]
      %v371 = vld [vmem:[%s367 + $0x18] sm:$0xff]
      %v372 = vld [vmem:[%s367 + $0x20] sm:$0xff]
      %v373 = vld [vmem:[%s367 + $0x28] sm:$0xff]
      %v374 = vld [vmem:[%s367 + $0x30] sm:$0xff]
      %v375 = vld [vmem:[%s367 + $0x38] sm:$0xff]
      %vm376 = vcmask 523264
      %v377 = vsel %vm376, %v304, 0
      %v379 = vsel %vm376, %v306, 0
      %v381 = vsel %vm376, %v309, 0
      %v383 = vsel %vm376, %v311, 0
      %v385 = vsel %vm376, %v314, 0
      %v387 = vsel %vm376, %v316, 0
      %v389 = vsel %vm376, %v319, 0
      %v391 = vsel %vm376, %v321, 0
      %v393 = vsel %vm376, %v324, 0
      %v395 = vsel %vm376, %v326, 0
      %v397 = vsel %vm376, %v329, 0
      %v399 = vsel %vm376, %v331, 0
      %v401 = vsel %vm376, %v334, 0
      %v403 = vsel %vm376, %v336, 0
      %v405 = vsel %vm376, %v339, 0
      %v407 = vsel %vm376, %v341, 0
      %v409 = vsel %vm376, %v344, 0
      %v411 = vsel %vm376, %v346, 0
      %v413 = vsel %vm376, %v349, 0
      %v415 = vsel %vm376, %v351, 0
      %v417 = vsel %vm376, %v354, 0
      %v419 = vsel %vm376, %v356, 0
      %v421 = vsel %vm376, %v359, 0
      %v423 = vsel %vm376, %v361, 0
      %v425 = vsel %vm376, %v364, 0
      %v427 = vsel %vm376, %v366, 0
      %429 = vmatprep.subr.mxu0 0.0
      %430 = vmatpush1.msra.mxu0 %v368
      %431 = vmatprep.subr.mxu0 0.0
      %432 = vmatpush1.msra.mxu0 %v369
      %433 = vmatprep.subr.mxu0 0.0
      %434 = vmatpush1.msra.mxu0 %v370
      %435 = vmatprep.subr.mxu0 0.0
      %436 = vmatpush1.msra.mxu0 %v371
      %437 = vmatprep.subr.mxu0 0.0
      %438 = vmatpush1.msra.mxu0 %v372
      %439 = vmatprep.subr.mxu0 0.0
      %440 = vmatpush1.msra.mxu0 %v373
      %441 = vmatprep.subr.mxu0 0.0
      %442 = vmatpush1.msra.mxu0 %v374
      %443 = vmatprep.subr.mxu0 0.0
      %444 = vmatpush1.msra.mxu0 %v375
      %445 = vmatprep.subr.mxu0 0.0
      %446 = vmatpush1.msra.mxu0 0.0
      %447 = vmatprep.subr.mxu0 0.0
      %448 = vmatpush1.msra.mxu0 0.0
      %449 = vmatprep.subr.mxu0 0.0
      %450 = vmatpush1.msra.mxu0 0.0
      %451 = vmatprep.subr.mxu0 0.0
      %452 = vmatpush1.msra.mxu0 0.0
      %453 = vmatprep.subr.mxu0 0.0
      %454 = vmatpush1.msra.mxu0 0.0
      %455 = vmatprep.subr.mxu0 0.0
      %456 = vmatpush1.msra.mxu0 0.0
      %457 = vmatprep.subr.mxu0 0.0
      %458 = vmatpush1.msra.mxu0 0.0
      %459 = vmatprep.subr.mxu0 0.0
      %460 = vmatpush1.msra.mxu0 0.0
      %461 = vmatprep.subr.mxu0 0.0
      %462 = vmatpush1.msra.mxu0 0.0
      %463 = vmatprep.subr.mxu0 0.0
      %464 = vmatpush1.msra.mxu0 0.0
      %465 = vmatprep.subr.mxu0 0.0
      %466 = vmatpush1.msra.mxu0 0.0
      %467 = vmatprep.subr.mxu0 0.0
      %468 = vmatpush1.msra.mxu0 0.0
      %469 = vmatprep.subr.mxu0 0.0
      %470 = vmatpush1.msra.mxu0 0.0
      %471 = vmatprep.subr.mxu0 0.0
      %472 = vmatpush1.msra.mxu0 0.0
      %473 = vmatprep.subr.mxu0 0.0
      %474 = vmatpush1.msra.mxu0 0.0
      %475 = vmatprep.subr.mxu0 0.0
      %476 = vmatpush1.msra.mxu0 0.0
      %477 = vmatprep.subr.mxu0 0.0
      %478 = vmatpush1.msra.mxu0 0.0
      %479 = vmatprep.subr.mxu0 0.0
      %480 = vmatpush1.msra.mxu0 0.0
      %481 = vmatprep.subr.mxu0 0.0
      %482 = vmatpush1.msra.mxu0 0.0
      %483 = vmatprep.subr.mxu0 0.0
      %484 = vmatpush1.msra.mxu0 0.0
      %485 = vmatprep.subr.mxu0 0.0
      %486 = vmatpush1.msra.mxu0 0.0
      %487 = vmatprep.subr.mxu0 0.0
      %488 = vmatpush1.msra.mxu0 0.0
      %489 = vmatprep.subr.mxu0 0.0
      %490 = vmatpush1.msra.mxu0 0.0
      %491 = vmatprep.subr.mxu0 0.0
      %492 = vmatpush1.msra.mxu0 0.0
      %493 = vmatprep.mubr.f32.mxu0 0.0
      %494 = vmatmul.mubr.f32.gmra.mrb[0].mxu0 %v377
      %v495 = vpop.f32.mrb[0].mxu0
      %v496 = vadd.f32 0.0, %v495
      %v497 = vpop.f32.mrb[0].mxu0
      %498 = vmatprep.mubr.f32.mxu0 0.0
      %499 = vmatmul.mubr.f32.gmra.mrb[0].mxu0 %v379
      %v500 = vpop.f32.mrb[0].mxu0
      %v501 = vadd.f32 0.0, %v500
      %v502 = vpop.f32.mrb[0].mxu0
      %503 = vmatprep.mubr.f32.mxu0 0.0
      %504 = vmatmul.mubr.f32.gmra.mrb[0].mxu0 %v381
      %v505 = vpop.f32.mrb[0].mxu0
      %v506 = vadd.f32 0.0, %v505
      %v507 = vpop.f32.mrb[0].mxu0
      %508 = vmatprep.mubr.f32.mxu0 0.0
      %509 = vmatmul.mubr.f32.gmra.mrb[0].mxu0 %v383
      %v510 = vpop.f32.mrb[0].mxu0
      %v511 = vadd.f32 0.0, %v510
      %v512 = vpop.f32.mrb[0].mxu0
      %513 = vmatprep.mubr.f32.mxu0 0.0
      %514 = vmatmul.mubr.f32.gmra.mrb[0].mxu0 %v385
      %v515 = vpop.f32.mrb[0].mxu0
      %v516 = vadd.f32 0.0, %v515
      %v517 = vpop.f32.mrb[0].mxu0
      %518 = vmatprep.mubr.f32.mxu0 0.0
      %519 = vmatmul.mubr.f32.gmra.mrb[0].mxu0 %v387
      %v520 = vpop.f32.mrb[0].mxu0
      %v521 = vadd.f32 0.0, %v520
      %v522 = vpop.f32.mrb[0].mxu0
      %523 = vmatprep.mubr.f32.mxu0 0.0
      %524 = vmatmul.mubr.f32.gmra.mrb[0].mxu0 %v389
      %v525 = vpop.f32.mrb[0].mxu0
      %v526 = vadd.f32 0.0, %v525
      %v527 = vpop.f32.mrb[0].mxu0
      %528 = vmatprep.mubr.f32.mxu0 0.0
      %529 = vmatmul.mubr.f32.gmra.mrb[0].mxu0 %v391
      %v530 = vpop.f32.mrb[0].mxu0
      %v531 = vadd.f32 0.0, %v530
      %v532 = vpop.f32.mrb[0].mxu0
      %533 = vmatprep.mubr.f32.mxu0 0.0
      %534 = vmatmul.mubr.f32.gmra.mrb[0].mxu0 %v393
      %v535 = vpop.f32.mrb[0].mxu0
      %v536 = vadd.f32 0.0, %v535
      %v537 = vpop.f32.mrb[0].mxu0
      %538 = vmatprep.mubr.f32.mxu0 0.0
      %539 = vmatmul.mubr.f32.gmra.mrb[0].mxu0 %v395
      %v540 = vpop.f32.mrb[0].mxu0
      %v541 = vadd.f32 0.0, %v540
      %v542 = vpop.f32.mrb[0].mxu0
      %543 = vmatprep.mubr.f32.mxu0 0.0
      %544 = vmatmul.mubr.f32.gmra.mrb[0].mxu0 %v397
      %v545 = vpop.f32.mrb[0].mxu0
      %v546 = vadd.f32 0.0, %v545
      %v547 = vpop.f32.mrb[0].mxu0
      %548 = vmatprep.mubr.f32.mxu0 0.0
      %549 = vmatmul.mubr.f32.gmra.mrb[0].mxu0 %v399
      %v550 = vpop.f32.mrb[0].mxu0
      %v551 = vadd.f32 0.0, %v550
      %v552 = vpop.f32.mrb[0].mxu0
      %553 = vmatprep.mubr.f32.mxu0 0.0
      %554 = vmatmul.mubr.f32.gmra.mrb[0].mxu0 %v401
      %v555 = vpop.f32.mrb[0].mxu0
      %v556 = vadd.f32 0.0, %v555
      %v557 = vpop.f32.mrb[0].mxu0
      %558 = vmatprep.mubr.f32.mxu0 0.0
      %559 = vmatmul.mubr.f32.gmra.mrb[0].mxu0 %v403
      %v560 = vpop.f32.mrb[0].mxu0
      %v561 = vadd.f32 0.0, %v560
      %v562 = vpop.f32.mrb[0].mxu0
      %563 = vmatprep.mubr.f32.mxu0 0.0
      %564 = vmatmul.mubr.f32.gmra.mrb[0].mxu0 %v405
      %v565 = vpop.f32.mrb[0].mxu0
      %v566 = vadd.f32 0.0, %v565
      %v567 = vpop.f32.mrb[0].mxu0
      %568 = vmatprep.mubr.f32.mxu0 0.0
      %569 = vmatmul.mubr.f32.gmra.mrb[0].mxu0 %v407
      %v570 = vpop.f32.mrb[0].mxu0
      %v571 = vadd.f32 0.0, %v570
      %v572 = vpop.f32.mrb[0].mxu0
      %573 = vmatprep.mubr.f32.mxu0 0.0
      %574 = vmatmul.mubr.f32.gmra.mrb[0].mxu0 %v409
      %v575 = vpop.f32.mrb[0].mxu0
      %v576 = vadd.f32 0.0, %v575
      %v577 = vpop.f32.mrb[0].mxu0
      %578 = vmatprep.mubr.f32.mxu0 0.0
      %579 = vmatmul.mubr.f32.gmra.mrb[0].mxu0 %v411
      %v580 = vpop.f32.mrb[0].mxu0
      %v581 = vadd.f32 0.0, %v580
      %v582 = vpop.f32.mrb[0].mxu0
      %583 = vmatprep.mubr.f32.mxu0 0.0
      %584 = vmatmul.mubr.f32.gmra.mrb[0].mxu0 %v413
      %v585 = vpop.f32.mrb[0].mxu0
      %v586 = vadd.f32 0.0, %v585
      %v587 = vpop.f32.mrb[0].mxu0
      %588 = vmatprep.mubr.f32.mxu0 0.0
      %589 = vmatmul.mubr.f32.gmra.mrb[0].mxu0 %v415
      %v590 = vpop.f32.mrb[0].mxu0
      %v591 = vadd.f32 0.0, %v590
      %v592 = vpop.f32.mrb[0].mxu0
      %593 = vmatprep.mubr.f32.mxu0 0.0
      %594 = vmatmul.mubr.f32.gmra.mrb[0].mxu0 %v417
      %v595 = vpop.f32.mrb[0].mxu0
      %v596 = vadd.f32 0.0, %v595
      %v597 = vpop.f32.mrb[0].mxu0
      %598 = vmatprep.mubr.f32.mxu0 0.0
      %599 = vmatmul.mubr.f32.gmra.mrb[0].mxu0 %v419
      %v600 = vpop.f32.mrb[0].mxu0
      %v601 = vadd.f32 0.0, %v600
      %v602 = vpop.f32.mrb[0].mxu0
      %603 = vmatprep.mubr.f32.mxu0 0.0
      %604 = vmatmul.mubr.f32.gmra.mrb[0].mxu0 %v421
      %v605 = vpop.f32.mrb[0].mxu0
      %v606 = vadd.f32 0.0, %v605
      %v607 = vpop.f32.mrb[0].mxu0
      %608 = vmatprep.mubr.f32.mxu0 0.0
      %609 = vmatmul.mubr.f32.gmra.mrb[0].mxu0 %v423
      %v610 = vpop.f32.mrb[0].mxu0
      %v611 = vadd.f32 0.0, %v610
      %v612 = vpop.f32.mrb[0].mxu0
      %613 = vmatprep.mubr.f32.mxu0 0.0
      %614 = vmatmul.mubr.f32.gmra.mrb[0].mxu0 %v425
      %v615 = vpop.f32.mrb[0].mxu0
      %v616 = vadd.f32 0.0, %v615
      %v617 = vpop.f32.mrb[0].mxu0
      %618 = vmatprep.mubr.f32.mxu0 0.0
      %619 = vmatmul.mubr.f32.gmra.mrb[0].mxu0 %v427
      %v620 = vpop.f32.mrb[0].mxu0
      %v621 = vadd.f32 0.0, %v620
      %v622 = vpop.f32.mrb[0].mxu0
      %623 = vdwg.mxu0
      %v624 = vsel %vm376, %v215, 0
      %v626 = vsel %vm376, %v216, 0
      %v628 = vsel %vm376, %v218, 0
      %v630 = vsel %vm376, %v219, 0
      %v632 = vsel %vm376, %v221, 0
      %v634 = vsel %vm376, %v222, 0
      %v636 = vsel %vm376, %v224, 0
      %v638 = vsel %vm376, %v225, 0
      %v640 = vsel %vm376, %v227, 0
      %v642 = vsel %vm376, %v228, 0
      %v644 = vsel %vm376, %v230, 0
      %v646 = vsel %vm376, %v231, 0
      %v648 = vsel %vm376, %v233, 0
      %v650 = vsel %vm376, %v234, 0
      %v652 = vsel %vm376, %v236, 0
      %v654 = vsel %vm376, %v237, 0
      %v656 = vsel %vm376, %v239, 0
      %v658 = vsel %vm376, %v240, 0
      %v660 = vsel %vm376, %v242, 0
      %v662 = vsel %vm376, %v243, 0
      %v664 = vsel %vm376, %v245, 0
      %v666 = vsel %vm376, %v246, 0
      %v668 = vsel %vm376, %v248, 0
      %v670 = vsel %vm376, %v249, 0
      %v672 = vsel %vm376, %v251, 0
      %v674 = vsel %vm376, %v252, 0
      %676 = vmatprep.subr.mxu0 0.0
      %677 = vmatpush1.msra.mxu0 %v254
      %678 = vmatprep.subr.mxu0 0.0
      %679 = vmatpush1.msra.mxu0 %v255
      %680 = vmatprep.subr.mxu0 0.0
      %681 = vmatpush1.msra.mxu0 %v256
      %682 = vmatprep.subr.mxu0 0.0
      %683 = vmatpush1.msra.mxu0 %v257
      %684 = vmatprep.subr.mxu0 0.0
      %685 = vmatpush1.msra.mxu0 %v258
      %686 = vmatprep.subr.mxu0 0.0
      %687 = vmatpush1.msra.mxu0 %v259
      %688 = vmatprep.subr.mxu0 0.0
      %689 = vmatpush1.msra.mxu0 %v260
      %690 = vmatprep.subr.mxu0 0.0
      %691 = vmatpush1.msra.mxu0 %v261
      %692 = vmatprep.subr.mxu0 0.0
      %693 = vmatpush1.msra.mxu0 0.0
      %694 = vmatprep.subr.mxu0 0.0
      %695 = vmatpush1.msra.mxu0 0.0
      %696 = vmatprep.subr.mxu0 0.0
      %697 = vmatpush1.msra.mxu0 0.0
      %698 = vmatprep.subr.mxu0 0.0
      %699 = vmatpush1.msra.mxu0 0.0
      %700 = vmatprep.subr.mxu0 0.0
      %701 = vmatpush1.msra.mxu0 0.0
      %702 = vmatprep.subr.mxu0 0.0
      %703 = vmatpush1.msra.mxu0 0.0
      %704 = vmatprep.subr.mxu0 0.0
      %705 = vmatpush1.msra.mxu0 0.0
      %706 = vmatprep.subr.mxu0 0.0
      %707 = vmatpush1.msra.mxu0 0.0
      %708 = vmatprep.subr.mxu0 0.0
      %709 = vmatpush1.msra.mxu0 0.0
      %710 = vmatprep.subr.mxu0 0.0
      %711 = vmatpush1.msra.mxu0 0.0
      %712 = vmatprep.subr.mxu0 0.0
      %713 = vmatpush1.msra.mxu0 0.0
      %714 = vmatprep.subr.mxu0 0.0
      %715 = vmatpush1.msra.mxu0 0.0
      %716 = vmatprep.subr.mxu0 0.0
      %717 = vmatpush1.msra.mxu0 0.0
      %718 = vmatprep.subr.mxu0 0.0
      %719 = vmatpush1.msra.mxu0 0.0
      %720 = vmatprep.subr.mxu0 0.0
      %721 = vmatpush1.msra.mxu0 0.0
      %722 = vmatprep.subr.mxu0 0.0
      %723 = vmatpush1.msra.mxu0 0.0
      %724 = vmatprep.subr.mxu0 0.0
      %725 = vmatpush1.msra.mxu0 0.0
      %726 = vmatprep.subr.mxu0 0.0
      %727 = vmatpush1.msra.mxu0 0.0
      %728 = vmatprep.subr.mxu0 0.0
      %729 = vmatpush1.msra.mxu0 0.0
      %730 = vmatprep.subr.mxu0 0.0
      %731 = vmatpush1.msra.mxu0 0.0
      %732 = vmatprep.subr.mxu0 0.0
      %733 = vmatpush1.msra.mxu0 0.0
      %734 = vmatprep.subr.mxu0 0.0
      %735 = vmatpush1.msra.mxu0 0.0
      %736 = vmatprep.subr.mxu0 0.0
      %737 = vmatpush1.msra.mxu0 0.0
      %738 = vmatprep.subr.mxu0 0.0
      %739 = vmatpush1.msra.mxu0 0.0
      %740 = vmatprep.mubr.f32.mxu0 0.0
      %741 = vmatmul.mubr.f32.gmra.mrb[0].mxu0 %v624
      %v742 = vpop.f32.mrb[0].mxu0
      %v743 = vadd.f32 %v496, %v742
      %v744 = vpop.f32.mrb[0].mxu0
      %745 = vmatprep.mubr.f32.mxu0 0.0
      %746 = vmatmul.mubr.f32.gmra.mrb[0].mxu0 %v626
      %v747 = vpop.f32.mrb[0].mxu0
      %v748 = vadd.f32 %v501, %v747
      %v749 = vpop.f32.mrb[0].mxu0
      %750 = vmatprep.mubr.f32.mxu0 0.0
      %751 = vmatmul.mubr.f32.gmra.mrb[0].mxu0 %v628
      %v752 = vpop.f32.mrb[0].mxu0
      %v753 = vadd.f32 %v506, %v752
      %v754 = vpop.f32.mrb[0].mxu0
      %755 = vmatprep.mubr.f32.mxu0 0.0
      %756 = vmatmul.mubr.f32.gmra.mrb[0].mxu0 %v630
      %v757 = vpop.f32.mrb[0].mxu0
      %v758 = vadd.f32 %v511, %v757
      %v759 = vpop.f32.mrb[0].mxu0
      %760 = vmatprep.mubr.f32.mxu0 0.0
      %761 = vmatmul.mubr.f32.gmra.mrb[0].mxu0 %v632
      %v762 = vpop.f32.mrb[0].mxu0
      %v763 = vadd.f32 %v516, %v762
      %v764 = vpop.f32.mrb[0].mxu0
      %765 = vmatprep.mubr.f32.mxu0 0.0
      %766 = vmatmul.mubr.f32.gmra.mrb[0].mxu0 %v634
      %v767 = vpop.f32.mrb[0].mxu0
      %v768 = vadd.f32 %v521, %v767
      %v769 = vpop.f32.mrb[0].mxu0
      %770 = vmatprep.mubr.f32.mxu0 0.0
      %771 = vmatmul.mubr.f32.gmra.mrb[0].mxu0 %v636
      %v772 = vpop.f32.mrb[0].mxu0
      %v773 = vadd.f32 %v526, %v772
      %v774 = vpop.f32.mrb[0].mxu0
      %775 = vmatprep.mubr.f32.mxu0 0.0
      %776 = vmatmul.mubr.f32.gmra.mrb[0].mxu0 %v638
      %v777 = vpop.f32.mrb[0].mxu0
      %v778 = vadd.f32 %v531, %v777
      %v779 = vpop.f32.mrb[0].mxu0
      %780 = vmatprep.mubr.f32.mxu0 0.0
      %781 = vmatmul.mubr.f32.gmra.mrb[0].mxu0 %v640
      %v782 = vpop.f32.mrb[0].mxu0
      %v783 = vadd.f32 %v536, %v782
      %v784 = vpop.f32.mrb[0].mxu0
      %785 = vmatprep.mubr.f32.mxu0 0.0
      %786 = vmatmul.mubr.f32.gmra.mrb[0].mxu0 %v642
      %v787 = vpop.f32.mrb[0].mxu0
      %v788 = vadd.f32 %v541, %v787
      %v789 = vpop.f32.mrb[0].mxu0
      %790 = vmatprep.mubr.f32.mxu0 0.0
      %791 = vmatmul.mubr.f32.gmra.mrb[0].mxu0 %v644
      %v792 = vpop.f32.mrb[0].mxu0
      %v793 = vadd.f32 %v546, %v792
      %v794 = vpop.f32.mrb[0].mxu0
      %795 = vmatprep.mubr.f32.mxu0 0.0
      %796 = vmatmul.mubr.f32.gmra.mrb[0].mxu0 %v646
      %v797 = vpop.f32.mrb[0].mxu0
      %v798 = vadd.f32 %v551, %v797
      %v799 = vpop.f32.mrb[0].mxu0
      %800 = vmatprep.mubr.f32.mxu0 0.0
      %801 = vmatmul.mubr.f32.gmra.mrb[0].mxu0 %v648
      %v802 = vpop.f32.mrb[0].mxu0
      %v803 = vadd.f32 %v556, %v802
      %v804 = vpop.f32.mrb[0].mxu0
      %805 = vmatprep.mubr.f32.mxu0 0.0
      %806 = vmatmul.mubr.f32.gmra.mrb[0].mxu0 %v650
      %v807 = vpop.f32.mrb[0].mxu0
      %v808 = vadd.f32 %v561, %v807
      %v809 = vpop.f32.mrb[0].mxu0
      %810 = vmatprep.mubr.f32.mxu0 0.0
      %811 = vmatmul.mubr.f32.gmra.mrb[0].mxu0 %v652
      %v812 = vpop.f32.mrb[0].mxu0
      %v813 = vadd.f32 %v566, %v812
      %v814 = vpop.f32.mrb[0].mxu0
      %815 = vmatprep.mubr.f32.mxu0 0.0
      %816 = vmatmul.mubr.f32.gmra.mrb[0].mxu0 %v654
      %v817 = vpop.f32.mrb[0].mxu0
      %v818 = vadd.f32 %v571, %v817
      %v819 = vpop.f32.mrb[0].mxu0
      %820 = vmatprep.mubr.f32.mxu0 0.0
      %821 = vmatmul.mubr.f32.gmra.mrb[0].mxu0 %v656
      %v822 = vpop.f32.mrb[0].mxu0
      %v823 = vadd.f32 %v576, %v822
      %v824 = vpop.f32.mrb[0].mxu0
      %825 = vmatprep.mubr.f32.mxu0 0.0
      %826 = vmatmul.mubr.f32.gmra.mrb[0].mxu0 %v658
      %v827 = vpop.f32.mrb[0].mxu0
      %v828 = vadd.f32 %v581, %v827
      %v829 = vpop.f32.mrb[0].mxu0
      %830 = vmatprep.mubr.f32.mxu0 0.0
      %831 = vmatmul.mubr.f32.gmra.mrb[0].mxu0 %v660
      %v832 = vpop.f32.mrb[0].mxu0
      %v833 = vadd.f32 %v586, %v832
      %v834 = vpop.f32.mrb[0].mxu0
      %835 = vmatprep.mubr.f32.mxu0 0.0
      %836 = vmatmul.mubr.f32.gmra.mrb[0].mxu0 %v662
      %v837 = vpop.f32.mrb[0].mxu0
      %v838 = vadd.f32 %v591, %v837
      %v839 = vpop.f32.mrb[0].mxu0
      %840 = vmatprep.mubr.f32.mxu0 0.0
      %841 = vmatmul.mubr.f32.gmra.mrb[0].mxu0 %v664
      %v842 = vpop.f32.mrb[0].mxu0
      %v843 = vadd.f32 %v596, %v842
      %v844 = vpop.f32.mrb[0].mxu0
      %845 = vmatprep.mubr.f32.mxu0 0.0
      %846 = vmatmul.mubr.f32.gmra.mrb[0].mxu0 %v666
      %v847 = vpop.f32.mrb[0].mxu0
      %v848 = vadd.f32 %v601, %v847
      %v849 = vpop.f32.mrb[0].mxu0
      %850 = vmatprep.mubr.f32.mxu0 0.0
      %851 = vmatmul.mubr.f32.gmra.mrb[0].mxu0 %v668
      %v852 = vpop.f32.mrb[0].mxu0
      %v853 = vadd.f32 %v606, %v852
      %v854 = vpop.f32.mrb[0].mxu0
      %855 = vmatprep.mubr.f32.mxu0 0.0
      %856 = vmatmul.mubr.f32.gmra.mrb[0].mxu0 %v670
      %v857 = vpop.f32.mrb[0].mxu0
      %v858 = vadd.f32 %v611, %v857
      %v859 = vpop.f32.mrb[0].mxu0
      %860 = vmatprep.mubr.f32.mxu0 0.0
      %861 = vmatmul.mubr.f32.gmra.mrb[0].mxu0 %v672
      %v862 = vpop.f32.mrb[0].mxu0
      %v863 = vadd.f32 %v616, %v862
      %v864 = vpop.f32.mrb[0].mxu0
      %865 = vmatprep.mubr.f32.mxu0 0.0
      %866 = vmatmul.mubr.f32.gmra.mrb[0].mxu0 %v674
      %v867 = vpop.f32.mrb[0].mxu0
      %v868 = vadd.f32 %v621, %v867
      %v869 = vpop.f32.mrb[0].mxu0
      %870 = vdwg.mxu0
      %vm871 = vcmask 1045504
      %v872 = vrot.slane %v215, 2
      %v873 = vrot.slane %v216, 2
      %v874 = vsel %vm871, %v872, %v873
      %v875 = vrot.slane %v217, 2
      %v876 = vsel %vm871, %v873, %v875
      %v877 = vrot.slane %v218, 2
      %v878 = vrot.slane %v219, 2
      %v879 = vsel %vm871, %v877, %v878
      %v880 = vrot.slane %v220, 2
      %v881 = vsel %vm871, %v878, %v880
      %v882 = vrot.slane %v221, 2
      %v883 = vrot.slane %v222, 2
      %v884 = vsel %vm871, %v882, %v883
      %v885 = vrot.slane %v223, 2
      %v886 = vsel %vm871, %v883, %v885
      %v887 = vrot.slane %v224, 2
      %v888 = vrot.slane %v225, 2
      %v889 = vsel %vm871, %v887, %v888
      %v890 = vrot.slane %v226, 2
      %v891 = vsel %vm871, %v888, %v890
      %v892 = vrot.slane %v227, 2
      %v893 = vrot.slane %v228, 2
      %v894 = vsel %vm871, %v892, %v893
      %v895 = vrot.slane %v229, 2
      %v896 = vsel %vm871, %v893, %v895
      %v897 = vrot.slane %v230, 2
      %v898 = vrot.slane %v231, 2
      %v899 = vsel %vm871, %v897, %v898
      %v900 = vrot.slane %v232, 2
      %v901 = vsel %vm871, %v898, %v900
      %v902 = vrot.slane %v233, 2
      %v903 = vrot.slane %v234, 2
      %v904 = vsel %vm871, %v902, %v903
      %v905 = vrot.slane %v235, 2
      %v906 = vsel %vm871, %v903, %v905
      %v907 = vrot.slane %v236, 2
      %v908 = vrot.slane %v237, 2
      %v909 = vsel %vm871, %v907, %v908
      %v910 = vrot.slane %v238, 2
      %v911 = vsel %vm871, %v908, %v910
      %v912 = vrot.slane %v239, 2
      %v913 = vrot.slane %v240, 2
      %v914 = vsel %vm871, %v912, %v913
      %v915 = vrot.slane %v241, 2
      %v916 = vsel %vm871, %v913, %v915
      %v917 = vrot.slane %v242, 2
      %v918 = vrot.slane %v243, 2
      %v919 = vsel %vm871, %v917, %v918
      %v920 = vrot.slane %v244, 2
      %v921 = vsel %vm871, %v918, %v920
      %v922 = vrot.slane %v245, 2
      %v923 = vrot.slane %v246, 2
      %v924 = vsel %vm871, %v922, %v923
      %v925 = vrot.slane %v247, 2
      %v926 = vsel %vm871, %v923, %v925
      %v927 = vrot.slane %v248, 2
      %v928 = vrot.slane %v249, 2
      %v929 = vsel %vm871, %v927, %v928
      %v930 = vrot.slane %v250, 2
      %v931 = vsel %vm871, %v928, %v930
      %v932 = vrot.slane %v251, 2
      %v933 = vrot.slane %v252, 2
      %v934 = vsel %vm871, %v932, %v933
      %v935 = vrot.slane %v253, 2
      %v936 = vsel %vm871, %v933, %v935
      %s937 = scalar_lea.vmem %s1, 128
      %v938 = vld [vmem:[%s937] sm:$0xff]
      %v939 = vld [vmem:[%s937 + $0x8] sm:$0xff]
      %v940 = vld [vmem:[%s937 + $0x10] sm:$0xff]
      %v941 = vld [vmem:[%s937 + $0x18] sm:$0xff]
      %v942 = vld [vmem:[%s937 + $0x20] sm:$0xff]
      %v943 = vld [vmem:[%s937 + $0x28] sm:$0xff]
      %v944 = vld [vmem:[%s937 + $0x30] sm:$0xff]
      %v945 = vld [vmem:[%s937 + $0x38] sm:$0xff]
      %v946 = vsel %vm376, %v874, 0
      %v948 = vsel %vm376, %v876, 0
      %v950 = vsel %vm376, %v879, 0
      %v952 = vsel %vm376, %v881, 0
      %v954 = vsel %vm376, %v884, 0
      %v956 = vsel %vm376, %v886, 0
      %v958 = vsel %vm376, %v889, 0
      %v960 = vsel %vm376, %v891, 0
      %v962 = vsel %vm376, %v894, 0
      %v964 = vsel %vm376, %v896, 0
      %v966 = vsel %vm376, %v899, 0
      %v968 = vsel %vm376, %v901, 0
      %v970 = vsel %vm376, %v904, 0
      %v972 = vsel %vm376, %v906, 0
      %v974 = vsel %vm376, %v909, 0
      %v976 = vsel %vm376, %v911, 0
      %v978 = vsel %vm376, %v914, 0
      %v980 = vsel %vm376, %v916, 0
      %v982 = vsel %vm376, %v919, 0
      %v984 = vsel %vm376, %v921, 0
      %v986 = vsel %vm376, %v924, 0
      %v988 = vsel %vm376, %v926, 0
      %v990 = vsel %vm376, %v929, 0
      %v992 = vsel %vm376, %v931, 0
      %v994 = vsel %vm376, %v934, 0
      %v996 = vsel %vm376, %v936, 0
      %998 = vmatprep.subr.mxu0 0.0
      %999 = vmatpush1.msra.mxu0 %v938
      %1000 = vmatprep.subr.mxu0 0.0
      %1001 = vmatpush1.msra.mxu0 %v939
      %1002 = vmatprep.subr.mxu0 0.0
      %1003 = vmatpush1.msra.mxu0 %v940
      %1004 = vmatprep.subr.mxu0 0.0
      %1005 = vmatpush1.msra.mxu0 %v941
      %1006 = vmatprep.subr.mxu0 0.0
      %1007 = vmatpush1.msra.mxu0 %v942
      %1008 = vmatprep.subr.mxu0 0.0
      %1009 = vmatpush1.msra.mxu0 %v943
      %1010 = vmatprep.subr.mxu0 0.0
      %1011 = vmatpush1.msra.mxu0 %v944
      %1012 = vmatprep.subr.mxu0 0.0
      %1013 = vmatpush1.msra.mxu0 %v945
      %1014 = vmatprep.subr.mxu0 0.0
      %1015 = vmatpush1.msra.mxu0 0.0
      %1016 = vmatprep.subr.mxu0 0.0
      %1017 = vmatpush1.msra.mxu0 0.0
      %1018 = vmatprep.subr.mxu0 0.0
      %1019 = vmatpush1.msra.mxu0 0.0
      %1020 = vmatprep.subr.mxu0 0.0
      %1021 = vmatpush1.msra.mxu0 0.0
      %1022 = vmatprep.subr.mxu0 0.0
      %1023 = vmatpush1.msra.mxu0 0.0
      %1024 = vmatprep.subr.mxu0 0.0
      %1025 = vmatpush1.msra.mxu0 0.0
      %1026 = vmatprep.subr.mxu0 0.0
      %1027 = vmatpush1.msra.mxu0 0.0
      %1028 = vmatprep.subr.mxu0 0.0
      %1029 = vmatpush1.msra.mxu0 0.0
      %1030 = vmatprep.subr.mxu0 0.0
      %1031 = vmatpush1.msra.mxu0 0.0
      %1032 = vmatprep.subr.mxu0 0.0
      %1033 = vmatpush1.msra.mxu0 0.0
      %1034 = vmatprep.subr.mxu0 0.0
      %1035 = vmatpush1.msra.mxu0 0.0
      %1036 = vmatprep.subr.mxu0 0.0
      %1037 = vmatpush1.msra.mxu0 0.0
      %1038 = vmatprep.subr.mxu0 0.0
      %1039 = vmatpush1.msra.mxu0 0.0
      %1040 = vmatprep.subr.mxu0 0.0
      %1041 = vmatpush1.msra.mxu0 0.0
      %1042 = vmatprep.subr.mxu0 0.0
      %1043 = vmatpush1.msra.mxu0 0.0
      %1044 = vmatprep.subr.mxu0 0.0
      %1045 = vmatpush1.msra.mxu0 0.0
      %1046 = vmatprep.subr.mxu0 0.0
      %1047 = vmatpush1.msra.mxu0 0.0
      %1048 = vmatprep.subr.mxu0 0.0
      %1049 = vmatpush1.msra.mxu0 0.0
      %1050 = vmatprep.subr.mxu0 0.0
      %1051 = vmatpush1.msra.mxu0 0.0
      %1052 = vmatprep.subr.mxu0 0.0
      %1053 = vmatpush1.msra.mxu0 0.0
      %1054 = vmatprep.subr.mxu0 0.0
      %1055 = vmatpush1.msra.mxu0 0.0
      %1056 = vmatprep.subr.mxu0 0.0
      %1057 = vmatpush1.msra.mxu0 0.0
      %1058 = vmatprep.subr.mxu0 0.0
      %1059 = vmatpush1.msra.mxu0 0.0
      %1060 = vmatprep.subr.mxu0 0.0
      %1061 = vmatpush1.msra.mxu0 0.0
      %1062 = vmatprep.mubr.f32.mxu0 0.0
      %1063 = vmatmul.mubr.f32.gmra.mrb[0].mxu0 %v946
      %v1064 = vpop.f32.mrb[0].mxu0
      %v1065 = vadd.f32 0.0, %v1064
      %v1066 = vpop.f32.mrb[0].mxu0
      %1067 = vmatprep.mubr.f32.mxu0 0.0
      %1068 = vmatmul.mubr.f32.gmra.mrb[0].mxu0 %v948
      %v1069 = vpop.f32.mrb[0].mxu0
      %v1070 = vadd.f32 0.0, %v1069
      %v1071 = vpop.f32.mrb[0].mxu0
      %1072 = vmatprep.mubr.f32.mxu0 0.0
      %1073 = vmatmul.mubr.f32.gmra.mrb[0].mxu0 %v950
      %v1074 = vpop.f32.mrb[0].mxu0
      %v1075 = vadd.f32 0.0, %v1074
      %v1076 = vpop.f32.mrb[0].mxu0
      %1077 = vmatprep.mubr.f32.mxu0 0.0
      %1078 = vmatmul.mubr.f32.gmra.mrb[0].mxu0 %v952
      %v1079 = vpop.f32.mrb[0].mxu0
      %v1080 = vadd.f32 0.0, %v1079
      %v1081 = vpop.f32.mrb[0].mxu0
      %1082 = vmatprep.mubr.f32.mxu0 0.0
      %1083 = vmatmul.mubr.f32.gmra.mrb[0].mxu0 %v954
      %v1084 = vpop.f32.mrb[0].mxu0
      %v1085 = vadd.f32 0.0, %v1084
      %v1086 = vpop.f32.mrb[0].mxu0
      %1087 = vmatprep.mubr.f32.mxu0 0.0
      %1088 = vmatmul.mubr.f32.gmra.mrb[0].mxu0 %v956
      %v1089 = vpop.f32.mrb[0].mxu0
      %v1090 = vadd.f32 0.0, %v1089
      %v1091 = vpop.f32.mrb[0].mxu0
      %1092 = vmatprep.mubr.f32.mxu0 0.0
      %1093 = vmatmul.mubr.f32.gmra.mrb[0].mxu0 %v958
      %v1094 = vpop.f32.mrb[0].mxu0
      %v1095 = vadd.f32 0.0, %v1094
      %v1096 = vpop.f32.mrb[0].mxu0
      %1097 = vmatprep.mubr.f32.mxu0 0.0
      %1098 = vmatmul.mubr.f32.gmra.mrb[0].mxu0 %v960
      %v1099 = vpop.f32.mrb[0].mxu0
      %v1100 = vadd.f32 0.0, %v1099
      %v1101 = vpop.f32.mrb[0].mxu0
      %1102 = vmatprep.mubr.f32.mxu0 0.0
      %1103 = vmatmul.mubr.f32.gmra.mrb[0].mxu0 %v962
      %v1104 = vpop.f32.mrb[0].mxu0
      %v1105 = vadd.f32 0.0, %v1104
      %v1106 = vpop.f32.mrb[0].mxu0
      %1107 = vmatprep.mubr.f32.mxu0 0.0
      %1108 = vmatmul.mubr.f32.gmra.mrb[0].mxu0 %v964
      %v1109 = vpop.f32.mrb[0].mxu0
      %v1110 = vadd.f32 0.0, %v1109
      %v1111 = vpop.f32.mrb[0].mxu0
      %1112 = vmatprep.mubr.f32.mxu0 0.0
      %1113 = vmatmul.mubr.f32.gmra.mrb[0].mxu0 %v966
      %v1114 = vpop.f32.mrb[0].mxu0
      %v1115 = vadd.f32 0.0, %v1114
      %v1116 = vpop.f32.mrb[0].mxu0
      %1117 = vmatprep.mubr.f32.mxu0 0.0
      %1118 = vmatmul.mubr.f32.gmra.mrb[0].mxu0 %v968
      %v1119 = vpop.f32.mrb[0].mxu0
      %v1120 = vadd.f32 0.0, %v1119
      %v1121 = vpop.f32.mrb[0].mxu0
      %1122 = vmatprep.mubr.f32.mxu0 0.0
      %1123 = vmatmul.mubr.f32.gmra.mrb[0].mxu0 %v970
      %v1124 = vpop.f32.mrb[0].mxu0
      %v1125 = vadd.f32 0.0, %v1124
      %v1126 = vpop.f32.mrb[0].mxu0
      %1127 = vmatprep.mubr.f32.mxu0 0.0
      %1128 = vmatmul.mubr.f32.gmra.mrb[0].mxu0 %v972
      %v1129 = vpop.f32.mrb[0].mxu0
      %v1130 = vadd.f32 0.0, %v1129
      %v1131 = vpop.f32.mrb[0].mxu0
      %1132 = vmatprep.mubr.f32.mxu0 0.0
      %1133 = vmatmul.mubr.f32.gmra.mrb[0].mxu0 %v974
      %v1134 = vpop.f32.mrb[0].mxu0
      %v1135 = vadd.f32 0.0, %v1134
      %v1136 = vpop.f32.mrb[0].mxu0
      %1137 = vmatprep.mubr.f32.mxu0 0.0
      %1138 = vmatmul.mubr.f32.gmra.mrb[0].mxu0 %v976
      %v1139 = vpop.f32.mrb[0].mxu0
      %v1140 = vadd.f32 0.0, %v1139
      %v1141 = vpop.f32.mrb[0].mxu0
      %1142 = vmatprep.mubr.f32.mxu0 0.0
      %1143 = vmatmul.mubr.f32.gmra.mrb[0].mxu0 %v978
      %v1144 = vpop.f32.mrb[0].mxu0
      %v1145 = vadd.f32 0.0, %v1144
      %v1146 = vpop.f32.mrb[0].mxu0
      %1147 = vmatprep.mubr.f32.mxu0 0.0
      %1148 = vmatmul.mubr.f32.gmra.mrb[0].mxu0 %v980
      %v1149 = vpop.f32.mrb[0].mxu0
      %v1150 = vadd.f32 0.0, %v1149
      %v1151 = vpop.f32.mrb[0].mxu0
      %1152 = vmatprep.mubr.f32.mxu0 0.0
      %1153 = vmatmul.mubr.f32.gmra.mrb[0].mxu0 %v982
      %v1154 = vpop.f32.mrb[0].mxu0
      %v1155 = vadd.f32 0.0, %v1154
      %v1156 = vpop.f32.mrb[0].mxu0
      %1157 = vmatprep.mubr.f32.mxu0 0.0
      %1158 = vmatmul.mubr.f32.gmra.mrb[0].mxu0 %v984
      %v1159 = vpop.f32.mrb[0].mxu0
      %v1160 = vadd.f32 0.0, %v1159
      %v1161 = vpop.f32.mrb[0].mxu0
      %1162 = vmatprep.mubr.f32.mxu0 0.0
      %1163 = vmatmul.mubr.f32.gmra.mrb[0].mxu0 %v986
      %v1164 = vpop.f32.mrb[0].mxu0
      %v1165 = vadd.f32 0.0, %v1164
      %v1166 = vpop.f32.mrb[0].mxu0
      %1167 = vmatprep.mubr.f32.mxu0 0.0
      %1168 = vmatmul.mubr.f32.gmra.mrb[0].mxu0 %v988
      %v1169 = vpop.f32.mrb[0].mxu0
      %v1170 = vadd.f32 0.0, %v1169
      %v1171 = vpop.f32.mrb[0].mxu0
      %1172 = vmatprep.mubr.f32.mxu0 0.0
      %1173 = vmatmul.mubr.f32.gmra.mrb[0].mxu0 %v990
      %v1174 = vpop.f32.mrb[0].mxu0
      %v1175 = vadd.f32 0.0, %v1174
      %v1176 = vpop.f32.mrb[0].mxu0
      %1177 = vmatprep.mubr.f32.mxu0 0.0
      %1178 = vmatmul.mubr.f32.gmra.mrb[0].mxu0 %v992
      %v1179 = vpop.f32.mrb[0].mxu0
      %v1180 = vadd.f32 0.0, %v1179
      %v1181 = vpop.f32.mrb[0].mxu0
      %1182 = vmatprep.mubr.f32.mxu0 0.0
      %1183 = vmatmul.mubr.f32.gmra.mrb[0].mxu0 %v994
      %v1184 = vpop.f32.mrb[0].mxu0
      %v1185 = vadd.f32 0.0, %v1184
      %v1186 = vpop.f32.mrb[0].mxu0
      %1187 = vmatprep.mubr.f32.mxu0 0.0
      %1188 = vmatmul.mubr.f32.gmra.mrb[0].mxu0 %v996
      %v1189 = vpop.f32.mrb[0].mxu0
      %v1190 = vadd.f32 0.0, %v1189
      %v1191 = vpop.f32.mrb[0].mxu0
      %1192 = vdwg.mxu0
      %v1193 = vadd.f32 %v743, %v1065
      %v1194 = vadd.f32 %v748, %v1070
      %v1195 = vadd.f32 %v753, %v1075
      %v1196 = vadd.f32 %v758, %v1080
      %v1197 = vadd.f32 %v763, %v1085
      %v1198 = vadd.f32 %v768, %v1090
      %v1199 = vadd.f32 %v773, %v1095
      %v1200 = vadd.f32 %v778, %v1100
      %v1201 = vadd.f32 %v783, %v1105
      %v1202 = vadd.f32 %v788, %v1110
      %v1203 = vadd.f32 %v793, %v1115
      %v1204 = vadd.f32 %v798, %v1120
      %v1205 = vadd.f32 %v803, %v1125
      %v1206 = vadd.f32 %v808, %v1130
      %v1207 = vadd.f32 %v813, %v1135
      %v1208 = vadd.f32 %v818, %v1140
      %v1209 = vadd.f32 %v823, %v1145
      %v1210 = vadd.f32 %v828, %v1150
      %v1211 = vadd.f32 %v833, %v1155
      %v1212 = vadd.f32 %v838, %v1160
      %v1213 = vadd.f32 %v843, %v1165
      %v1214 = vadd.f32 %v848, %v1170
      %v1215 = vadd.f32 %v853, %v1175
      %v1216 = vadd.f32 %v858, %v1180
      %v1217 = vadd.f32 %v863, %v1185
      %v1218 = vadd.f32 %v868, %v1190
      %vm1219 = vcmask 1044480
      %v1220 = vrot.slane %v215, 3
      %v1221 = vrot.slane %v216, 3
      %v1222 = vsel %vm1219, %v1220, %v1221
      %v1223 = vrot.slane %v217, 3
      %v1224 = vsel %vm1219, %v1221, %v1223
      %v1225 = vrot.slane %v218, 3
      %v1226 = vrot.slane %v219, 3
      %v1227 = vsel %vm1219, %v1225, %v1226
      %v1228 = vrot.slane %v220, 3
      %v1229 = vsel %vm1219, %v1226, %v1228
      %v1230 = vrot.slane %v221, 3
      %v1231 = vrot.slane %v222, 3
      %v1232 = vsel %vm1219, %v1230, %v1231
      %v1233 = vrot.slane %v223, 3
      %v1234 = vsel %vm1219, %v1231, %v1233
      %v1235 = vrot.slane %v224, 3
      %v1236 = vrot.slane %v225, 3
      %v1237 = vsel %vm1219, %v1235, %v1236
      %v1238 = vrot.slane %v226, 3
      %v1239 = vsel %vm1219, %v1236, %v1238
      %v1240 = vrot.slane %v227, 3
      %v1241 = vrot.slane %v228, 3
      %v1242 = vsel %vm1219, %v1240, %v1241
      %v1243 = vrot.slane %v229, 3
      %v1244 = vsel %vm1219, %v1241, %v1243
      %v1245 = vrot.slane %v230, 3
      %v1246 = vrot.slane %v231, 3
      %v1247 = vsel %vm1219, %v1245, %v1246
      %v1248 = vrot.slane %v232, 3
      %v1249 = vsel %vm1219, %v1246, %v1248
      %v1250 = vrot.slane %v233, 3
      %v1251 = vrot.slane %v234, 3
      %v1252 = vsel %vm1219, %v1250, %v1251
      %v1253 = vrot.slane %v235, 3
      %v1254 = vsel %vm1219, %v1251, %v1253
      %v1255 = vrot.slane %v236, 3
      %v1256 = vrot.slane %v237, 3
      %v1257 = vsel %vm1219, %v1255, %v1256
      %v1258 = vrot.slane %v238, 3
      %v1259 = vsel %vm1219, %v1256, %v1258
      %v1260 = vrot.slane %v239, 3
      %v1261 = vrot.slane %v240, 3
      %v1262 = vsel %vm1219, %v1260, %v1261
      %v1263 = vrot.slane %v241, 3
      %v1264 = vsel %vm1219, %v1261, %v1263
      %v1265 = vrot.slane %v242, 3
      %v1266 = vrot.slane %v243, 3
      %v1267 = vsel %vm1219, %v1265, %v1266
      %v1268 = vrot.slane %v244, 3
      %v1269 = vsel %vm1219, %v1266, %v1268
      %v1270 = vrot.slane %v245, 3
      %v1271 = vrot.slane %v246, 3
      %v1272 = vsel %vm1219, %v1270, %v1271
      %v1273 = vrot.slane %v247, 3
      %v1274 = vsel %vm1219, %v1271, %v1273
      %v1275 = vrot.slane %v248, 3
      %v1276 = vrot.slane %v249, 3
      %v1277 = vsel %vm1219, %v1275, %v1276
      %v1278 = vrot.slane %v250, 3
      %v1279 = vsel %vm1219, %v1276, %v1278
      %v1280 = vrot.slane %v251, 3
      %v1281 = vrot.slane %v252, 3
      %v1282 = vsel %vm1219, %v1280, %v1281
      %v1283 = vrot.slane %v253, 3
      %v1284 = vsel %vm1219, %v1281, %v1283
      %s1285 = scalar_lea.vmem %s1, 192
      %v1286 = vld [vmem:[%s1285] sm:$0xff]
      %v1287 = vld [vmem:[%s1285 + $0x8] sm:$0xff]
      %v1288 = vld [vmem:[%s1285 + $0x10] sm:$0xff]
      %v1289 = vld [vmem:[%s1285 + $0x18] sm:$0xff]
      %v1290 = vld [vmem:[%s1285 + $0x20] sm:$0xff]
      %v1291 = vld [vmem:[%s1285 + $0x28] sm:$0xff]
      %v1292 = vld [vmem:[%s1285 + $0x30] sm:$0xff]
      %v1293 = vld [vmem:[%s1285 + $0x38] sm:$0xff]
      %v1294 = vsel %vm376, %v1222, 0
      %v1296 = vsel %vm376, %v1224, 0
      %v1298 = vsel %vm376, %v1227, 0
      %v1300 = vsel %vm376, %v1229, 0
      %v1302 = vsel %vm376, %v1232, 0
      %v1304 = vsel %vm376, %v1234, 0
      %v1306 = vsel %vm376, %v1237, 0
      %v1308 = vsel %vm376, %v1239, 0
      %v1310 = vsel %vm376, %v1242, 0
      %v1312 = vsel %vm376, %v1244, 0
      %v1314 = vsel %vm376, %v1247, 0
      %v1316 = vsel %vm376, %v1249, 0
      %v1318 = vsel %vm376, %v1252, 0
      %v1320 = vsel %vm376, %v1254, 0
      %v1322 = vsel %vm376, %v1257, 0
      %v1324 = vsel %vm376, %v1259, 0
      %v1326 = vsel %vm376, %v1262, 0
      %v1328 = vsel %vm376, %v1264, 0
      %v1330 = vsel %vm376, %v1267, 0
      %v1332 = vsel %vm376, %v1269, 0
      %v1334 = vsel %vm376, %v1272, 0
      %v1336 = vsel %vm376, %v1274, 0
      %v1338 = vsel %vm376, %v1277, 0
      %v1340 = vsel %vm376, %v1279, 0
      %v1342 = vsel %vm376, %v1282, 0
      %v1344 = vsel %vm376, %v1284, 0
      %1346 = vmatprep.subr.mxu0 0.0
      %1347 = vmatpush1.msra.mxu0 %v1286
      %1348 = vmatprep.subr.mxu0 0.0
      %1349 = vmatpush1.msra.mxu0 %v1287
      %1350 = vmatprep.subr.mxu0 0.0
      %1351 = vmatpush1.msra.mxu0 %v1288
      %1352 = vmatprep.subr.mxu0 0.0
      %1353 = vmatpush1.msra.mxu0 %v1289
      %1354 = vmatprep.subr.mxu0 0.0
      %1355 = vmatpush1.msra.mxu0 %v1290
      %1356 = vmatprep.subr.mxu0 0.0
      %1357 = vmatpush1.msra.mxu0 %v1291
      %1358 = vmatprep.subr.mxu0 0.0
      %1359 = vmatpush1.msra.mxu0 %v1292
      %1360 = vmatprep.subr.mxu0 0.0
      %1361 = vmatpush1.msra.mxu0 %v1293
      %1362 = vmatprep.subr.mxu0 0.0
      %1363 = vmatpush1.msra.mxu0 0.0
      %1364 = vmatprep.subr.mxu0 0.0
      %1365 = vmatpush1.msra.mxu0 0.0
      %1366 = vmatprep.subr.mxu0 0.0
      %1367 = vmatpush1.msra.mxu0 0.0
      %1368 = vmatprep.subr.mxu0 0.0
      %1369 = vmatpush1.msra.mxu0 0.0
      %1370 = vmatprep.subr.mxu0 0.0
      %1371 = vmatpush1.msra.mxu0 0.0
      %1372 = vmatprep.subr.mxu0 0.0
      %1373 = vmatpush1.msra.mxu0 0.0
      %1374 = vmatprep.subr.mxu0 0.0
      %1375 = vmatpush1.msra.mxu0 0.0
      %1376 = vmatprep.subr.mxu0 0.0
      %1377 = vmatpush1.msra.mxu0 0.0
      %1378 = vmatprep.subr.mxu0 0.0
      %1379 = vmatpush1.msra.mxu0 0.0
      %1380 = vmatprep.subr.mxu0 0.0
      %1381 = vmatpush1.msra.mxu0 0.0
      %1382 = vmatprep.subr.mxu0 0.0
      %1383 = vmatpush1.msra.mxu0 0.0
      %1384 = vmatprep.subr.mxu0 0.0
      %1385 = vmatpush1.msra.mxu0 0.0
      %1386 = vmatprep.subr.mxu0 0.0
      %1387 = vmatpush1.msra.mxu0 0.0
      %1388 = vmatprep.subr.mxu0 0.0
      %1389 = vmatpush1.msra.mxu0 0.0
      %1390 = vmatprep.subr.mxu0 0.0
      %1391 = vmatpush1.msra.mxu0 0.0
      %1392 = vmatprep.subr.mxu0 0.0
      %1393 = vmatpush1.msra.mxu0 0.0
      %1394 = vmatprep.subr.mxu0 0.0
      %1395 = vmatpush1.msra.mxu0 0.0
      %1396 = vmatprep.subr.mxu0 0.0
      %1397 = vmatpush1.msra.mxu0 0.0
      %1398 = vmatprep.subr.mxu0 0.0
      %1399 = vmatpush1.msra.mxu0 0.0
      %1400 = vmatprep.subr.mxu0 0.0
      %1401 = vmatpush1.msra.mxu0 0.0
      %1402 = vmatprep.subr.mxu0 0.0
      %1403 = vmatpush1.msra.mxu0 0.0
      %1404 = vmatprep.subr.mxu0 0.0
      %1405 = vmatpush1.msra.mxu0 0.0
      %1406 = vmatprep.subr.mxu0 0.0
      %1407 = vmatpush1.msra.mxu0 0.0
      %1408 = vmatprep.subr.mxu0 0.0
      %1409 = vmatpush1.msra.mxu0 0.0
      %1410 = vmatprep.mubr.f32.mxu0 0.0
      %1411 = vmatmul.mubr.f32.gmra.mrb[0].mxu0 %v1294
      %v1412 = vpop.f32.mrb[0].mxu0
      %v1413 = vadd.f32 0.0, %v1412
      %v1414 = vpop.f32.mrb[0].mxu0
      %1415 = vmatprep.mubr.f32.mxu0 0.0
      %1416 = vmatmul.mubr.f32.gmra.mrb[0].mxu0 %v1296
      %v1417 = vpop.f32.mrb[0].mxu0
      %v1418 = vadd.f32 0.0, %v1417
      %v1419 = vpop.f32.mrb[0].mxu0
      %1420 = vmatprep.mubr.f32.mxu0 0.0
      %1421 = vmatmul.mubr.f32.gmra.mrb[0].mxu0 %v1298
      %v1422 = vpop.f32.mrb[0].mxu0
      %v1423 = vadd.f32 0.0, %v1422
      %v1424 = vpop.f32.mrb[0].mxu0
      %1425 = vmatprep.mubr.f32.mxu0 0.0
      %1426 = vmatmul.mubr.f32.gmra.mrb[0].mxu0 %v1300
      %v1427 = vpop.f32.mrb[0].mxu0
      %v1428 = vadd.f32 0.0, %v1427
      %v1429 = vpop.f32.mrb[0].mxu0
      %1430 = vmatprep.mubr.f32.mxu0 0.0
      %1431 = vmatmul.mubr.f32.gmra.mrb[0].mxu0 %v1302
      %v1432 = vpop.f32.mrb[0].mxu0
      %v1433 = vadd.f32 0.0, %v1432
      %v1434 = vpop.f32.mrb[0].mxu0
      %1435 = vmatprep.mubr.f32.mxu0 0.0
      %1436 = vmatmul.mubr.f32.gmra.mrb[0].mxu0 %v1304
      %v1437 = vpop.f32.mrb[0].mxu0
      %v1438 = vadd.f32 0.0, %v1437
      %v1439 = vpop.f32.mrb[0].mxu0
      %1440 = vmatprep.mubr.f32.mxu0 0.0
      %1441 = vmatmul.mubr.f32.gmra.mrb[0].mxu0 %v1306
      %v1442 = vpop.f32.mrb[0].mxu0
      %v1443 = vadd.f32 0.0, %v1442
      %v1444 = vpop.f32.mrb[0].mxu0
      %1445 = vmatprep.mubr.f32.mxu0 0.0
      %1446 = vmatmul.mubr.f32.gmra.mrb[0].mxu0 %v1308
      %v1447 = vpop.f32.mrb[0].mxu0
      %v1448 = vadd.f32 0.0, %v1447
      %v1449 = vpop.f32.mrb[0].mxu0
      %1450 = vmatprep.mubr.f32.mxu0 0.0
      %1451 = vmatmul.mubr.f32.gmra.mrb[0].mxu0 %v1310
      %v1452 = vpop.f32.mrb[0].mxu0
      %v1453 = vadd.f32 0.0, %v1452
      %v1454 = vpop.f32.mrb[0].mxu0
      %1455 = vmatprep.mubr.f32.mxu0 0.0
      %1456 = vmatmul.mubr.f32.gmra.mrb[0].mxu0 %v1312
      %v1457 = vpop.f32.mrb[0].mxu0
      %v1458 = vadd.f32 0.0, %v1457
      %v1459 = vpop.f32.mrb[0].mxu0
      %1460 = vmatprep.mubr.f32.mxu0 0.0
      %1461 = vmatmul.mubr.f32.gmra.mrb[0].mxu0 %v1314
      %v1462 = vpop.f32.mrb[0].mxu0
      %v1463 = vadd.f32 0.0, %v1462
      %v1464 = vpop.f32.mrb[0].mxu0
      %1465 = vmatprep.mubr.f32.mxu0 0.0
      %1466 = vmatmul.mubr.f32.gmra.mrb[0].mxu0 %v1316
      %v1467 = vpop.f32.mrb[0].mxu0
      %v1468 = vadd.f32 0.0, %v1467
      %v1469 = vpop.f32.mrb[0].mxu0
      %1470 = vmatprep.mubr.f32.mxu0 0.0
      %1471 = vmatmul.mubr.f32.gmra.mrb[0].mxu0 %v1318
      %v1472 = vpop.f32.mrb[0].mxu0
      %v1473 = vadd.f32 0.0, %v1472
      %v1474 = vpop.f32.mrb[0].mxu0
      %1475 = vmatprep.mubr.f32.mxu0 0.0
      %1476 = vmatmul.mubr.f32.gmra.mrb[0].mxu0 %v1320
      %v1477 = vpop.f32.mrb[0].mxu0
      %v1478 = vadd.f32 0.0, %v1477
      %v1479 = vpop.f32.mrb[0].mxu0
      %1480 = vmatprep.mubr.f32.mxu0 0.0
      %1481 = vmatmul.mubr.f32.gmra.mrb[0].mxu0 %v1322
      %v1482 = vpop.f32.mrb[0].mxu0
      %v1483 = vadd.f32 0.0, %v1482
      %v1484 = vpop.f32.mrb[0].mxu0
      %1485 = vmatprep.mubr.f32.mxu0 0.0
      %1486 = vmatmul.mubr.f32.gmra.mrb[0].mxu0 %v1324
      %v1487 = vpop.f32.mrb[0].mxu0
      %v1488 = vadd.f32 0.0, %v1487
      %v1489 = vpop.f32.mrb[0].mxu0
      %1490 = vmatprep.mubr.f32.mxu0 0.0
      %1491 = vmatmul.mubr.f32.gmra.mrb[0].mxu0 %v1326
      %v1492 = vpop.f32.mrb[0].mxu0
      %v1493 = vadd.f32 0.0, %v1492
      %v1494 = vpop.f32.mrb[0].mxu0
      %1495 = vmatprep.mubr.f32.mxu0 0.0
      %1496 = vmatmul.mubr.f32.gmra.mrb[0].mxu0 %v1328
      %v1497 = vpop.f32.mrb[0].mxu0
      %v1498 = vadd.f32 0.0, %v1497
      %v1499 = vpop.f32.mrb[0].mxu0
      %1500 = vmatprep.mubr.f32.mxu0 0.0
      %1501 = vmatmul.mubr.f32.gmra.mrb[0].mxu0 %v1330
      %v1502 = vpop.f32.mrb[0].mxu0
      %v1503 = vadd.f32 0.0, %v1502
      %v1504 = vpop.f32.mrb[0].mxu0
      %1505 = vmatprep.mubr.f32.mxu0 0.0
      %1506 = vmatmul.mubr.f32.gmra.mrb[0].mxu0 %v1332
      %v1507 = vpop.f32.mrb[0].mxu0
      %v1508 = vadd.f32 0.0, %v1507
      %v1509 = vpop.f32.mrb[0].mxu0
      %1510 = vmatprep.mubr.f32.mxu0 0.0
      %1511 = vmatmul.mubr.f32.gmra.mrb[0].mxu0 %v1334
      %v1512 = vpop.f32.mrb[0].mxu0
      %v1513 = vadd.f32 0.0, %v1512
      %v1514 = vpop.f32.mrb[0].mxu0
      %1515 = vmatprep.mubr.f32.mxu0 0.0
      %1516 = vmatmul.mubr.f32.gmra.mrb[0].mxu0 %v1336
      %v1517 = vpop.f32.mrb[0].mxu0
      %v1518 = vadd.f32 0.0, %v1517
      %v1519 = vpop.f32.mrb[0].mxu0
      %1520 = vmatprep.mubr.f32.mxu0 0.0
      %1521 = vmatmul.mubr.f32.gmra.mrb[0].mxu0 %v1338
      %v1522 = vpop.f32.mrb[0].mxu0
      %v1523 = vadd.f32 0.0, %v1522
      %v1524 = vpop.f32.mrb[0].mxu0
      %1525 = vmatprep.mubr.f32.mxu0 0.0
      %1526 = vmatmul.mubr.f32.gmra.mrb[0].mxu0 %v1340
      %v1527 = vpop.f32.mrb[0].mxu0
      %v1528 = vadd.f32 0.0, %v1527
      %v1529 = vpop.f32.mrb[0].mxu0
      %1530 = vmatprep.mubr.f32.mxu0 0.0
      %1531 = vmatmul.mubr.f32.gmra.mrb[0].mxu0 %v1342
      %v1532 = vpop.f32.mrb[0].mxu0
      %v1533 = vadd.f32 0.0, %v1532
      %v1534 = vpop.f32.mrb[0].mxu0
      %1535 = vmatprep.mubr.f32.mxu0 0.0
      %1536 = vmatmul.mubr.f32.gmra.mrb[0].mxu0 %v1344
      %v1537 = vpop.f32.mrb[0].mxu0
      %v1538 = vadd.f32 0.0, %v1537
      %v1539 = vpop.f32.mrb[0].mxu0
      %1540 = vdwg.mxu0
      %v1541 = vadd.f32 %v1193, %v1413
      %v1542 = vadd.f32 %v1194, %v1418
      %v1543 = vadd.f32 %v1195, %v1423
      %v1544 = vadd.f32 %v1196, %v1428
      %v1545 = vadd.f32 %v1197, %v1433
      %v1546 = vadd.f32 %v1198, %v1438
      %v1547 = vadd.f32 %v1199, %v1443
      %v1548 = vadd.f32 %v1200, %v1448
      %v1549 = vadd.f32 %v1201, %v1453
      %v1550 = vadd.f32 %v1202, %v1458
      %v1551 = vadd.f32 %v1203, %v1463
      %v1552 = vadd.f32 %v1204, %v1468
      %v1553 = vadd.f32 %v1205, %v1473
      %v1554 = vadd.f32 %v1206, %v1478
      %v1555 = vadd.f32 %v1207, %v1483
      %v1556 = vadd.f32 %v1208, %v1488
      %v1557 = vadd.f32 %v1209, %v1493
      %v1558 = vadd.f32 %v1210, %v1498
      %v1559 = vadd.f32 %v1211, %v1503
      %v1560 = vadd.f32 %v1212, %v1508
      %v1561 = vadd.f32 %v1213, %v1513
      %v1562 = vadd.f32 %v1214, %v1518
      %v1563 = vadd.f32 %v1215, %v1523
      %v1564 = vadd.f32 %v1216, %v1528
      %v1565 = vadd.f32 %v1217, %v1533
      %v1566 = vadd.f32 %v1218, %v1538
      %v1567 = vld [vmem:[%s2] sm:$0x1]
      %v1569 = vlaneseq
      %v1570 = vshrl.u32 %v1569, 7
      %v1571 = vsub.s32 0, %v1570
      %v1572 = vrot.slane %v1567, %v1571
      %v1574 = vadd.f32 %v1541, %v1572
      %v1575 = vadd.f32 %v1542, %v1572
      %v1576 = vadd.f32 %v1543, %v1572
      %v1577 = vadd.f32 %v1544, %v1572
      %v1578 = vadd.f32 %v1545, %v1572
      %v1579 = vadd.f32 %v1546, %v1572
      %v1580 = vadd.f32 %v1547, %v1572
      %v1581 = vadd.f32 %v1548, %v1572
      %v1582 = vadd.f32 %v1549, %v1572
      %v1583 = vadd.f32 %v1550, %v1572
      %v1584 = vadd.f32 %v1551, %v1572
      %v1585 = vadd.f32 %v1552, %v1572
      %v1586 = vadd.f32 %v1553, %v1572
      %v1587 = vadd.f32 %v1554, %v1572
      %v1588 = vadd.f32 %v1555, %v1572
      %v1589 = vadd.f32 %v1556, %v1572
      %v1590 = vadd.f32 %v1557, %v1572
      %v1591 = vadd.f32 %v1558, %v1572
      %v1592 = vadd.f32 %v1559, %v1572
      %v1593 = vadd.f32 %v1560, %v1572
      %v1594 = vadd.f32 %v1561, %v1572
      %v1595 = vadd.f32 %v1562, %v1572
      %v1596 = vadd.f32 %v1563, %v1572
      %v1597 = vadd.f32 %v1564, %v1572
      %v1598 = vadd.f32 %v1565, %v1572
      %v1599 = vadd.f32 %v1566, %v1572
      %v1600 = vmax.f32 %v1574, 0.0
      %v1601 = vmax.f32 %v1575, 0.0
      %v1602 = vmax.f32 %v1576, 0.0
      %v1603 = vmax.f32 %v1577, 0.0
      %v1604 = vmax.f32 %v1578, 0.0
      %v1605 = vmax.f32 %v1579, 0.0
      %v1606 = vmax.f32 %v1580, 0.0
      %v1607 = vmax.f32 %v1581, 0.0
      %v1608 = vmax.f32 %v1582, 0.0
      %v1609 = vmax.f32 %v1583, 0.0
      %v1610 = vmax.f32 %v1584, 0.0
      %v1611 = vmax.f32 %v1585, 0.0
      %v1612 = vmax.f32 %v1586, 0.0
      %v1613 = vmax.f32 %v1587, 0.0
      %v1614 = vmax.f32 %v1588, 0.0
      %v1615 = vmax.f32 %v1589, 0.0
      %v1616 = vmax.f32 %v1590, 0.0
      %v1617 = vmax.f32 %v1591, 0.0
      %v1618 = vmax.f32 %v1592, 0.0
      %v1619 = vmax.f32 %v1593, 0.0
      %v1620 = vmax.f32 %v1594, 0.0
      %v1621 = vmax.f32 %v1595, 0.0
      %v1622 = vmax.f32 %v1596, 0.0
      %v1623 = vmax.f32 %v1597, 0.0
      %v1624 = vmax.f32 %v1598, 0.0
      %v1625 = vmax.f32 %v1599, 0.0
      %1626 = vst.msk [vmem:[%s213] sm:$0xff] %vm376, %v1600
      %1627 = vst.msk [vmem:[%s213 + $0x8] sm:$0xff] %vm376, %v1601
      %1628 = vst.msk [vmem:[%s213 + $0x10] sm:$0xff] %vm376, %v1602
      %1629 = vst.msk [vmem:[%s213 + $0x18] sm:$0xff] %vm376, %v1603
      %1630 = vst.msk [vmem:[%s213 + $0x20] sm:$0xff] %vm376, %v1604
      %1631 = vst.msk [vmem:[%s213 + $0x28] sm:$0xff] %vm376, %v1605
      %1632 = vst.msk [vmem:[%s213 + $0x30] sm:$0xff] %vm376, %v1606
      %1633 = vst.msk [vmem:[%s213 + $0x38] sm:$0xff] %vm376, %v1607
      %1634 = vst.msk [vmem:[%s213 + $0x40] sm:$0xff] %vm376, %v1608
      %1635 = vst.msk [vmem:[%s213 + $0x48] sm:$0xff] %vm376, %v1609
      %1636 = vst.msk [vmem:[%s213 + $0x50] sm:$0xff] %vm376, %v1610
      %1637 = vst.msk [vmem:[%s213 + $0x58] sm:$0xff] %vm376, %v1611
      %1638 = vst.msk [vmem:[%s213 + $0x60] sm:$0xff] %vm376, %v1612
      %1639 = vst.msk [vmem:[%s213 + $0x68] sm:$0xff] %vm376, %v1613
      %1640 = vst.msk [vmem:[%s213 + $0x70] sm:$0xff] %vm376, %v1614
      %1641 = vst.msk [vmem:[%s213 + $0x78] sm:$0xff] %vm376, %v1615
      %1642 = vst.msk [vmem:[%s213 + $0x80] sm:$0xff] %vm376, %v1616
      %1643 = vst.msk [vmem:[%s213 + $0x88] sm:$0xff] %vm376, %v1617
      %1644 = vst.msk [vmem:[%s213 + $0x90] sm:$0xff] %vm376, %v1618
      %1645 = vst.msk [vmem:[%s213 + $0x98] sm:$0xff] %vm376, %v1619
      %1646 = vst.msk [vmem:[%s213 + $0xa0] sm:$0xff] %vm376, %v1620
      %1647 = vst.msk [vmem:[%s213 + $0xa8] sm:$0xff] %vm376, %v1621
      %1648 = vst.msk [vmem:[%s213 + $0xb0] sm:$0xff] %vm376, %v1622
      %1649 = vst.msk [vmem:[%s213 + $0xb8] sm:$0xff] %vm376, %v1623
      %1650 = vst.msk [vmem:[%s213 + $0xc0] sm:$0xff] %vm376, %v1624
      %1651 = vst.msk [vmem:[%s213 + $0xc8] sm:$0xff] %vm376, %v1625
      %s1652 = smul.u32 13, %s19
      %p1653 = scmp.lt.s32.totalorder %s18, 1
      %s1654 = scalar_select %p1653, %s18, 1
      %p1655 = scmp.lt.s32.totalorder %s1652, 12
      %s1656 = scalar_select %p1655, %s1652, 12
      %s1657 = smul.addr %s1656, 2
      %s1658 = smul.addr %s1654, 26
      %s1659 = sadd.s32 %s1657, %s1658
      %s1660 = smul.addr %s1659, 8
      %s1661 = scalar_lea.vmem %s3, %s1660
      // Predicated region
      $region33: #{spatial_softmax_image_encoder.3} parent=31 // pred_check
        %p1662 = pneg %p116
      $region34: #{spatial_softmax_image_encoder.3} parent=31 // pred_check_branch
        %1664 = sbr.rel (%p1662) target = $region36
      $region35: #{spatial_softmax_image_encoder.3} parent=31 // pred_region
        %s1665 = smul.u32 13, %s19
      $region36: #{spatial_softmax_image_encoder.3} parent=31 // pred_fallthru
        _
    $region32: #{spatial_softmax_image_encoder.3} parent=5 // pred_fallthru
      _
    %p1666 = scmp.le.s32.totalorder 2, %s9
    // Predicated region
    $region37: #{spatial_softmax_image_encoder.3} parent=5 // pred_check
      %p1667 = pneg %p1666
    $region38: #{spatial_softmax_image_encoder.3} parent=5 // pred_check_branch
      %1669 = sbr.rel (%p1667) target = $region40
    $region39: #{spatial_softmax_image_encoder.3} parent=5 // pred_region
      %s1670 = ssub.s32 %s9, 2
      // Predicated region
      $region41: #{spatial_softmax_image_encoder.3} parent=39 // pred_check
        %p1671 = pneg %p122
      $region42: #{spatial_softmax_image_encoder.3} parent=39 // pred_check_branch
        %1673 = sbr.rel (%p1671) target = $region44
      $region43: #{spatial_softmax_image_encoder.3} parent=39 // pred_region
        %s1674 = smul.u32 13, %s21
        %p1675 = scmp.lt.s32.totalorder %s20, 1
        %s1676 = scalar_select %p1675, %s20, 1
        %p1677 = scmp.lt.s32.totalorder %s1674, 12
        %s1678 = scalar_select %p1677, %s1674, 12
        %s1679 = smul.addr %s1678, 2
        %s1680 = smul.addr %s1676, 26
        %s1681 = sadd.s32 %s1679, %s1680
        %s1682 = smul.addr %s1681, 8
        %s1683 = scalar_lea.vmem %s3, %s1682
      $region44: #{spatial_softmax_image_encoder.3} parent=39 // pred_fallthru
        _
    $region40: #{spatial_softmax_image_encoder.3} parent=5 // pred_fallthru
      _
  $region6: #{spatial_softmax_image_encoder.3} parent=0 // loop_footer
    %s13 = sadd.s32 1, %s9
  $region7: #{spatial_softmax_image_encoder.3} parent=0 // loop_footer_branch
    %8 = sbr.rel target = $region3
  $region8: #{spatial_softmax_image_encoder.3} parent=0 // loop_exit
    _

// kernel: spatial_softmax_image_encoder.4
$region0: #{spatial_softmax_image_encoder.4}
  #allocation0 [shape = 'u32[]', space=smem, size = 0x4, offset = 0x4, fixed_abs, tag = 'smem constant byte address 0x4 - core index']
  #allocation1 [shape = 'u32[144,128]{1,0:T(1,128)}', space=vmem, size = 0x12000, scoped, tag = 'internal scratch']
  %s0 = inlined_call_operand.vmem [shape: f32[2,9,20,320], index: 0, kind: input, shape index: {}]
  %s1 = inlined_call_operand.vmem [shape: f32[5,320,32], index: 1, kind: input, shape index: {}]
  %s2 = inlined_call_operand.vmem [shape: f32[1,32], index: 2, kind: input, shape index: {}]
  %s3 = inlined_call_operand.vmem [shape: f32[2,9,16,32], index: 3, kind: output, shape index: {}]
  %s4 = sld [smem:[#allocation0]]
  $region45: #{spatial_softmax_image_encoder.4} parent=0
    _
  %s6 = ssub.s32 1, %s4
  %s7 = scalar_select 0, %s6, %s4
  loop: start=0, step=1, limit=4
  $region2: #{spatial_softmax_image_encoder.4} parent=0 // loop_pre_header
    _
  $region3: #{spatial_softmax_image_encoder.4} parent=0 // loop_header
    %s9 = sphi 0, %s13
    %p10 = scmp.ge.s32.totalorder %s9, 4
    %s16 = sphi 0, %s28
    %s17 = sphi 0, %s24
    %s18 = sphi 0, %s16
    %s19 = sphi 0, %s17
    %s20 = sphi 0, %s18
    %s21 = sphi 0, %s19
    %s33 = sphi 0, %s35
    %s36 = sphi 0, %s33
    %s37 = sphi 0, %s36
    %s53 = sphi 0, %s37
    %s57 = sphi 0, %s57
    %s59 = sphi 0, %s57
    %s60 = sphi 0, %s59
    %s74 = sphi 0, %s60
    %s78 = sphi 0, %s78
    %s80 = sphi 0, %s78
    %s81 = sphi 0, %s80
    %s95 = sphi 0, %s81
    %s103 = sphi 0, %s105
    %s106 = sphi 0, %s103
    %s107 = sphi 0, %s106
    %s123 = sphi 0, %s107
  $region4: #{spatial_softmax_image_encoder.4} parent=0 // loop_header_branch
    %12 = sbr.rel (%p10) target = $region8
  $region5: #{spatial_softmax_image_encoder.4} parent=0 // loop_body
    %s14 = ssub.s32 %s9, 1
    %s15 = ssub.s32 %s9, 2
    %s22 = sadd.s32 1, %s17
    %p23 = scmp.ge.s32.totalorder %s22, 1
    %s24 = scalar_select %p23, 0, %s22
    %s25 = sadd.s32 1, %s16
    %s26 = scalar_select %p23, %s25, %s16
    %p27 = scmp.ge.s32.totalorder %s26, 2
    %s28 = scalar_select %p27, 0, %s26
    %s29 = ssub.s32 %s16, %s28
    %s30 = ssub.s32 %s17, %s24
    %s31 = sor.u32 %s29, %s30
    %p32 = scmp.eq.s32.totalorder %s31, 0
    %s34 = sadd.s32 %s33, 1
    %s35 = scalar_select %p32, %s33, %s34
    %p38 = pneg %p32
    %p39 = scmp.eq.s32.totalorder %s9, 1
    %p40 = por %p38, %p39
    %p41 = scmp.ne.s32.totalorder %s33, %s36
    %p42 = scmp.eq.s32.totalorder %s9, 0
    %p43 = por %p41, %p42
    %p44 = scmp.ne.s32.totalorder %s33, %s36
    %p45 = scmp.eq.s32.totalorder %s14, 1
    %p46 = por %p44, %p45
    %p47 = scmp.ne.s32.totalorder %s36, %s37
    %p48 = scmp.eq.s32.totalorder %s14, 0
    %p49 = por %p47, %p48
    %p50 = scmp.ne.s32.totalorder %s36, %s37
    %p51 = scmp.eq.s32.totalorder %s15, 1
    %p52 = por %p50, %p51
    %p54 = scmp.ne.s32.totalorder %s37, %s53
    %p55 = scmp.eq.s32.totalorder %s15, 0
    %p56 = por %p54, %p55
    %s58 = sadd.s32 %s57, 1
    %p61 = scmp.eq.s32.totalorder %s9, 1
    %p62 = scmp.ne.s32.totalorder %s57, %s59
    %p63 = scmp.eq.s32.totalorder %s9, 0
    %p64 = por %p62, %p63
    %p65 = scmp.ne.s32.totalorder %s57, %s59
    %p66 = scmp.eq.s32.totalorder %s14, 1
    %p67 = por %p65, %p66
    %p68 = scmp.ne.s32.totalorder %s59, %s60
    %p69 = scmp.eq.s32.totalorder %s14, 0
    %p70 = por %p68, %p69
    %p71 = scmp.ne.s32.totalorder %s59, %s60
    %p72 = scmp.eq.s32.totalorder %s15, 1
    %p73 = por %p71, %p72
    %p75 = scmp.ne.s32.totalorder %s60, %s74
    %p76 = scmp.eq.s32.totalorder %s15, 0
    %p77 = por %p75, %p76
    %s79 = sadd.s32 %s78, 1
    %p82 = scmp.eq.s32.totalorder %s9, 1
    %p83 = scmp.ne.s32.totalorder %s78, %s80
    %p84 = scmp.eq.s32.totalorder %s9, 0
    %p85 = por %p83, %p84
    %p86 = scmp.ne.s32.totalorder %s78, %s80
    %p87 = scmp.eq.s32.totalorder %s14, 1
    %p88 = por %p86, %p87
    %p89 = scmp.ne.s32.totalorder %s80, %s81
    %p90 = scmp.eq.s32.totalorder %s14, 0
    %p91 = por %p89, %p90
    %p92 = scmp.ne.s32.totalorder %s80, %s81
    %p93 = scmp.eq.s32.totalorder %s15, 1
    %p94 = por %p92, %p93
    %p96 = scmp.ne.s32.totalorder %s81, %s95
    %p97 = scmp.eq.s32.totalorder %s15, 0
    %p98 = por %p96, %p97
    %s99 = ssub.s32 %s16, %s28
    %s100 = ssub.s32 %s17, %s24
    %s101 = sor.u32 %s99, %s100
    %p102 = scmp.eq.s32.totalorder %s101, 0
    %s104 = sadd.s32 %s103, 1
    %s105 = scalar_select %p102, %s103, %s104
    %p108 = pneg %p102
    %p109 = scmp.eq.s32.totalorder %s9, 1
    %p110 = por %p108, %p109
    %p111 = scmp.ne.s32.totalorder %s103, %s106
    %p112 = scmp.eq.s32.totalorder %s9, 0
    %p113 = por %p111, %p112
    %p114 = scmp.ne.s32.totalorder %s103, %s106
    %p115 = scmp.eq.s32.totalorder %s14, 1
    %p116 = por %p114, %p115
    %p117 = scmp.ne.s32.totalorder %s106, %s107
    %p118 = scmp.eq.s32.totalorder %s14, 0
    %p119 = por %p117, %p118
    %p120 = scmp.ne.s32.totalorder %s106, %s107
    %p121 = scmp.eq.s32.totalorder %s15, 1
    %p122 = por %p120, %p121
    %p124 = scmp.ne.s32.totalorder %s107, %s123
    %p125 = scmp.eq.s32.totalorder %s15, 0
    %p126 = por %p124, %p125
    %p127 = scmp.le.s32.totalorder 1, %s9
    %p128 = scmp.lt.s32.totalorder %s9, 3
    %p129 = pnand %p127, %p128
    %p130 = pneg %p129
    // Predicated region
    $region9: #{spatial_softmax_image_encoder.4} parent=5 // pred_check
      _
    $region10: #{spatial_softmax_image_encoder.4} parent=5 // pred_check_branch
      %132 = sbr.rel (%p129) target = $region12
    $region11: #{spatial_softmax_image_encoder.4} parent=5 // pred_region
      %s133 = ssub.s32 %s9, 1
      // Predicated region
      $region13: #{spatial_softmax_image_encoder.4} parent=11 // pred_check
        %p134 = pneg %p70
      $region14: #{spatial_softmax_image_encoder.4} parent=11 // pred_check_branch
        %136 = sbr.rel (%p134) target = $region16
      $region15: #{spatial_softmax_image_encoder.4} parent=11 // pred_region
        _
      $region16: #{spatial_softmax_image_encoder.4} parent=11 // pred_fallthru
        _
      // Predicated region
      $region17: #{spatial_softmax_image_encoder.4} parent=11 // pred_check
        %p137 = pneg %p91
      $region18: #{spatial_softmax_image_encoder.4} parent=11 // pred_check_branch
        %139 = sbr.rel (%p137) target = $region20
      $region19: #{spatial_softmax_image_encoder.4} parent=11 // pred_region
        _
      $region20: #{spatial_softmax_image_encoder.4} parent=11 // pred_fallthru
        _
    $region12: #{spatial_softmax_image_encoder.4} parent=5 // pred_fallthru
      _
    %p140 = scmp.lt.s32.totalorder %s9, 2
    // Predicated region
    $region21: #{spatial_softmax_image_encoder.4} parent=5 // pred_check
      %p141 = pneg %p140
    $region22: #{spatial_softmax_image_encoder.4} parent=5 // pred_check_branch
      %143 = sbr.rel (%p141) target = $region24
    $region23: #{spatial_softmax_image_encoder.4} parent=5 // pred_region
      // Predicated region
      $region25: #{spatial_softmax_image_encoder.4} parent=23 // pred_check
        %p144 = pneg %p43
      $region26: #{spatial_softmax_image_encoder.4} parent=23 // pred_check_branch
        %146 = sbr.rel (%p144) target = $region28
      $region27: #{spatial_softmax_image_encoder.4} parent=23 // pred_region
        %s147 = smul.u32 9, %s17
        %p148 = scmp.lt.s32.totalorder %s16, 1
        %s149 = scalar_select %p148, %s16, 1
        %p150 = scmp.lt.s32.totalorder %s147, 8
        %s151 = scalar_select %p150, %s147, 8
        %s152 = smul.addr %s151, 9
        %s153 = smul.addr %s149, 81
        %s154 = sadd.s32 %s152, %s153
        %s155 = smul.addr %s154, 8
        %s156 = scalar_lea.vmem %s0, %s155
        %s157 = smul.u32 9, %s17
      $region28: #{spatial_softmax_image_encoder.4} parent=23 // pred_fallthru
        _
    $region24: #{spatial_softmax_image_encoder.4} parent=5 // pred_fallthru
      _
    %p158 = scmp.le.s32.totalorder 1, %s9
    %p159 = scmp.lt.s32.totalorder %s9, 3
    %p160 = pnand %p158, %p159
    %p161 = pneg %p160
    // Predicated region
    $region29: #{spatial_softmax_image_encoder.4} parent=5 // pred_check
      _
    $region30: #{spatial_softmax_image_encoder.4} parent=5 // pred_check_branch
      %163 = sbr.rel (%p160) target = $region32
    $region31: #{spatial_softmax_image_encoder.4} parent=5 // pred_region
      %s164 = ssub.s32 %s9, 1
      %s165 = smul.u32 9, %s19
      %p166 = scmp.lt.s32.totalorder %s18, 1
      %s167 = scalar_select %p166, %s18, 1
      %p168 = scmp.lt.s32.totalorder %s165, 8
      %s169 = scalar_select %p168, %s165, 8
      %s170 = smul.addr %s169, 9
      %s171 = smul.addr %s167, 81
      %s172 = sadd.s32 %s170, %s171
      %s173 = smul.addr %s172, 8
      %s174 = scalar_lea.vmem %s0, %s173
      %p175 = pneg %p49
      %p176 = pneg %p46
      %p177 = pneg %p70
      %p178 = pneg %p67
      %p179 = pneg %p91
      %p180 = pneg %p88
      %p181 = pneg %p119
      %p182 = pneg %p116
      %s183 = smul.u32 9, %s19
      %p184 = scmp.lt.s32.totalorder %s18, 1
      %s185 = scalar_select %p184, %s18, 1
      %p186 = scmp.lt.s32.totalorder %s183, 8
      %s187 = scalar_select %p186, %s183, 8
      %s188 = smul.addr %s187, 2
      %s189 = smul.addr %s185, 18
      %s190 = sadd.s32 %s188, %s189
      %s191 = smul.addr %s190, 8
      %s192 = scalar_lea.vmem %s3, %s191
      %s193 = smul.u32 9, %s19
      %p194 = scmp.lt.s32.totalorder %s18, 1
      %s195 = scalar_select %p194, %s18, 1
      %p196 = scmp.lt.s32.totalorder %s193, 8
      %s197 = scalar_select %p196, %s193, 8
      %s198 = smul.addr %s197, 9
      %s199 = smul.addr %s195, 81
      %s200 = sadd.s32 %s198, %s199
      %s201 = smul.addr %s200, 8
      %s202 = scalar_lea.vmem %s0, %s201
      %s203 = smul.u32 9, %s19
      %s204 = smul.u32 9, %s19
      %p205 = scmp.lt.s32.totalorder %s18, 1
      %s206 = scalar_select %p205, %s18, 1
      %p207 = scmp.lt.s32.totalorder %s204, 8
      %s208 = scalar_select %p207, %s204, 8
      %s209 = smul.addr %s208, 2
      %s210 = smul.addr %s206, 18
      %s211 = sadd.s32 %s209, %s210
      %s212 = smul.addr %s211, 8
      %s213 = scalar_lea.vmem %s3, %s212
      %s214 = smul.u32 9, %s19
      %v215 = vld [vmem:[%s202] sm:$0xff]
      %v216 = vld [vmem:[%s202 + $0x8] sm:$0xff]
      %v217 = vld [vmem:[%s202 + $0x10] sm:$0xff]
      %v218 = vld [vmem:[%s202 + $0x18] sm:$0xff]
      %v219 = vld [vmem:[%s202 + $0x20] sm:$0xff]
      %v220 = vld [vmem:[%s202 + $0x28] sm:$0xff]
      %v221 = vld [vmem:[%s202 + $0x30] sm:$0xf]
      %v222 = vld [vmem:[%s202 + $0x38] sm:$0xf]
      %v223 = vld [vmem:[%s202 + $0x40] sm:$0xf]
      %v224 = vld [vmem:[%s202 + $0x48] sm:$0xff]
      %v225 = vld [vmem:[%s202 + $0x50] sm:$0xff]
      %v226 = vld [vmem:[%s202 + $0x58] sm:$0xff]
      %v227 = vld [vmem:[%s202 + $0x60] sm:$0xff]
      %v228 = vld [vmem:[%s202 + $0x68] sm:$0xff]
      %v229 = vld [vmem:[%s202 + $0x70] sm:$0xff]
      %v230 = vld [vmem:[%s202 + $0x78] sm:$0xf]
      %v231 = vld [vmem:[%s202 + $0x80] sm:$0xf]
      %v232 = vld [vmem:[%s202 + $0x88] sm:$0xf]
      %v233 = vld [vmem:[%s202 + $0x90] sm:$0xff]
      %v234 = vld [vmem:[%s202 + $0x98] sm:$0xff]
      %v235 = vld [vmem:[%s202 + $0xa0] sm:$0xff]
      %v236 = vld [vmem:[%s202 + $0xa8] sm:$0xff]
      %v237 = vld [vmem:[%s202 + $0xb0] sm:$0xff]
      %v238 = vld [vmem:[%s202 + $0xb8] sm:$0xff]
      %v239 = vld [vmem:[%s202 + $0xc0] sm:$0xf]
      %v240 = vld [vmem:[%s202 + $0xc8] sm:$0xf]
      %v241 = vld [vmem:[%s202 + $0xd0] sm:$0xf]
      %v242 = vld [vmem:[%s202 + $0xd8] sm:$0xff]
      %v243 = vld [vmem:[%s202 + $0xe0] sm:$0xff]
      %v244 = vld [vmem:[%s202 + $0xe8] sm:$0xff]
      %v245 = vld [vmem:[%s202 + $0xf0] sm:$0xff]
      %v246 = vld [vmem:[%s202 + $0xf8] sm:$0xff]
      %v247 = vld [vmem:[%s202 + $0x100] sm:$0xff]
      %v248 = vld [vmem:[%s202 + $0x108] sm:$0xf]
      %v249 = vld [vmem:[%s202 + $0x110] sm:$0xf]
      %v250 = vld [vmem:[%s202 + $0x118] sm:$0xf]
      %v251 = vld [vmem:[%s202 + $0x120] sm:$0xff]
      %v252 = vld [vmem:[%s202 + $0x128] sm:$0xff]
      %v253 = vld [vmem:[%s202 + $0x130] sm:$0xff]
      %v254 = vld [vmem:[%s202 + $0x138] sm:$0xff]
      %v255 = vld [vmem:[%s202 + $0x140] sm:$0xff]
      %v256 = vld [vmem:[%s202 + $0x148] sm:$0xff]
      %v257 = vld [vmem:[%s202 + $0x150] sm:$0xf]
      %v258 = vld [vmem:[%s202 + $0x158] sm:$0xf]
      %v259 = vld [vmem:[%s202 + $0x160] sm:$0xf]
      %v260 = vld [vmem:[%s202 + $0x168] sm:$0xff]
      %v261 = vld [vmem:[%s202 + $0x170] sm:$0xff]
      %v262 = vld [vmem:[%s202 + $0x178] sm:$0xff]
      %v263 = vld [vmem:[%s202 + $0x180] sm:$0xff]
      %v264 = vld [vmem:[%s202 + $0x188] sm:$0xff]
      %v265 = vld [vmem:[%s202 + $0x190] sm:$0xff]
      %v266 = vld [vmem:[%s202 + $0x198] sm:$0xf]
      %v267 = vld [vmem:[%s202 + $0x1a0] sm:$0xf]
      %v268 = vld [vmem:[%s202 + $0x1a8] sm:$0xf]
      %v269 = vld [vmem:[%s202 + $0x1b0] sm:$0xff]
      %v270 = vld [vmem:[%s202 + $0x1b8] sm:$0xff]
      %v271 = vld [vmem:[%s202 + $0x1c0] sm:$0xff]
      %v272 = vld [vmem:[%s202 + $0x1c8] sm:$0xff]
      %v273 = vld [vmem:[%s202 + $0x1d0] sm:$0xff]
      %v274 = vld [vmem:[%s202 + $0x1d8] sm:$0xff]
      %v275 = vld [vmem:[%s202 + $0x1e0] sm:$0xf]
      %v276 = vld [vmem:[%s202 + $0x1e8] sm:$0xf]
      %v277 = vld [vmem:[%s202 + $0x1f0] sm:$0xf]
      %v278 = vld [vmem:[%s202 + $0x1f8] sm:$0xff]
      %v279 = vld [vmem:[%s202 + $0x200] sm:$0xff]
      %v280 = vld [vmem:[%s202 + $0x208] sm:$0xff]
      %v281 = vld [vmem:[%s202 + $0x210] sm:$0xff]
      %v282 = vld [vmem:[%s202 + $0x218] sm:$0xff]
      %v283 = vld [vmem:[%s202 + $0x220] sm:$0xff]
      %v284 = vld [vmem:[%s202 + $0x228] sm:$0xf]
      %v285 = vld [vmem:[%s202 + $0x230] sm:$0xf]
      %v286 = vld [vmem:[%s202 + $0x238] sm:$0xf]
      %v287 = vld [vmem:[%s202 + $0x240] sm:$0xff]
      %v288 = vld [vmem:[%s202 + $0x248] sm:$0xff]
      %v289 = vld [vmem:[%s202 + $0x250] sm:$0xff]
      %v290 = vld [vmem:[%s202 + $0x258] sm:$0xff]
      %v291 = vld [vmem:[%s202 + $0x260] sm:$0xff]
      %v292 = vld [vmem:[%s202 + $0x268] sm:$0xff]
      %v293 = vld [vmem:[%s202 + $0x270] sm:$0xf]
      %v294 = vld [vmem:[%s202 + $0x278] sm:$0xf]
      %v295 = vld [vmem:[%s202 + $0x280] sm:$0xf]
      %v296 = vld [vmem:[%s1] sm:$0xff]
      %v297 = vld [vmem:[%s1 + $0x8] sm:$0xff]
      %v298 = vld [vmem:[%s1 + $0x10] sm:$0xff]
      %v299 = vld [vmem:[%s1 + $0x18] sm:$0xff]
      %v300 = vld [vmem:[%s1 + $0x20] sm:$0xff]
      %v301 = vld [vmem:[%s1 + $0x28] sm:$0xff]
      %v302 = vld [vmem:[%s1 + $0x30] sm:$0xff]
      %v303 = vld [vmem:[%s1 + $0x38] sm:$0xff]
      %v304 = vld [vmem:[%s1 + $0x40] sm:$0xff]
      %v305 = vld [vmem:[%s1 + $0x48] sm:$0xff]
      %v306 = vld [vmem:[%s1 + $0x50] sm:$0xff]
      %v307 = vld [vmem:[%s1 + $0x58] sm:$0xff]
      %v308 = vld [vmem:[%s1 + $0x60] sm:$0xff]
      %v309 = vld [vmem:[%s1 + $0x68] sm:$0xff]
      %v310 = vld [vmem:[%s1 + $0x70] sm:$0xff]
      %v311 = vld [vmem:[%s1 + $0x78] sm:$0xff]
      %v312 = vld [vmem:[%s1 + $0x80] sm:$0xff]
      %v313 = vld [vmem:[%s1 + $0x88] sm:$0xff]
      %v314 = vld [vmem:[%s1 + $0x90] sm:$0xff]
      %v315 = vld [vmem:[%s1 + $0x98] sm:$0xff]
      %v316 = vld [vmem:[%s1 + $0xa0] sm:$0xff]
      %v317 = vld [vmem:[%s1 + $0xa8] sm:$0xff]
      %v318 = vld [vmem:[%s1 + $0xb0] sm:$0xff]
      %v319 = vld [vmem:[%s1 + $0xb8] sm:$0xff]
      %v320 = vld [vmem:[%s1 + $0xc0] sm:$0xff]
      %v321 = vld [vmem:[%s1 + $0xc8] sm:$0xff]
      %v322 = vld [vmem:[%s1 + $0xd0] sm:$0xff]
      %v323 = vld [vmem:[%s1 + $0xd8] sm:$0xff]
      %v324 = vld [vmem:[%s1 + $0xe0] sm:$0xff]
      %v325 = vld [vmem:[%s1 + $0xe8] sm:$0xff]
      %v326 = vld [vmem:[%s1 + $0xf0] sm:$0xff]
      %v327 = vld [vmem:[%s1 + $0xf8] sm:$0xff]
      %v328 = vld [vmem:[%s1 + $0x100] sm:$0xff]
      %v329 = vld [vmem:[%s1 + $0x108] sm:$0xff]
      %v330 = vld [vmem:[%s1 + $0x110] sm:$0xff]
      %v331 = vld [vmem:[%s1 + $0x118] sm:$0xff]
      %v332 = vld [vmem:[%s1 + $0x120] sm:$0xff]
      %v333 = vld [vmem:[%s1 + $0x128] sm:$0xff]
      %v334 = vld [vmem:[%s1 + $0x130] sm:$0xff]
      %v335 = vld [vmem:[%s1 + $0x138] sm:$0xff]
      %vm417 = vcmask 1046528
      %v418 = vrot.slane %v215, 1
      %v419 = vrot.slane %v218, 1
      %v420 = vsel %vm417, %v418, %v419
      %v421 = vrot.slane %v216, 1
      %v422 = vrot.slane %v219, 1
      %v423 = vsel %vm417, %v421, %v422
      %v424 = vrot.slane %v217, 1
      %v425 = vrot.slane %v220, 1
      %v426 = vsel %vm417, %v424, %v425
      %v427 = vrot.slane %v221, 1
      %v428 = vsel %vm417, %v419, %v427
      %v429 = vrot.slane %v222, 1
      %v430 = vsel %vm417, %v422, %v429
      %v431 = vrot.slane %v223, 1
      %v432 = vsel %vm417, %v425, %v431
      %v433 = vrot.slane %v224, 1
      %v434 = vrot.slane %v227, 1
      %v435 = vsel %vm417, %v433, %v434
      %v436 = vrot.slane %v225, 1
      %v437 = vrot.slane %v228, 1
      %v438 = vsel %vm417, %v436, %v437
      %v439 = vrot.slane %v226, 1
      %v440 = vrot.slane %v229, 1
      %v441 = vsel %vm417, %v439, %v440
      %v442 = vrot.slane %v230, 1
      %v443 = vsel %vm417, %v434, %v442
      %v444 = vrot.slane %v231, 1
      %v445 = vsel %vm417, %v437, %v444
      %v446 = vrot.slane %v232, 1
      %v447 = vsel %vm417, %v440, %v446
      %v448 = vrot.slane %v233, 1
      %v449 = vrot.slane %v236, 1
      %v450 = vsel %vm417, %v448, %v449
      %v451 = vrot.slane %v234, 1
      %v452 = vrot.slane %v237, 1
      %v453 = vsel %vm417, %v451, %v452
      %v454 = vrot.slane %v235, 1
      %v455 = vrot.slane %v238, 1
      %v456 = vsel %vm417, %v454, %v455
      %v457 = vrot.slane %v239, 1
      %v458 = vsel %vm417, %v449, %v457
      %v459 = vrot.slane %v240, 1
      %v460 = vsel %vm417, %v452, %v459
      %v461 = vrot.slane %v241, 1
      %v462 = vsel %vm417, %v455, %v461
      %v463 = vrot.slane %v242, 1
      %v464 = vrot.slane %v245, 1
      %v465 = vsel %vm417, %v463, %v464
      %v466 = vrot.slane %v243, 1
      %v467 = vrot.slane %v246, 1
      %v468 = vsel %vm417, %v466, %v467
      %v469 = vrot.slane %v244, 1
      %v470 = vrot.slane %v247, 1
      %v471 = vsel %vm417, %v469, %v470
      %v472 = vrot.slane %v248, 1
      %v473 = vsel %vm417, %v464, %v472
      %v474 = vrot.slane %v249, 1
      %v475 = vsel %vm417, %v467, %v474
      %v476 = vrot.slane %v250, 1
      %v477 = vsel %vm417, %v470, %v476
      %v478 = vrot.slane %v251, 1
      %v479 = vrot.slane %v254, 1
      %v480 = vsel %vm417, %v478, %v479
      %v481 = vrot.slane %v252, 1
      %v482 = vrot.slane %v255, 1
      %v483 = vsel %vm417, %v481, %v482
      %v484 = vrot.slane %v253, 1
      %v485 = vrot.slane %v256, 1
      %v486 = vsel %vm417, %v484, %v485
      %v487 = vrot.slane %v257, 1
      %v488 = vsel %vm417, %v479, %v487
      %v489 = vrot.slane %v258, 1
      %v490 = vsel %vm417, %v482, %v489
      %v491 = vrot.slane %v259, 1
      %v492 = vsel %vm417, %v485, %v491
      %v493 = vrot.slane %v260, 1
      %v494 = vrot.slane %v263, 1
      %v495 = vsel %vm417, %v493, %v494
      %v496 = vrot.slane %v261, 1
      %v497 = vrot.slane %v264, 1
      %v498 = vsel %vm417, %v496, %v497
      %v499 = vrot.slane %v262, 1
      %v500 = vrot.slane %v265, 1
      %v501 = vsel %vm417, %v499, %v500
      %v502 = vrot.slane %v266, 1
      %v503 = vsel %vm417, %v494, %v502
      %v504 = vrot.slane %v267, 1
      %v505 = vsel %vm417, %v497, %v504
      %v506 = vrot.slane %v268, 1
      %v507 = vsel %vm417, %v500, %v506
      %v508 = vrot.slane %v269, 1
      %v509 = vrot.slane %v272, 1
      %v510 = vsel %vm417, %v508, %v509
      %v511 = vrot.slane %v270, 1
      %v512 = vrot.slane %v273, 1
      %v513 = vsel %vm417, %v511, %v512
      %v514 = vrot.slane %v271, 1
      %v515 = vrot.slane %v274, 1
      %v516 = vsel %vm417, %v514, %v515
      %v517 = vrot.slane %v275, 1
      %v518 = vsel %vm417, %v509, %v517
      %v519 = vrot.slane %v276, 1
      %v520 = vsel %vm417, %v512, %v519
      %v521 = vrot.slane %v277, 1
      %v522 = vsel %vm417, %v515, %v521
      %v523 = vrot.slane %v278, 1
      %v524 = vrot.slane %v281, 1
      %v525 = vsel %vm417, %v523, %v524
      %v526 = vrot.slane %v279, 1
      %v527 = vrot.slane %v282, 1
      %v528 = vsel %vm417, %v526, %v527
      %v529 = vrot.slane %v280, 1
      %v530 = vrot.slane %v283, 1
      %v531 = vsel %vm417, %v529, %v530
      %v532 = vrot.slane %v284, 1
      %v533 = vsel %vm417, %v524, %v532
      %v534 = vrot.slane %v285, 1
      %v535 = vsel %vm417, %v527, %v534
      %v536 = vrot.slane %v286, 1
      %v537 = vsel %vm417, %v530, %v536
      %v538 = vrot.slane %v287, 1
      %v539 = vrot.slane %v290, 1
      %v540 = vsel %vm417, %v538, %v539
      %v541 = vrot.slane %v288, 1
      %v542 = vrot.slane %v291, 1
      %v543 = vsel %vm417, %v541, %v542
      %v544 = vrot.slane %v289, 1
      %v545 = vrot.slane %v292, 1
      %v546 = vsel %vm417, %v544, %v545
      %v547 = vrot.slane %v293, 1
      %v548 = vsel %vm417, %v539, %v547
      %v549 = vrot.slane %v294, 1
      %v550 = vsel %vm417, %v542, %v549
      %v551 = vrot.slane %v295, 1
      %v552 = vsel %vm417, %v545, %v551
      %s589 = scalar_lea.vmem %s1, 320
      %v590 = vld [vmem:[%s589] sm:$0xff]
      %v591 = vld [vmem:[%s589 + $0x8] sm:$0xff]
      %v592 = vld [vmem:[%s589 + $0x10] sm:$0xff]
      %v593 = vld [vmem:[%s589 + $0x18] sm:$0xff]
      %v594 = vld [vmem:[%s589 + $0x20] sm:$0xff]
      %v595 = vld [vmem:[%s589 + $0x28] sm:$0xff]
      %v596 = vld [vmem:[%s589 + $0x30] sm:$0xff]
      %v597 = vld [vmem:[%s589 + $0x38] sm:$0xff]
      %v598 = vld [vmem:[%s589 + $0x40] sm:$0xff]
      %v599 = vld [vmem:[%s589 + $0x48] sm:$0xff]
      %v600 = vld [vmem:[%s589 + $0x50] sm:$0xff]
      %v601 = vld [vmem:[%s589 + $0x58] sm:$0xff]
      %v602 = vld [vmem:[%s589 + $0x60] sm:$0xff]
      %v603 = vld [vmem:[%s589 + $0x68] sm:$0xff]
      %v604 = vld [vmem:[%s589 + $0x70] sm:$0xff]
      %v605 = vld [vmem:[%s589 + $0x78] sm:$0xff]
      %v606 = vld [vmem:[%s589 + $0x80] sm:$0xff]
      %v607 = vld [vmem:[%s589 + $0x88] sm:$0xff]
      %v608 = vld [vmem:[%s589 + $0x90] sm:$0xff]
      %v609 = vld [vmem:[%s589 + $0x98] sm:$0xff]
      %v610 = vld [vmem:[%s589 + $0xa0] sm:$0xff]
      %v611 = vld [vmem:[%s589 + $0xa8] sm:$0xff]
      %v612 = vld [vmem:[%s589 + $0xb0] sm:$0xff]
      %v613 = vld [vmem:[%s589 + $0xb8] sm:$0xff]
      %v614 = vld [vmem:[%s589 + $0xc0] sm:$0xff]
      %v615 = vld [vmem:[%s589 + $0xc8] sm:$0xff]
      %v616 = vld [vmem:[%s589 + $0xd0] sm:$0xff]
      %v617 = vld [vmem:[%s589 + $0xd8] sm:$0xff]
      %v618 = vld [vmem:[%s589 + $0xe0] sm:$0xff]
      %v619 = vld [vmem:[%s589 + $0xe8] sm:$0xff]
      %v620 = vld [vmem:[%s589 + $0xf0] sm:$0xff]
      %v621 = vld [vmem:[%s589 + $0xf8] sm:$0xff]
      %v622 = vld [vmem:[%s589 + $0x100] sm:$0xff]
      %v623 = vld [vmem:[%s589 + $0x108] sm:$0xff]
      %v624 = vld [vmem:[%s589 + $0x110] sm:$0xff]
      %v625 = vld [vmem:[%s589 + $0x118] sm:$0xff]
      %v626 = vld [vmem:[%s589 + $0x120] sm:$0xff]
      %v627 = vld [vmem:[%s589 + $0x128] sm:$0xff]
      %v628 = vld [vmem:[%s589 + $0x130] sm:$0xff]
      %v629 = vld [vmem:[%s589 + $0x138] sm:$0xff]
      %vm630 = vcmask 523264
      %v631 = vsel %vm630, %v426, 0
      %v633 = vsel %vm630, %v432, 0
      %v635 = vsel %vm630, %v441, 0
      %v637 = vsel %vm630, %v447, 0
      %v639 = vsel %vm630, %v456, 0
      %v641 = vsel %vm630, %v462, 0
      %v643 = vsel %vm630, %v471, 0
      %v645 = vsel %vm630, %v477, 0
      %v647 = vsel %vm630, %v486, 0
      %v649 = vsel %vm630, %v492, 0
      %v651 = vsel %vm630, %v501, 0
      %v653 = vsel %vm630, %v507, 0
      %v655 = vsel %vm630, %v516, 0
      %v657 = vsel %vm630, %v522, 0
      %v659 = vsel %vm630, %v531, 0
      %v661 = vsel %vm630, %v537, 0
      %v663 = vsel %vm630, %v546, 0
      %v665 = vsel %vm630, %v552, 0
      %667 = vmatprep.subr.mxu0 0.0
      %668 = vmatpush1.msra.mxu0 %v590
      %669 = vmatprep.subr.mxu0 0.0
      %670 = vmatpush1.msra.mxu0 %v591
      %671 = vmatprep.subr.mxu0 0.0
      %672 = vmatpush1.msra.mxu0 %v592
      %673 = vmatprep.subr.mxu0 0.0
      %674 = vmatpush1.msra.mxu0 %v593
      %675 = vmatprep.subr.mxu0 0.0
      %676 = vmatpush1.msra.mxu0 %v594
      %677 = vmatprep.subr.mxu0 0.0
      %678 = vmatpush1.msra.mxu0 %v595
      %679 = vmatprep.subr.mxu0 0.0
      %680 = vmatpush1.msra.mxu0 %v596
      %681 = vmatprep.subr.mxu0 0.0
      %682 = vmatpush1.msra.mxu0 %v597
      %683 = vmatprep.subr.mxu0 0.0
      %684 = vmatpush1.msra.mxu0 %v598
      %685 = vmatprep.subr.mxu0 0.0
      %686 = vmatpush1.msra.mxu0 %v599
      %687 = vmatprep.subr.mxu0 0.0
      %688 = vmatpush1.msra.mxu0 %v600
      %689 = vmatprep.subr.mxu0 0.0
      %690 = vmatpush1.msra.mxu0 %v601
      %691 = vmatprep.subr.mxu0 0.0
      %692 = vmatpush1.msra.mxu0 %v602
      %693 = vmatprep.subr.mxu0 0.0
      %694 = vmatpush1.msra.mxu0 %v603
      %695 = vmatprep.subr.mxu0 0.0
      %696 = vmatpush1.msra.mxu0 %v604
      %697 = vmatprep.subr.mxu0 0.0
      %698 = vmatpush1.msra.mxu0 %v605
      %699 = vmatprep.subr.mxu0 0.0
      %700 = vmatpush1.msra.mxu0 %v606
      %701 = vmatprep.subr.mxu0 0.0
      %702 = vmatpush1.msra.mxu0 %v607
      %703 = vmatprep.subr.mxu0 0.0
      %704 = vmatpush1.msra.mxu0 %v608
      %705 = vmatprep.subr.mxu0 0.0
      %706 = vmatpush1.msra.mxu0 %v609
      %707 = vmatprep.subr.mxu0 0.0
      %708 = vmatpush1.msra.mxu0 %v610
      %709 = vmatprep.subr.mxu0 0.0
      %710 = vmatpush1.msra.mxu0 %v611
      %711 = vmatprep.subr.mxu0 0.0
      %712 = vmatpush1.msra.mxu0 %v612
      %713 = vmatprep.subr.mxu0 0.0
      %714 = vmatpush1.msra.mxu0 %v613
      %715 = vmatprep.subr.mxu0 0.0
      %716 = vmatpush1.msra.mxu0 %v614
      %717 = vmatprep.subr.mxu0 0.0
      %718 = vmatpush1.msra.mxu0 %v615
      %719 = vmatprep.subr.mxu0 0.0
      %720 = vmatpush1.msra.mxu0 %v616
      %721 = vmatprep.subr.mxu0 0.0
      %722 = vmatpush1.msra.mxu0 %v617
      %723 = vmatprep.subr.mxu0 0.0
      %724 = vmatpush1.msra.mxu0 %v618
      %725 = vmatprep.subr.mxu0 0.0
      %726 = vmatpush1.msra.mxu0 %v619
      %727 = vmatprep.subr.mxu0 0.0
      %728 = vmatpush1.msra.mxu0 %v620
      %729 = vmatprep.subr.mxu0 0.0
      %730 = vmatpush1.msra.mxu0 %v621
      %731 = vmatprep.mubr.f32.mxu0 %v423
      %732 = vmatmul.mubr.f32.gmra.mrb[0].mxu0 %v420
      %v733 = vpop.f32.mrb[0].mxu0
      %v734 = vadd.f32 0.0, %v733
      %v735 = vpop.f32.mrb[0].mxu0
      %736 = vmatprep.mubr.f32.mxu0 %v430
      %737 = vmatmul.mubr.f32.gmra.mrb[0].mxu0 %v428
      %v738 = vpop.f32.mrb[0].mxu0
      %v739 = vadd.f32 0.0, %v738
      %v740 = vpop.f32.mrb[0].mxu0
      %741 = vmatprep.mubr.f32.mxu0 %v438
      %742 = vmatmul.mubr.f32.gmra.mrb[0].mxu0 %v435
      %v743 = vpop.f32.mrb[0].mxu0
      %v744 = vadd.f32 0.0, %v743
      %v745 = vpop.f32.mrb[0].mxu0
      %746 = vmatprep.mubr.f32.mxu0 %v445
      %747 = vmatmul.mubr.f32.gmra.mrb[0].mxu0 %v443
      %v748 = vpop.f32.mrb[0].mxu0
      %v749 = vadd.f32 0.0, %v748
      %v750 = vpop.f32.mrb[0].mxu0
      %751 = vmatprep.mubr.f32.mxu0 %v453
      %752 = vmatmul.mubr.f32.gmra.mrb[0].mxu0 %v450
      %v753 = vpop.f32.mrb[0].mxu0
      %v754 = vadd.f32 0.0, %v753
      %v755 = vpop.f32.mrb[0].mxu0
      %756 = vmatprep.mubr.f32.mxu0 %v460
      %757 = vmatmul.mubr.f32.gmra.mrb[0].mxu0 %v458
      %v758 = vpop.f32.mrb[0].mxu0
      %v759 = vadd.f32 0.0, %v758
      %v760 = vpop.f32.mrb[0].mxu0
      %761 = vmatprep.mubr.f32.mxu0 %v468
      %762 = vmatmul.mubr.f32.gmra.mrb[0].mxu0 %v465
      %v763 = vpop.f32.mrb[0].mxu0
      %v764 = vadd.f32 0.0, %v763
      %v765 = vpop.f32.mrb[0].mxu0
      %766 = vmatprep.mubr.f32.mxu0 %v475
      %767 = vmatmul.mubr.f32.gmra.mrb[0].mxu0 %v473
      %v768 = vpop.f32.mrb[0].mxu0
      %v769 = vadd.f32 0.0, %v768
      %v770 = vpop.f32.mrb[0].mxu0
      %771 = vmatprep.mubr.f32.mxu0 %v483
      %772 = vmatmul.mubr.f32.gmra.mrb[0].mxu0 %v480
      %v773 = vpop.f32.mrb[0].mxu0
      %v774 = vadd.f32 0.0, %v773
      %v775 = vpop.f32.mrb[0].mxu0
      %776 = vmatprep.mubr.f32.mxu0 %v490
      %777 = vmatmul.mubr.f32.gmra.mrb[0].mxu0 %v488
      %v778 = vpop.f32.mrb[0].mxu0
      %v779 = vadd.f32 0.0, %v778
      %v780 = vpop.f32.mrb[0].mxu0
      %781 = vmatprep.mubr.f32.mxu0 %v498
      %782 = vmatmul.mubr.f32.gmra.mrb[0].mxu0 %v495
      %v783 = vpop.f32.mrb[0].mxu0
      %v784 = vadd.f32 0.0, %v783
      %v785 = vpop.f32.mrb[0].mxu0
      %786 = vmatprep.mubr.f32.mxu0 %v505
      %787 = vmatmul.mubr.f32.gmra.mrb[0].mxu0 %v503
      %v788 = vpop.f32.mrb[0].mxu0
      %v789 = vadd.f32 0.0, %v788
      %v790 = vpop.f32.mrb[0].mxu0
      %791 = vmatprep.mubr.f32.mxu0 %v513
      %792 = vmatmul.mubr.f32.gmra.mrb[0].mxu0 %v510
      %v793 = vpop.f32.mrb[0].mxu0
      %v794 = vadd.f32 0.0, %v793
      %v795 = vpop.f32.mrb[0].mxu0
      %796 = vmatprep.mubr.f32.mxu0 %v520
      %797 = vmatmul.mubr.f32.gmra.mrb[0].mxu0 %v518
      %v798 = vpop.f32.mrb[0].mxu0
      %v799 = vadd.f32 0.0, %v798
      %v800 = vpop.f32.mrb[0].mxu0
      %801 = vmatprep.mubr.f32.mxu0 %v528
      %802 = vmatmul.mubr.f32.gmra.mrb[0].mxu0 %v525
      %v803 = vpop.f32.mrb[0].mxu0
      %v804 = vadd.f32 0.0, %v803
      %v805 = vpop.f32.mrb[0].mxu0
      %806 = vmatprep.mubr.f32.mxu0 %v535
      %807 = vmatmul.mubr.f32.gmra.mrb[0].mxu0 %v533
      %v808 = vpop.f32.mrb[0].mxu0
      %v809 = vadd.f32 0.0, %v808
      %v810 = vpop.f32.mrb[0].mxu0
      %811 = vmatprep.mubr.f32.mxu0 %v543
      %812 = vmatmul.mubr.f32.gmra.mrb[0].mxu0 %v540
      %v813 = vpop.f32.mrb[0].mxu0
      %v814 = vadd.f32 0.0, %v813
      %v815 = vpop.f32.mrb[0].mxu0
      %816 = vmatprep.mubr.f32.mxu0 %v550
      %817 = vmatmul.mubr.f32.gmra.mrb[0].mxu0 %v548
      %v818 = vpop.f32.mrb[0].mxu0
      %v819 = vadd.f32 0.0, %v818
      %v820 = vpop.f32.mrb[0].mxu0
      %821 = vdwg.mxu0
      %822 = vmatprep.subr.mxu0 0.0
      %823 = vmatpush1.msra.mxu0 %v622
      %824 = vmatprep.subr.mxu0 0.0
      %825 = vmatpush1.msra.mxu0 %v623
      %826 = vmatprep.subr.mxu0 0.0
      %827 = vmatpush1.msra.mxu0 %v624
      %828 = vmatprep.subr.mxu0 0.0
      %829 = vmatpush1.msra.mxu0 %v625
      %830 = vmatprep.subr.mxu0 0.0
      %831 = vmatpush1.msra.mxu0 %v626
      %832 = vmatprep.subr.mxu0 0.0
      %833 = vmatpush1.msra.mxu0 %v627
      %834 = vmatprep.subr.mxu0 0.0
      %835 = vmatpush1.msra.mxu0 %v628
      %836 = vmatprep.subr.mxu0 0.0
      %837 = vmatpush1.msra.mxu0 %v629
      %838 = vmatprep.subr.mxu0 0.0
      %839 = vmatpush1.msra.mxu0 0.0
      %840 = vmatprep.subr.mxu0 0.0
      %841 = vmatpush1.msra.mxu0 0.0
      %842 = vmatprep.subr.mxu0 0.0
      %843 = vmatpush1.msra.mxu0 0.0
      %844 = vmatprep.subr.mxu0 0.0
      %845 = vmatpush1.msra.mxu0 0.0
      %846 = vmatprep.subr.mxu0 0.0
      %847 = vmatpush1.msra.mxu0 0.0
      %848 = vmatprep.subr.mxu0 0.0
      %849 = vmatpush1.msra.mxu0 0.0
      %850 = vmatprep.subr.mxu0 0.0
      %851 = vmatpush1.msra.mxu0 0.0
      %852 = vmatprep.subr.mxu0 0.0
      %853 = vmatpush1.msra.mxu0 0.0
      %854 = vmatprep.subr.mxu0 0.0
      %855 = vmatpush1.msra.mxu0 0.0
      %856 = vmatprep.subr.mxu0 0.0
      %857 = vmatpush1.msra.mxu0 0.0
      %858 = vmatprep.subr.mxu0 0.0
      %859 = vmatpush1.msra.mxu0 0.0
      %860 = vmatprep.subr.mxu0 0.0
      %861 = vmatpush1.msra.mxu0 0.0
      %862 = vmatprep.subr.mxu0 0.0
      %863 = vmatpush1.msra.mxu0 0.0
      %864 = vmatprep.subr.mxu0 0.0
      %865 = vmatpush1.msra.mxu0 0.0
      %866 = vmatprep.subr.mxu0 0.0
      %867 = vmatpush1.msra.mxu0 0.0
      %868 = vmatprep.subr.mxu0 0.0
      %869 = vmatpush1.msra.mxu0 0.0
      %870 = vmatprep.subr.mxu0 0.0
      %871 = vmatpush1.msra.mxu0 0.0
      %872 = vmatprep.subr.mxu0 0.0
      %873 = vmatpush1.msra.mxu0 0.0
      %874 = vmatprep.subr.mxu0 0.0
      %875 = vmatpush1.msra.mxu0 0.0
      %876 = vmatprep.subr.mxu0 0.0
      %877 = vmatpush1.msra.mxu0 0.0
      %878 = vmatprep.subr.mxu0 0.0
      %879 = vmatpush1.msra.mxu0 0.0
      %880 = vmatprep.subr.mxu0 0.0
      %881 = vmatpush1.msra.mxu0 0.0
      %882 = vmatprep.subr.mxu0 0.0
      %883 = vmatpush1.msra.mxu0 0.0
      %884 = vmatprep.subr.mxu0 0.0
      %885 = vmatpush1.msra.mxu0 0.0
      %886 = vmatprep.mubr.f32.mxu0 0.0
      %887 = vmatmul.mubr.f32.gmra.mrb[0].mxu0 %v631
      %v888 = vpop.f32.mrb[0].mxu0
      %v889 = vadd.f32 %v734, %v888
      %v890 = vpop.f32.mrb[0].mxu0
      %891 = vmatprep.mubr.f32.mxu0 0.0
      %892 = vmatmul.mubr.f32.gmra.mrb[0].mxu0 %v633
      %v893 = vpop.f32.mrb[0].mxu0
      %v894 = vadd.f32 %v739, %v893
      %v895 = vpop.f32.mrb[0].mxu0
      %896 = vmatprep.mubr.f32.mxu0 0.0
      %897 = vmatmul.mubr.f32.gmra.mrb[0].mxu0 %v635
      %v898 = vpop.f32.mrb[0].mxu0
      %v899 = vadd.f32 %v744, %v898
      %v900 = vpop.f32.mrb[0].mxu0
      %901 = vmatprep.mubr.f32.mxu0 0.0
      %902 = vmatmul.mubr.f32.gmra.mrb[0].mxu0 %v637
      %v903 = vpop.f32.mrb[0].mxu0
      %v904 = vadd.f32 %v749, %v903
      %v905 = vpop.f32.mrb[0].mxu0
      %906 = vmatprep.mubr.f32.mxu0 0.0
      %907 = vmatmul.mubr.f32.gmra.mrb[0].mxu0 %v639
      %v908 = vpop.f32.mrb[0].mxu0
      %v909 = vadd.f32 %v754, %v908
      %v910 = vpop.f32.mrb[0].mxu0
      %911 = vmatprep.mubr.f32.mxu0 0.0
      %912 = vmatmul.mubr.f32.gmra.mrb[0].mxu0 %v641
      %v913 = vpop.f32.mrb[0].mxu0
      %v914 = vadd.f32 %v759, %v913
      %v915 = vpop.f32.mrb[0].mxu0
      %916 = vmatprep.mubr.f32.mxu0 0.0
      %917 = vmatmul.mubr.f32.gmra.mrb[0].mxu0 %v643
      %v918 = vpop.f32.mrb[0].mxu0
      %v919 = vadd.f32 %v764, %v918
      %v920 = vpop.f32.mrb[0].mxu0
      %921 = vmatprep.mubr.f32.mxu0 0.0
      %922 = vmatmul.mubr.f32.gmra.mrb[0].mxu0 %v645
      %v923 = vpop.f32.mrb[0].mxu0
      %v924 = vadd.f32 %v769, %v923
      %v925 = vpop.f32.mrb[0].mxu0
      %926 = vmatprep.mubr.f32.mxu0 0.0
      %927 = vmatmul.mubr.f32.gmra.mrb[0].mxu0 %v647
      %v928 = vpop.f32.mrb[0].mxu0
      %v929 = vadd.f32 %v774, %v928
      %v930 = vpop.f32.mrb[0].mxu0
      %931 = vmatprep.mubr.f32.mxu0 0.0
      %932 = vmatmul.mubr.f32.gmra.mrb[0].mxu0 %v649
      %v933 = vpop.f32.mrb[0].mxu0
      %v934 = vadd.f32 %v779, %v933
      %v935 = vpop.f32.mrb[0].mxu0
      %936 = vmatprep.mubr.f32.mxu0 0.0
      %937 = vmatmul.mubr.f32.gmra.mrb[0].mxu0 %v651
      %v938 = vpop.f32.mrb[0].mxu0
      %v939 = vadd.f32 %v784, %v938
      %v940 = vpop.f32.mrb[0].mxu0
      %941 = vmatprep.mubr.f32.mxu0 0.0
      %942 = vmatmul.mubr.f32.gmra.mrb[0].mxu0 %v653
      %v943 = vpop.f32.mrb[0].mxu0
      %v944 = vadd.f32 %v789, %v943
      %v945 = vpop.f32.mrb[0].mxu0
      %946 = vmatprep.mubr.f32.mxu0 0.0
      %947 = vmatmul.mubr.f32.gmra.mrb[0].mxu0 %v655
      %v948 = vpop.f32.mrb[0].mxu0
      %v949 = vadd.f32 %v794, %v948
      %v950 = vpop.f32.mrb[0].mxu0
      %951 = vmatprep.mubr.f32.mxu0 0.0
      %952 = vmatmul.mubr.f32.gmra.mrb[0].mxu0 %v657
      %v953 = vpop.f32.mrb[0].mxu0
      %v954 = vadd.f32 %v799, %v953
      %v955 = vpop.f32.mrb[0].mxu0
      %956 = vmatprep.mubr.f32.mxu0 0.0
      %957 = vmatmul.mubr.f32.gmra.mrb[0].mxu0 %v659
      %v958 = vpop.f32.mrb[0].mxu0
      %v959 = vadd.f32 %v804, %v958
      %v960 = vpop.f32.mrb[0].mxu0
      %961 = vmatprep.mubr.f32.mxu0 0.0
      %962 = vmatmul.mubr.f32.gmra.mrb[0].mxu0 %v661
      %v963 = vpop.f32.mrb[0].mxu0
      %v964 = vadd.f32 %v809, %v963
      %v965 = vpop.f32.mrb[0].mxu0
      %966 = vmatprep.mubr.f32.mxu0 0.0
      %967 = vmatmul.mubr.f32.gmra.mrb[0].mxu0 %v663
      %v968 = vpop.f32.mrb[0].mxu0
      %v969 = vadd.f32 %v814, %v968
      %v970 = vpop.f32.mrb[0].mxu0
      %971 = vmatprep.mubr.f32.mxu0 0.0
      %972 = vmatmul.mubr.f32.gmra.mrb[0].mxu0 %v665
      %v973 = vpop.f32.mrb[0].mxu0
      %v974 = vadd.f32 %v819, %v973
      %v975 = vpop.f32.mrb[0].mxu0
      %976 = vdwg.mxu0
      %v977 = vsel %vm630, %v217, 0
      %v979 = vsel %vm630, %v220, 0
      %v981 = vsel %vm630, %v226, 0
      %v983 = vsel %vm630, %v229, 0
      %v985 = vsel %vm630, %v235, 0
      %v987 = vsel %vm630, %v238, 0
      %v989 = vsel %vm630, %v244, 0
      %v991 = vsel %vm630, %v247, 0
      %v993 = vsel %vm630, %v253, 0
      %v995 = vsel %vm630, %v256, 0
      %v997 = vsel %vm630, %v262, 0
      %v999 = vsel %vm630, %v265, 0
      %v1001 = vsel %vm630, %v271, 0
      %v1003 = vsel %vm630, %v274, 0
      %v1005 = vsel %vm630, %v280, 0
      %v1007 = vsel %vm630, %v283, 0
      %v1009 = vsel %vm630, %v289, 0
      %v1011 = vsel %vm630, %v292, 0
      %1013 = vmatprep.subr.mxu0 0.0
      %1014 = vmatpush1.msra.mxu0 %v296
      %1015 = vmatprep.subr.mxu0 0.0
      %1016 = vmatpush1.msra.mxu0 %v297
      %1017 = vmatprep.subr.mxu0 0.0
      %1018 = vmatpush1.msra.mxu0 %v298
      %1019 = vmatprep.subr.mxu0 0.0
      %1020 = vmatpush1.msra.mxu0 %v299
      %1021 = vmatprep.subr.mxu0 0.0
      %1022 = vmatpush1.msra.mxu0 %v300
      %1023 = vmatprep.subr.mxu0 0.0
      %1024 = vmatpush1.msra.mxu0 %v301
      %1025 = vmatprep.subr.mxu0 0.0
      %1026 = vmatpush1.msra.mxu0 %v302
      %1027 = vmatprep.subr.mxu0 0.0
      %1028 = vmatpush1.msra.mxu0 %v303
      %1029 = vmatprep.subr.mxu0 0.0
      %1030 = vmatpush1.msra.mxu0 %v304
      %1031 = vmatprep.subr.mxu0 0.0
      %1032 = vmatpush1.msra.mxu0 %v305
      %1033 = vmatprep.subr.mxu0 0.0
      %1034 = vmatpush1.msra.mxu0 %v306
      %1035 = vmatprep.subr.mxu0 0.0
      %1036 = vmatpush1.msra.mxu0 %v307
      %1037 = vmatprep.subr.mxu0 0.0
      %1038 = vmatpush1.msra.mxu0 %v308
      %1039 = vmatprep.subr.mxu0 0.0
      %1040 = vmatpush1.msra.mxu0 %v309
      %1041 = vmatprep.subr.mxu0 0.0
      %1042 = vmatpush1.msra.mxu0 %v310
      %1043 = vmatprep.subr.mxu0 0.0
      %1044 = vmatpush1.msra.mxu0 %v311
      %1045 = vmatprep.subr.mxu0 0.0
      %1046 = vmatpush1.msra.mxu0 %v312
      %1047 = vmatprep.subr.mxu0 0.0
      %1048 = vmatpush1.msra.mxu0 %v313
      %1049 = vmatprep.subr.mxu0 0.0
      %1050 = vmatpush1.msra.mxu0 %v314
      %1051 = vmatprep.subr.mxu0 0.0
      %1052 = vmatpush1.msra.mxu0 %v315
      %1053 = vmatprep.subr.mxu0 0.0
      %1054 = vmatpush1.msra.mxu0 %v316
      %1055 = vmatprep.subr.mxu0 0.0
      %1056 = vmatpush1.msra.mxu0 %v317
      %1057 = vmatprep.subr.mxu0 0.0
      %1058 = vmatpush1.msra.mxu0 %v318
      %1059 = vmatprep.subr.mxu0 0.0
      %1060 = vmatpush1.msra.mxu0 %v319
      %1061 = vmatprep.subr.mxu0 0.0
      %1062 = vmatpush1.msra.mxu0 %v320
      %1063 = vmatprep.subr.mxu0 0.0
      %1064 = vmatpush1.msra.mxu0 %v321
      %1065 = vmatprep.subr.mxu0 0.0
      %1066 = vmatpush1.msra.mxu0 %v322
      %1067 = vmatprep.subr.mxu0 0.0
      %1068 = vmatpush1.msra.mxu0 %v323
      %1069 = vmatprep.subr.mxu0 0.0
      %1070 = vmatpush1.msra.mxu0 %v324
      %1071 = vmatprep.subr.mxu0 0.0
      %1072 = vmatpush1.msra.mxu0 %v325
      %1073 = vmatprep.subr.mxu0 0.0
      %1074 = vmatpush1.msra.mxu0 %v326
      %1075 = vmatprep.subr.mxu0 0.0
      %1076 = vmatpush1.msra.mxu0 %v327
      %1077 = vmatprep.mubr.f32.mxu0 %v216
      %1078 = vmatmul.mubr.f32.gmra.mrb[0].mxu0 %v215
      %v1079 = vpop.f32.mrb[0].mxu0
      %v1080 = vadd.f32 %v889, %v1079
      %v1081 = vpop.f32.mrb[0].mxu0
      %1082 = vmatprep.mubr.f32.mxu0 %v219
      %1083 = vmatmul.mubr.f32.gmra.mrb[0].mxu0 %v218
      %v1084 = vpop.f32.mrb[0].mxu0
      %v1085 = vadd.f32 %v894, %v1084
      %v1086 = vpop.f32.mrb[0].mxu0
      %1087 = vmatprep.mubr.f32.mxu0 %v225
      %1088 = vmatmul.mubr.f32.gmra.mrb[0].mxu0 %v224
      %v1089 = vpop.f32.mrb[0].mxu0
      %v1090 = vadd.f32 %v899, %v1089
      %v1091 = vpop.f32.mrb[0].mxu0
      %1092 = vmatprep.mubr.f32.mxu0 %v228
      %1093 = vmatmul.mubr.f32.gmra.mrb[0].mxu0 %v227
      %v1094 = vpop.f32.mrb[0].mxu0
      %v1095 = vadd.f32 %v904, %v1094
      %v1096 = vpop.f32.mrb[0].mxu0
      %1097 = vmatprep.mubr.f32.mxu0 %v234
      %1098 = vmatmul.mubr.f32.gmra.mrb[0].mxu0 %v233
      %v1099 = vpop.f32.mrb[0].mxu0
      %v1100 = vadd.f32 %v909, %v1099
      %v1101 = vpop.f32.mrb[0].mxu0
      %1102 = vmatprep.mubr.f32.mxu0 %v237
      %1103 = vmatmul.mubr.f32.gmra.mrb[0].mxu0 %v236
      %v1104 = vpop.f32.mrb[0].mxu0
      %v1105 = vadd.f32 %v914, %v1104
      %v1106 = vpop.f32.mrb[0].mxu0
      %1107 = vmatprep.mubr.f32.mxu0 %v243
      %1108 = vmatmul.mubr.f32.gmra.mrb[0].mxu0 %v242
      %v1109 = vpop.f32.mrb[0].mxu0
      %v1110 = vadd.f32 %v919, %v1109
      %v1111 = vpop.f32.mrb[0].mxu0
      %1112 = vmatprep.mubr.f32.mxu0 %v246
      %1113 = vmatmul.mubr.f32.gmra.mrb[0].mxu0 %v245
      %v1114 = vpop.f32.mrb[0].mxu0
      %v1115 = vadd.f32 %v924, %v1114
      %v1116 = vpop.f32.mrb[0].mxu0
      %1117 = vmatprep.mubr.f32.mxu0 %v252
      %1118 = vmatmul.mubr.f32.gmra.mrb[0].mxu0 %v251
      %v1119 = vpop.f32.mrb[0].mxu0
      %v1120 = vadd.f32 %v929, %v1119
      %v1121 = vpop.f32.mrb[0].mxu0
      %1122 = vmatprep.mubr.f32.mxu0 %v255
      %1123 = vmatmul.mubr.f32.gmra.mrb[0].mxu0 %v254
      %v1124 = vpop.f32.mrb[0].mxu0
      %v1125 = vadd.f32 %v934, %v1124
      %v1126 = vpop.f32.mrb[0].mxu0
      %1127 = vmatprep.mubr.f32.mxu0 %v261
      %1128 = vmatmul.mubr.f32.gmra.mrb[0].mxu0 %v260
      %v1129 = vpop.f32.mrb[0].mxu0
      %v1130 = vadd.f32 %v939, %v1129
      %v1131 = vpop.f32.mrb[0].mxu0
      %1132 = vmatprep.mubr.f32.mxu0 %v264
      %1133 = vmatmul.mubr.f32.gmra.mrb[0].mxu0 %v263
      %v1134 = vpop.f32.mrb[0].mxu0
      %v1135 = vadd.f32 %v944, %v1134
      %v1136 = vpop.f32.mrb[0].mxu0
      %1137 = vmatprep.mubr.f32.mxu0 %v270
      %1138 = vmatmul.mubr.f32.gmra.mrb[0].mxu0 %v269
      %v1139 = vpop.f32.mrb[0].mxu0
      %v1140 = vadd.f32 %v949, %v1139
      %v1141 = vpop.f32.mrb[0].mxu0
      %1142 = vmatprep.mubr.f32.mxu0 %v273
      %1143 = vmatmul.mubr.f32.gmra.mrb[0].mxu0 %v272
      %v1144 = vpop.f32.mrb[0].mxu0
      %v1145 = vadd.f32 %v954, %v1144
      %v1146 = vpop.f32.mrb[0].mxu0
      %1147 = vmatprep.mubr.f32.mxu0 %v279
      %1148 = vmatmul.mubr.f32.gmra.mrb[0].mxu0 %v278
      %v1149 = vpop.f32.mrb[0].mxu0
      %v1150 = vadd.f32 %v959, %v1149
      %v1151 = vpop.f32.mrb[0].mxu0
      %1152 = vmatprep.mubr.f32.mxu0 %v282
      %1153 = vmatmul.mubr.f32.gmra.mrb[0].mxu0 %v281
      %v1154 = vpop.f32.mrb[0].mxu0
      %v1155 = vadd.f32 %v964, %v1154
      %v1156 = vpop.f32.mrb[0].mxu0
      %1157 = vmatprep.mubr.f32.mxu0 %v288
      %1158 = vmatmul.mubr.f32.gmra.mrb[0].mxu0 %v287
      %v1159 = vpop.f32.mrb[0].mxu0
      %v1160 = vadd.f32 %v969, %v1159
      %v1161 = vpop.f32.mrb[0].mxu0
      %1162 = vmatprep.mubr.f32.mxu0 %v291
      %1163 = vmatmul.mubr.f32.gmra.mrb[0].mxu0 %v290
      %v1164 = vpop.f32.mrb[0].mxu0
      %v1165 = vadd.f32 %v974, %v1164
      %v1166 = vpop.f32.mrb[0].mxu0
      %1167 = vdwg.mxu0
      %1168 = vmatprep.subr.mxu0 0.0
      %1169 = vmatpush1.msra.mxu0 %v328
      %1170 = vmatprep.subr.mxu0 0.0
      %1171 = vmatpush1.msra.mxu0 %v329
      %1172 = vmatprep.subr.mxu0 0.0
      %1173 = vmatpush1.msra.mxu0 %v330
      %1174 = vmatprep.subr.mxu0 0.0
      %1175 = vmatpush1.msra.mxu0 %v331
      %1176 = vmatprep.subr.mxu0 0.0
      %1177 = vmatpush1.msra.mxu0 %v332
      %1178 = vmatprep.subr.mxu0 0.0
      %1179 = vmatpush1.msra.mxu0 %v333
      %1180 = vmatprep.subr.mxu0 0.0
      %1181 = vmatpush1.msra.mxu0 %v334
      %1182 = vmatprep.subr.mxu0 0.0
      %1183 = vmatpush1.msra.mxu0 %v335
      %1184 = vmatprep.subr.mxu0 0.0
      %1185 = vmatpush1.msra.mxu0 0.0
      %1186 = vmatprep.subr.mxu0 0.0
      %1187 = vmatpush1.msra.mxu0 0.0
      %1188 = vmatprep.subr.mxu0 0.0
      %1189 = vmatpush1.msra.mxu0 0.0
      %1190 = vmatprep.subr.mxu0 0.0
      %1191 = vmatpush1.msra.mxu0 0.0
      %1192 = vmatprep.subr.mxu0 0.0
      %1193 = vmatpush1.msra.mxu0 0.0
      %1194 = vmatprep.subr.mxu0 0.0
      %1195 = vmatpush1.msra.mxu0 0.0
      %1196 = vmatprep.subr.mxu0 0.0
      %1197 = vmatpush1.msra.mxu0 0.0
      %1198 = vmatprep.subr.mxu0 0.0
      %1199 = vmatpush1.msra.mxu0 0.0
      %1200 = vmatprep.subr.mxu0 0.0
      %1201 = vmatpush1.msra.mxu0 0.0
      %1202 = vmatprep.subr.mxu0 0.0
      %1203 = vmatpush1.msra.mxu0 0.0
      %1204 = vmatprep.subr.mxu0 0.0
      %1205 = vmatpush1.msra.mxu0 0.0
      %1206 = vmatprep.subr.mxu0 0.0
      %1207 = vmatpush1.msra.mxu0 0.0
      %1208 = vmatprep.subr.mxu0 0.0
      %1209 = vmatpush1.msra.mxu0 0.0
      %1210 = vmatprep.subr.mxu0 0.0
      %1211 = vmatpush1.msra.mxu0 0.0
      %1212 = vmatprep.subr.mxu0 0.0
      %1213 = vmatpush1.msra.mxu0 0.0
      %1214 = vmatprep.subr.mxu0 0.0
      %1215 = vmatpush1.msra.mxu0 0.0
      %1216 = vmatprep.subr.mxu0 0.0
      %1217 = vmatpush1.msra.mxu0 0.0
      %1218 = vmatprep.subr.mxu0 0.0
      %1219 = vmatpush1.msra.mxu0 0.0
      %1220 = vmatprep.subr.mxu0 0.0
      %1221 = vmatpush1.msra.mxu0 0.0
      %1222 = vmatprep.subr.mxu0 0.0
      %1223 = vmatpush1.msra.mxu0 0.0
      %1224 = vmatprep.subr.mxu0 0.0
      %1225 = vmatpush1.msra.mxu0 0.0
      %1226 = vmatprep.subr.mxu0 0.0
      %1227 = vmatpush1.msra.mxu0 0.0
      %1228 = vmatprep.subr.mxu0 0.0
      %1229 = vmatpush1.msra.mxu0 0.0
      %1230 = vmatprep.subr.mxu0 0.0
      %1231 = vmatpush1.msra.mxu0 0.0
      %1232 = vmatprep.mubr.f32.mxu0 0.0
      %1233 = vmatmul.mubr.f32.gmra.mrb[0].mxu0 %v977
      %v1234 = vpop.f32.mrb[0].mxu0
      %v1235 = vadd.f32 %v1080, %v1234
      %v1236 = vpop.f32.mrb[0].mxu0
      %1237 = vmatprep.mubr.f32.mxu0 0.0
      %1238 = vmatmul.mubr.f32.gmra.mrb[0].mxu0 %v979
      %v1239 = vpop.f32.mrb[0].mxu0
      %v1240 = vadd.f32 %v1085, %v1239
      %v1241 = vpop.f32.mrb[0].mxu0
      %1242 = vmatprep.mubr.f32.mxu0 0.0
      %1243 = vmatmul.mubr.f32.gmra.mrb[0].mxu0 %v981
      %v1244 = vpop.f32.mrb[0].mxu0
      %v1245 = vadd.f32 %v1090, %v1244
      %v1246 = vpop.f32.mrb[0].mxu0
      %1247 = vmatprep.mubr.f32.mxu0 0.0
      %1248 = vmatmul.mubr.f32.gmra.mrb[0].mxu0 %v983
      %v1249 = vpop.f32.mrb[0].mxu0
      %v1250 = vadd.f32 %v1095, %v1249
      %v1251 = vpop.f32.mrb[0].mxu0
      %1252 = vmatprep.mubr.f32.mxu0 0.0
      %1253 = vmatmul.mubr.f32.gmra.mrb[0].mxu0 %v985
      %v1254 = vpop.f32.mrb[0].mxu0
      %v1255 = vadd.f32 %v1100, %v1254
      %v1256 = vpop.f32.mrb[0].mxu0
      %1257 = vmatprep.mubr.f32.mxu0 0.0
      %1258 = vmatmul.mubr.f32.gmra.mrb[0].mxu0 %v987
      %v1259 = vpop.f32.mrb[0].mxu0
      %v1260 = vadd.f32 %v1105, %v1259
      %v1261 = vpop.f32.mrb[0].mxu0
      %1262 = vmatprep.mubr.f32.mxu0 0.0
      %1263 = vmatmul.mubr.f32.gmra.mrb[0].mxu0 %v989
      %v1264 = vpop.f32.mrb[0].mxu0
      %v1265 = vadd.f32 %v1110, %v1264
      %v1266 = vpop.f32.mrb[0].mxu0
      %1267 = vmatprep.mubr.f32.mxu0 0.0
      %1268 = vmatmul.mubr.f32.gmra.mrb[0].mxu0 %v991
      %v1269 = vpop.f32.mrb[0].mxu0
      %v1270 = vadd.f32 %v1115, %v1269
      %v1271 = vpop.f32.mrb[0].mxu0
      %1272 = vmatprep.mubr.f32.mxu0 0.0
      %1273 = vmatmul.mubr.f32.gmra.mrb[0].mxu0 %v993
      %v1274 = vpop.f32.mrb[0].mxu0
      %v1275 = vadd.f32 %v1120, %v1274
      %v1276 = vpop.f32.mrb[0].mxu0
      %1277 = vmatprep.mubr.f32.mxu0 0.0
      %1278 = vmatmul.mubr.f32.gmra.mrb[0].mxu0 %v995
      %v1279 = vpop.f32.mrb[0].mxu0
      %v1280 = vadd.f32 %v1125, %v1279
      %v1281 = vpop.f32.mrb[0].mxu0
      %1282 = vmatprep.mubr.f32.mxu0 0.0
      %1283 = vmatmul.mubr.f32.gmra.mrb[0].mxu0 %v997
      %v1284 = vpop.f32.mrb[0].mxu0
      %v1285 = vadd.f32 %v1130, %v1284
      %v1286 = vpop.f32.mrb[0].mxu0
      %1287 = vmatprep.mubr.f32.mxu0 0.0
      %1288 = vmatmul.mubr.f32.gmra.mrb[0].mxu0 %v999
      %v1289 = vpop.f32.mrb[0].mxu0
      %v1290 = vadd.f32 %v1135, %v1289
      %v1291 = vpop.f32.mrb[0].mxu0
      %1292 = vmatprep.mubr.f32.mxu0 0.0
      %1293 = vmatmul.mubr.f32.gmra.mrb[0].mxu0 %v1001
      %v1294 = vpop.f32.mrb[0].mxu0
      %v1295 = vadd.f32 %v1140, %v1294
      %v1296 = vpop.f32.mrb[0].mxu0
      %1297 = vmatprep.mubr.f32.mxu0 0.0
      %1298 = vmatmul.mubr.f32.gmra.mrb[0].mxu0 %v1003
      %v1299 = vpop.f32.mrb[0].mxu0
      %v1300 = vadd.f32 %v1145, %v1299
      %v1301 = vpop.f32.mrb[0].mxu0
      %1302 = vmatprep.mubr.f32.mxu0 0.0
      %1303 = vmatmul.mubr.f32.gmra.mrb[0].mxu0 %v1005
      %v1304 = vpop.f32.mrb[0].mxu0
      %v1305 = vadd.f32 %v1150, %v1304
      %v1306 = vpop.f32.mrb[0].mxu0
      %1307 = vmatprep.mubr.f32.mxu0 0.0
      %1308 = vmatmul.mubr.f32.gmra.mrb[0].mxu0 %v1007
      %v1309 = vpop.f32.mrb[0].mxu0
      %v1310 = vadd.f32 %v1155, %v1309
      %v1311 = vpop.f32.mrb[0].mxu0
      %1312 = vmatprep.mubr.f32.mxu0 0.0
      %1313 = vmatmul.mubr.f32.gmra.mrb[0].mxu0 %v1009
      %v1314 = vpop.f32.mrb[0].mxu0
      %v1315 = vadd.f32 %v1160, %v1314
      %v1316 = vpop.f32.mrb[0].mxu0
      %1317 = vmatprep.mubr.f32.mxu0 0.0
      %1318 = vmatmul.mubr.f32.gmra.mrb[0].mxu0 %v1011
      %v1319 = vpop.f32.mrb[0].mxu0
      %v1320 = vadd.f32 %v1165, %v1319
      %v1321 = vpop.f32.mrb[0].mxu0
      %1322 = vdwg.mxu0
      %vm1323 = vcmask 1045504
      %v1324 = vrot.slane %v215, 2
      %v1325 = vrot.slane %v218, 2
      %v1326 = vsel %vm1323, %v1324, %v1325
      %v1327 = vrot.slane %v216, 2
      %v1328 = vrot.slane %v219, 2
      %v1329 = vsel %vm1323, %v1327, %v1328
      %v1330 = vrot.slane %v217, 2
      %v1331 = vrot.slane %v220, 2
      %v1332 = vsel %vm1323, %v1330, %v1331
      %v1333 = vrot.slane %v221, 2
      %v1334 = vsel %vm1323, %v1325, %v1333
      %v1335 = vrot.slane %v222, 2
      %v1336 = vsel %vm1323, %v1328, %v1335
      %v1337 = vrot.slane %v223, 2
      %v1338 = vsel %vm1323, %v1331, %v1337
      %v1339 = vrot.slane %v224, 2
      %v1340 = vrot.slane %v227, 2
      %v1341 = vsel %vm1323, %v1339, %v1340
      %v1342 = vrot.slane %v225, 2
      %v1343 = vrot.slane %v228, 2
      %v1344 = vsel %vm1323, %v1342, %v1343
      %v1345 = vrot.slane %v226, 2
      %v1346 = vrot.slane %v229, 2
      %v1347 = vsel %vm1323, %v1345, %v1346
      %v1348 = vrot.slane %v230, 2
      %v1349 = vsel %vm1323, %v1340, %v1348
      %v1350 = vrot.slane %v231, 2
      %v1351 = vsel %vm1323, %v1343, %v1350
      %v1352 = vrot.slane %v232, 2
      %v1353 = vsel %vm1323, %v1346, %v1352
      %v1354 = vrot.slane %v233, 2
      %v1355 = vrot.slane %v236, 2
      %v1356 = vsel %vm1323, %v1354, %v1355
      %v1357 = vrot.slane %v234, 2
      %v1358 = vrot.slane %v237, 2
      %v1359 = vsel %vm1323, %v1357, %v1358
      %v1360 = vrot.slane %v235, 2
      %v1361 = vrot.slane %v238, 2
      %v1362 = vsel %vm1323, %v1360, %v1361
      %v1363 = vrot.slane %v239, 2
      %v1364 = vsel %vm1323, %v1355, %v1363
      %v1365 = vrot.slane %v240, 2
      %v1366 = vsel %vm1323, %v1358, %v1365
      %v1367 = vrot.slane %v241, 2
      %v1368 = vsel %vm1323, %v1361, %v1367
      %v1369 = vrot.slane %v242, 2
      %v1370 = vrot.slane %v245, 2
      %v1371 = vsel %vm1323, %v1369, %v1370
      %v1372 = vrot.slane %v243, 2
      %v1373 = vrot.slane %v246, 2
      %v1374 = vsel %vm1323, %v1372, %v1373
      %v1375 = vrot.slane %v244, 2
      %v1376 = vrot.slane %v247, 2
      %v1377 = vsel %vm1323, %v1375, %v1376
      %v1378 = vrot.slane %v248, 2
      %v1379 = vsel %vm1323, %v1370, %v1378
      %v1380 = vrot.slane %v249, 2
      %v1381 = vsel %vm1323, %v1373, %v1380
      %v1382 = vrot.slane %v250, 2
      %v1383 = vsel %vm1323, %v1376, %v1382
      %v1384 = vrot.slane %v251, 2
      %v1385 = vrot.slane %v254, 2
      %v1386 = vsel %vm1323, %v1384, %v1385
      %v1387 = vrot.slane %v252, 2
      %v1388 = vrot.slane %v255, 2
      %v1389 = vsel %vm1323, %v1387, %v1388
      %v1390 = vrot.slane %v253, 2
      %v1391 = vrot.slane %v256, 2
      %v1392 = vsel %vm1323, %v1390, %v1391
      %v1393 = vrot.slane %v257, 2
      %v1394 = vsel %vm1323, %v1385, %v1393
      %v1395 = vrot.slane %v258, 2
      %v1396 = vsel %vm1323, %v1388, %v1395
      %v1397 = vrot.slane %v259, 2
      %v1398 = vsel %vm1323, %v1391, %v1397
      %v1399 = vrot.slane %v260, 2
      %v1400 = vrot.slane %v263, 2
      %v1401 = vsel %vm1323, %v1399, %v1400
      %v1402 = vrot.slane %v261, 2
      %v1403 = vrot.slane %v264, 2
      %v1404 = vsel %vm1323, %v1402, %v1403
      %v1405 = vrot.slane %v262, 2
      %v1406 = vrot.slane %v265, 2
      %v1407 = vsel %vm1323, %v1405, %v1406
      %v1408 = vrot.slane %v266, 2
      %v1409 = vsel %vm1323, %v1400, %v1408
      %v1410 = vrot.slane %v267, 2
      %v1411 = vsel %vm1323, %v1403, %v1410
      %v1412 = vrot.slane %v268, 2
      %v1413 = vsel %vm1323, %v1406, %v1412
      %v1414 = vrot.slane %v269, 2
      %v1415 = vrot.slane %v272, 2
      %v1416 = vsel %vm1323, %v1414, %v1415
      %v1417 = vrot.slane %v270, 2
      %v1418 = vrot.slane %v273, 2
      %v1419 = vsel %vm1323, %v1417, %v1418
      %v1420 = vrot.slane %v271, 2
      %v1421 = vrot.slane %v274, 2
      %v1422 = vsel %vm1323, %v1420, %v1421
      %v1423 = vrot.slane %v275, 2
      %v1424 = vsel %vm1323, %v1415, %v1423
      %v1425 = vrot.slane %v276, 2
      %v1426 = vsel %vm1323, %v1418, %v1425
      %v1427 = vrot.slane %v277, 2
      %v1428 = vsel %vm1323, %v1421, %v1427
      %v1429 = vrot.slane %v278, 2
      %v1430 = vrot.slane %v281, 2
      %v1431 = vsel %vm1323, %v1429, %v1430
      %v1432 = vrot.slane %v279, 2
      %v1433 = vrot.slane %v282, 2
      %v1434 = vsel %vm1323, %v1432, %v1433
      %v1435 = vrot.slane %v280, 2
      %v1436 = vrot.slane %v283, 2
      %v1437 = vsel %vm1323, %v1435, %v1436
      %v1438 = vrot.slane %v284, 2
      %v1439 = vsel %vm1323, %v1430, %v1438
      %v1440 = vrot.slane %v285, 2
      %v1441 = vsel %vm1323, %v1433, %v1440
      %v1442 = vrot.slane %v286, 2
      %v1443 = vsel %vm1323, %v1436, %v1442
      %v1444 = vrot.slane %v287, 2
      %v1445 = vrot.slane %v290, 2
      %v1446 = vsel %vm1323, %v1444, %v1445
      %v1447 = vrot.slane %v288, 2
      %v1448 = vrot.slane %v291, 2
      %v1449 = vsel %vm1323, %v1447, %v1448
      %v1450 = vrot.slane %v289, 2
      %v1451 = vrot.slane %v292, 2
      %v1452 = vsel %vm1323, %v1450, %v1451
      %v1453 = vrot.slane %v293, 2
      %v1454 = vsel %vm1323, %v1445, %v1453
      %v1455 = vrot.slane %v294, 2
      %v1456 = vsel %vm1323, %v1448, %v1455
      %v1457 = vrot.slane %v295, 2
      %v1458 = vsel %vm1323, %v1451, %v1457
      %s1495 = scalar_lea.vmem %s1, 640
      %v1496 = vld [vmem:[%s1495] sm:$0xff]
      %v1497 = vld [vmem:[%s1495 + $0x8] sm:$0xff]
      %v1498 = vld [vmem:[%s1495 + $0x10] sm:$0xff]
      %v1499 = vld [vmem:[%s1495 + $0x18] sm:$0xff]
      %v1500 = vld [vmem:[%s1495 + $0x20] sm:$0xff]
      %v1501 = vld [vmem:[%s1495 + $0x28] sm:$0xff]
      %v1502 = vld [vmem:[%s1495 + $0x30] sm:$0xff]
      %v1503 = vld [vmem:[%s1495 + $0x38] sm:$0xff]
      %v1504 = vld [vmem:[%s1495 + $0x40] sm:$0xff]
      %v1505 = vld [vmem:[%s1495 + $0x48] sm:$0xff]
      %v1506 = vld [vmem:[%s1495 + $0x50] sm:$0xff]
      %v1507 = vld [vmem:[%s1495 + $0x58] sm:$0xff]
      %v1508 = vld [vmem:[%s1495 + $0x60] sm:$0xff]
      %v1509 = vld [vmem:[%s1495 + $0x68] sm:$0xff]
      %v1510 = vld [vmem:[%s1495 + $0x70] sm:$0xff]
      %v1511 = vld [vmem:[%s1495 + $0x78] sm:$0xff]
      %v1512 = vld [vmem:[%s1495 + $0x80] sm:$0xff]
      %v1513 = vld [vmem:[%s1495 + $0x88] sm:$0xff]
      %v1514 = vld [vmem:[%s1495 + $0x90] sm:$0xff]
      %v1515 = vld [vmem:[%s1495 + $0x98] sm:$0xff]
      %v1516 = vld [vmem:[%s1495 + $0xa0] sm:$0xff]
      %v1517 = vld [vmem:[%s1495 + $0xa8] sm:$0xff]
      %v1518 = vld [vmem:[%s1495 + $0xb0] sm:$0xff]
      %v1519 = vld [vmem:[%s1495 + $0xb8] sm:$0xff]
      %v1520 = vld [vmem:[%s1495 + $0xc0] sm:$0xff]
      %v1521 = vld [vmem:[%s1495 + $0xc8] sm:$0xff]
      %v1522 = vld [vmem:[%s1495 + $0xd0] sm:$0xff]
      %v1523 = vld [vmem:[%s1495 + $0xd8] sm:$0xff]
      %v1524 = vld [vmem:[%s1495 + $0xe0] sm:$0xff]
      %v1525 = vld [vmem:[%s1495 + $0xe8] sm:$0xff]
      %v1526 = vld [vmem:[%s1495 + $0xf0] sm:$0xff]
      %v1527 = vld [vmem:[%s1495 + $0xf8] sm:$0xff]
      %v1528 = vld [vmem:[%s1495 + $0x100] sm:$0xff]
      %v1529 = vld [vmem:[%s1495 + $0x108] sm:$0xff]
      %v1530 = vld [vmem:[%s1495 + $0x110] sm:$0xff]
      %v1531 = vld [vmem:[%s1495 + $0x118] sm:$0xff]
      %v1532 = vld [vmem:[%s1495 + $0x120] sm:$0xff]
      %v1533 = vld [vmem:[%s1495 + $0x128] sm:$0xff]
      %v1534 = vld [vmem:[%s1495 + $0x130] sm:$0xff]
      %v1535 = vld [vmem:[%s1495 + $0x138] sm:$0xff]
      %v1536 = vsel %vm630, %v1332, 0
      %v1538 = vsel %vm630, %v1338, 0
      %v1540 = vsel %vm630, %v1347, 0
      %v1542 = vsel %vm630, %v1353, 0
      %v1544 = vsel %vm630, %v1362, 0
      %v1546 = vsel %vm630, %v1368, 0
      %v1548 = vsel %vm630, %v1377, 0
      %v1550 = vsel %vm630, %v1383, 0
      %v1552 = vsel %vm630, %v1392, 0
      %v1554 = vsel %vm630, %v1398, 0
      %v1556 = vsel %vm630, %v1407, 0
      %v1558 = vsel %vm630, %v1413, 0
      %v1560 = vsel %vm630, %v1422, 0
      %v1562 = vsel %vm630, %v1428, 0
      %v1564 = vsel %vm630, %v1437, 0
      %v1566 = vsel %vm630, %v1443, 0
      %v1568 = vsel %vm630, %v1452, 0
      %v1570 = vsel %vm630, %v1458, 0
      %1572 = vmatprep.subr.mxu0 0.0
      %1573 = vmatpush1.msra.mxu0 %v1496
      %1574 = vmatprep.subr.mxu0 0.0
      %1575 = vmatpush1.msra.mxu0 %v1497
      %1576 = vmatprep.subr.mxu0 0.0
      %1577 = vmatpush1.msra.mxu0 %v1498
      %1578 = vmatprep.subr.mxu0 0.0
      %1579 = vmatpush1.msra.mxu0 %v1499
      %1580 = vmatprep.subr.mxu0 0.0
      %1581 = vmatpush1.msra.mxu0 %v1500
      %1582 = vmatprep.subr.mxu0 0.0
      %1583 = vmatpush1.msra.mxu0 %v1501
      %1584 = vmatprep.subr.mxu0 0.0
      %1585 = vmatpush1.msra.mxu0 %v1502
      %1586 = vmatprep.subr.mxu0 0.0
      %1587 = vmatpush1.msra.mxu0 %v1503
      %1588 = vmatprep.subr.mxu0 0.0
      %1589 = vmatpush1.msra.mxu0 %v1504
      %1590 = vmatprep.subr.mxu0 0.0
      %1591 = vmatpush1.msra.mxu0 %v1505
      %1592 = vmatprep.subr.mxu0 0.0
      %1593 = vmatpush1.msra.mxu0 %v1506
      %1594 = vmatprep.subr.mxu0 0.0
      %1595 = vmatpush1.msra.mxu0 %v1507
      %1596 = vmatprep.subr.mxu0 0.0
      %1597 = vmatpush1.msra.mxu0 %v1508
      %1598 = vmatprep.subr.mxu0 0.0
      %1599 = vmatpush1.msra.mxu0 %v1509
      %1600 = vmatprep.subr.mxu0 0.0
      %1601 = vmatpush1.msra.mxu0 %v1510
      %1602 = vmatprep.subr.mxu0 0.0
      %1603 = vmatpush1.msra.mxu0 %v1511
      %1604 = vmatprep.subr.mxu0 0.0
      %1605 = vmatpush1.msra.mxu0 %v1512
      %1606 = vmatprep.subr.mxu0 0.0
      %1607 = vmatpush1.msra.mxu0 %v1513
      %1608 = vmatprep.subr.mxu0 0.0
      %1609 = vmatpush1.msra.mxu0 %v1514
      %1610 = vmatprep.subr.mxu0 0.0
      %1611 = vmatpush1.msra.mxu0 %v1515
      %1612 = vmatprep.subr.mxu0 0.0
      %1613 = vmatpush1.msra.mxu0 %v1516
      %1614 = vmatprep.subr.mxu0 0.0
      %1615 = vmatpush1.msra.mxu0 %v1517
      %1616 = vmatprep.subr.mxu0 0.0
      %1617 = vmatpush1.msra.mxu0 %v1518
      %1618 = vmatprep.subr.mxu0 0.0
      %1619 = vmatpush1.msra.mxu0 %v1519
      %1620 = vmatprep.subr.mxu0 0.0
      %1621 = vmatpush1.msra.mxu0 %v1520
      %1622 = vmatprep.subr.mxu0 0.0
      %1623 = vmatpush1.msra.mxu0 %v1521
      %1624 = vmatprep.subr.mxu0 0.0
      %1625 = vmatpush1.msra.mxu0 %v1522
      %1626 = vmatprep.subr.mxu0 0.0
      %1627 = vmatpush1.msra.mxu0 %v1523
      %1628 = vmatprep.subr.mxu0 0.0
      %1629 = vmatpush1.msra.mxu0 %v1524
      %1630 = vmatprep.subr.mxu0 0.0
      %1631 = vmatpush1.msra.mxu0 %v1525
      %1632 = vmatprep.subr.mxu0 0.0
      %1633 = vmatpush1.msra.mxu0 %v1526
      %1634 = vmatprep.subr.mxu0 0.0
      %1635 = vmatpush1.msra.mxu0 %v1527
      %1636 = vmatprep.mubr.f32.mxu0 %v1329
      %1637 = vmatmul.mubr.f32.gmra.mrb[0].mxu0 %v1326
      %v1638 = vpop.f32.mrb[0].mxu0
      %v1639 = vadd.f32 0.0, %v1638
      %v1640 = vpop.f32.mrb[0].mxu0
      %1641 = vmatprep.mubr.f32.mxu0 %v1336
      %1642 = vmatmul.mubr.f32.gmra.mrb[0].mxu0 %v1334
      %v1643 = vpop.f32.mrb[0].mxu0
      %v1644 = vadd.f32 0.0, %v1643
      %v1645 = vpop.f32.mrb[0].mxu0
      %1646 = vmatprep.mubr.f32.mxu0 %v1344
      %1647 = vmatmul.mubr.f32.gmra.mrb[0].mxu0 %v1341
      %v1648 = vpop.f32.mrb[0].mxu0
      %v1649 = vadd.f32 0.0, %v1648
      %v1650 = vpop.f32.mrb[0].mxu0
      %1651 = vmatprep.mubr.f32.mxu0 %v1351
      %1652 = vmatmul.mubr.f32.gmra.mrb[0].mxu0 %v1349
      %v1653 = vpop.f32.mrb[0].mxu0
      %v1654 = vadd.f32 0.0, %v1653
      %v1655 = vpop.f32.mrb[0].mxu0
      %1656 = vmatprep.mubr.f32.mxu0 %v1359
      %1657 = vmatmul.mubr.f32.gmra.mrb[0].mxu0 %v1356
      %v1658 = vpop.f32.mrb[0].mxu0
      %v1659 = vadd.f32 0.0, %v1658
      %v1660 = vpop.f32.mrb[0].mxu0
      %1661 = vmatprep.mubr.f32.mxu0 %v1366
      %1662 = vmatmul.mubr.f32.gmra.mrb[0].mxu0 %v1364
      %v1663 = vpop.f32.mrb[0].mxu0
      %v1664 = vadd.f32 0.0, %v1663
      %v1665 = vpop.f32.mrb[0].mxu0
      %1666 = vmatprep.mubr.f32.mxu0 %v1374
      %1667 = vmatmul.mubr.f32.gmra.mrb[0].mxu0 %v1371
      %v1668 = vpop.f32.mrb[0].mxu0
      %v1669 = vadd.f32 0.0, %v1668
      %v1670 = vpop.f32.mrb[0].mxu0
      %1671 = vmatprep.mubr.f32.mxu0 %v1381
      %1672 = vmatmul.mubr.f32.gmra.mrb[0].mxu0 %v1379
      %v1673 = vpop.f32.mrb[0].mxu0
      %v1674 = vadd.f32 0.0, %v1673
      %v1675 = vpop.f32.mrb[0].mxu0
      %1676 = vmatprep.mubr.f32.mxu0 %v1389
      %1677 = vmatmul.mubr.f32.gmra.mrb[0].mxu0 %v1386
      %v1678 = vpop.f32.mrb[0].mxu0
      %v1679 = vadd.f32 0.0, %v1678
      %v1680 = vpop.f32.mrb[0].mxu0
      %1681 = vmatprep.mubr.f32.mxu0 %v1396
      %1682 = vmatmul.mubr.f32.gmra.mrb[0].mxu0 %v1394
      %v1683 = vpop.f32.mrb[0].mxu0
      %v1684 = vadd.f32 0.0, %v1683
      %v1685 = vpop.f32.mrb[0].mxu0
      %1686 = vmatprep.mubr.f32.mxu0 %v1404
      %1687 = vmatmul.mubr.f32.gmra.mrb[0].mxu0 %v1401
      %v1688 = vpop.f32.mrb[0].mxu0
      %v1689 = vadd.f32 0.0, %v1688
      %v1690 = vpop.f32.mrb[0].mxu0
      %1691 = vmatprep.mubr.f32.mxu0 %v1411
      %1692 = vmatmul.mubr.f32.gmra.mrb[0].mxu0 %v1409
      %v1693 = vpop.f32.mrb[0].mxu0
      %v1694 = vadd.f32 0.0, %v1693
      %v1695 = vpop.f32.mrb[0].mxu0
      %1696 = vmatprep.mubr.f32.mxu0 %v1419
      %1697 = vmatmul.mubr.f32.gmra.mrb[0].mxu0 %v1416
      %v1698 = vpop.f32.mrb[0].mxu0
      %v1699 = vadd.f32 0.0, %v1698
      %v1700 = vpop.f32.mrb[0].mxu0
      %1701 = vmatprep.mubr.f32.mxu0 %v1426
      %1702 = vmatmul.mubr.f32.gmra.mrb[0].mxu0 %v1424
      %v1703 = vpop.f32.mrb[0].mxu0
      %v1704 = vadd.f32 0.0, %v1703
      %v1705 = vpop.f32.mrb[0].mxu0
      %1706 = vmatprep.mubr.f32.mxu0 %v1434
      %1707 = vmatmul.mubr.f32.gmra.mrb[0].mxu0 %v1431
      %v1708 = vpop.f32.mrb[0].mxu0
      %v1709 = vadd.f32 0.0, %v1708
      %v1710 = vpop.f32.mrb[0].mxu0
      %1711 = vmatprep.mubr.f32.mxu0 %v1441
      %1712 = vmatmul.mubr.f32.gmra.mrb[0].mxu0 %v1439
      %v1713 = vpop.f32.mrb[0].mxu0
      %v1714 = vadd.f32 0.0, %v1713
      %v1715 = vpop.f32.mrb[0].mxu0
      %1716 = vmatprep.mubr.f32.mxu0 %v1449
      %1717 = vmatmul.mubr.f32.gmra.mrb[0].mxu0 %v1446
      %v1718 = vpop.f32.mrb[0].mxu0
      %v1719 = vadd.f32 0.0, %v1718
      %v1720 = vpop.f32.mrb[0].mxu0
      %1721 = vmatprep.mubr.f32.mxu0 %v1456
      %1722 = vmatmul.mubr.f32.gmra.mrb[0].mxu0 %v1454
      %v1723 = vpop.f32.mrb[0].mxu0
      %v1724 = vadd.f32 0.0, %v1723
      %v1725 = vpop.f32.mrb[0].mxu0
      %1726 = vdwg.mxu0
      %1727 = vmatprep.subr.mxu0 0.0
      %1728 = vmatpush1.msra.mxu0 %v1528
      %1729 = vmatprep.subr.mxu0 0.0
      %1730 = vmatpush1.msra.mxu0 %v1529
      %1731 = vmatprep.subr.mxu0 0.0
      %1732 = vmatpush1.msra.mxu0 %v1530
      %1733 = vmatprep.subr.mxu0 0.0
      %1734 = vmatpush1.msra.mxu0 %v1531
      %1735 = vmatprep.subr.mxu0 0.0
      %1736 = vmatpush1.msra.mxu0 %v1532
      %1737 = vmatprep.subr.mxu0 0.0
      %1738 = vmatpush1.msra.mxu0 %v1533
      %1739 = vmatprep.subr.mxu0 0.0
      %1740 = vmatpush1.msra.mxu0 %v1534
      %1741 = vmatprep.subr.mxu0 0.0
      %1742 = vmatpush1.msra.mxu0 %v1535
      %1743 = vmatprep.subr.mxu0 0.0
      %1744 = vmatpush1.msra.mxu0 0.0
      %1745 = vmatprep.subr.mxu0 0.0
      %1746 = vmatpush1.msra.mxu0 0.0
      %1747 = vmatprep.subr.mxu0 0.0
      %1748 = vmatpush1.msra.mxu0 0.0
      %1749 = vmatprep.subr.mxu0 0.0
      %1750 = vmatpush1.msra.mxu0 0.0
      %1751 = vmatprep.subr.mxu0 0.0
      %1752 = vmatpush1.msra.mxu0 0.0
      %1753 = vmatprep.subr.mxu0 0.0
      %1754 = vmatpush1.msra.mxu0 0.0
      %1755 = vmatprep.subr.mxu0 0.0
      %1756 = vmatpush1.msra.mxu0 0.0
      %1757 = vmatprep.subr.mxu0 0.0
      %1758 = vmatpush1.msra.mxu0 0.0
      %1759 = vmatprep.subr.mxu0 0.0
      %1760 = vmatpush1.msra.mxu0 0.0
      %1761 = vmatprep.subr.mxu0 0.0
      %1762 = vmatpush1.msra.mxu0 0.0
      %1763 = vmatprep.subr.mxu0 0.0
      %1764 = vmatpush1.msra.mxu0 0.0
      %1765 = vmatprep.subr.mxu0 0.0
      %1766 = vmatpush1.msra.mxu0 0.0
      %1767 = vmatprep.subr.mxu0 0.0
      %1768 = vmatpush1.msra.mxu0 0.0
      %1769 = vmatprep.subr.mxu0 0.0
      %1770 = vmatpush1.msra.mxu0 0.0
      %1771 = vmatprep.subr.mxu0 0.0
      %1772 = vmatpush1.msra.mxu0 0.0
      %1773 = vmatprep.subr.mxu0 0.0
      %1774 = vmatpush1.msra.mxu0 0.0
      %1775 = vmatprep.subr.mxu0 0.0
      %1776 = vmatpush1.msra.mxu0 0.0
      %1777 = vmatprep.subr.mxu0 0.0
      %1778 = vmatpush1.msra.mxu0 0.0
      %1779 = vmatprep.subr.mxu0 0.0
      %1780 = vmatpush1.msra.mxu0 0.0
      %1781 = vmatprep.subr.mxu0 0.0
      %1782 = vmatpush1.msra.mxu0 0.0
      %1783 = vmatprep.subr.mxu0 0.0
      %1784 = vmatpush1.msra.mxu0 0.0
      %1785 = vmatprep.subr.mxu0 0.0
      %1786 = vmatpush1.msra.mxu0 0.0
      %1787 = vmatprep.subr.mxu0 0.0
      %1788 = vmatpush1.msra.mxu0 0.0
      %1789 = vmatprep.subr.mxu0 0.0
      %1790 = vmatpush1.msra.mxu0 0.0
      %1791 = vmatprep.mubr.f32.mxu0 0.0
      %1792 = vmatmul.mubr.f32.gmra.mrb[0].mxu0 %v1536
      %v1793 = vpop.f32.mrb[0].mxu0
      %v1794 = vadd.f32 %v1639, %v1793
      %v1795 = vpop.f32.mrb[0].mxu0
      %1796 = vmatprep.mubr.f32.mxu0 0.0
      %1797 = vmatmul.mubr.f32.gmra.mrb[0].mxu0 %v1538
      %v1798 = vpop.f32.mrb[0].mxu0
      %v1799 = vadd.f32 %v1644, %v1798
      %v1800 = vpop.f32.mrb[0].mxu0
      %1801 = vmatprep.mubr.f32.mxu0 0.0
      %1802 = vmatmul.mubr.f32.gmra.mrb[0].mxu0 %v1540
      %v1803 = vpop.f32.mrb[0].mxu0
      %v1804 = vadd.f32 %v1649, %v1803
      %v1805 = vpop.f32.mrb[0].mxu0
      %1806 = vmatprep.mubr.f32.mxu0 0.0
      %1807 = vmatmul.mubr.f32.gmra.mrb[0].mxu0 %v1542
      %v1808 = vpop.f32.mrb[0].mxu0
      %v1809 = vadd.f32 %v1654, %v1808
      %v1810 = vpop.f32.mrb[0].mxu0
      %1811 = vmatprep.mubr.f32.mxu0 0.0
      %1812 = vmatmul.mubr.f32.gmra.mrb[0].mxu0 %v1544
      %v1813 = vpop.f32.mrb[0].mxu0
      %v1814 = vadd.f32 %v1659, %v1813
      %v1815 = vpop.f32.mrb[0].mxu0
      %1816 = vmatprep.mubr.f32.mxu0 0.0
      %1817 = vmatmul.mubr.f32.gmra.mrb[0].mxu0 %v1546
      %v1818 = vpop.f32.mrb[0].mxu0
      %v1819 = vadd.f32 %v1664, %v1818
      %v1820 = vpop.f32.mrb[0].mxu0
      %1821 = vmatprep.mubr.f32.mxu0 0.0
      %1822 = vmatmul.mubr.f32.gmra.mrb[0].mxu0 %v1548
      %v1823 = vpop.f32.mrb[0].mxu0
      %v1824 = vadd.f32 %v1669, %v1823
      %v1825 = vpop.f32.mrb[0].mxu0
      %1826 = vmatprep.mubr.f32.mxu0 0.0
      %1827 = vmatmul.mubr.f32.gmra.mrb[0].mxu0 %v1550
      %v1828 = vpop.f32.mrb[0].mxu0
      %v1829 = vadd.f32 %v1674, %v1828
      %v1830 = vpop.f32.mrb[0].mxu0
      %1831 = vmatprep.mubr.f32.mxu0 0.0
      %1832 = vmatmul.mubr.f32.gmra.mrb[0].mxu0 %v1552
      %v1833 = vpop.f32.mrb[0].mxu0
      %v1834 = vadd.f32 %v1679, %v1833
      %v1835 = vpop.f32.mrb[0].mxu0
      %1836 = vmatprep.mubr.f32.mxu0 0.0
      %1837 = vmatmul.mubr.f32.gmra.mrb[0].mxu0 %v1554
      %v1838 = vpop.f32.mrb[0].mxu0
      %v1839 = vadd.f32 %v1684, %v1838
      %v1840 = vpop.f32.mrb[0].mxu0
      %1841 = vmatprep.mubr.f32.mxu0 0.0
      %1842 = vmatmul.mubr.f32.gmra.mrb[0].mxu0 %v1556
      %v1843 = vpop.f32.mrb[0].mxu0
      %v1844 = vadd.f32 %v1689, %v1843
      %v1845 = vpop.f32.mrb[0].mxu0
      %1846 = vmatprep.mubr.f32.mxu0 0.0
      %1847 = vmatmul.mubr.f32.gmra.mrb[0].mxu0 %v1558
      %v1848 = vpop.f32.mrb[0].mxu0
      %v1849 = vadd.f32 %v1694, %v1848
      %v1850 = vpop.f32.mrb[0].mxu0
      %1851 = vmatprep.mubr.f32.mxu0 0.0
      %1852 = vmatmul.mubr.f32.gmra.mrb[0].mxu0 %v1560
      %v1853 = vpop.f32.mrb[0].mxu0
      %v1854 = vadd.f32 %v1699, %v1853
      %v1855 = vpop.f32.mrb[0].mxu0
      %1856 = vmatprep.mubr.f32.mxu0 0.0
      %1857 = vmatmul.mubr.f32.gmra.mrb[0].mxu0 %v1562
      %v1858 = vpop.f32.mrb[0].mxu0
      %v1859 = vadd.f32 %v1704, %v1858
      %v1860 = vpop.f32.mrb[0].mxu0
      %1861 = vmatprep.mubr.f32.mxu0 0.0
      %1862 = vmatmul.mubr.f32.gmra.mrb[0].mxu0 %v1564
      %v1863 = vpop.f32.mrb[0].mxu0
      %v1864 = vadd.f32 %v1709, %v1863
      %v1865 = vpop.f32.mrb[0].mxu0
      %1866 = vmatprep.mubr.f32.mxu0 0.0
      %1867 = vmatmul.mubr.f32.gmra.mrb[0].mxu0 %v1566
      %v1868 = vpop.f32.mrb[0].mxu0
      %v1869 = vadd.f32 %v1714, %v1868
      %v1870 = vpop.f32.mrb[0].mxu0
      %1871 = vmatprep.mubr.f32.mxu0 0.0
      %1872 = vmatmul.mubr.f32.gmra.mrb[0].mxu0 %v1568
      %v1873 = vpop.f32.mrb[0].mxu0
      %v1874 = vadd.f32 %v1719, %v1873
      %v1875 = vpop.f32.mrb[0].mxu0
      %1876 = vmatprep.mubr.f32.mxu0 0.0
      %1877 = vmatmul.mubr.f32.gmra.mrb[0].mxu0 %v1570
      %v1878 = vpop.f32.mrb[0].mxu0
      %v1879 = vadd.f32 %v1724, %v1878
      %v1880 = vpop.f32.mrb[0].mxu0
      %1881 = vdwg.mxu0
      %v1882 = vadd.f32 %v1235, %v1794
      %v1883 = vadd.f32 %v1240, %v1799
      %v1884 = vadd.f32 %v1245, %v1804
      %v1885 = vadd.f32 %v1250, %v1809
      %v1886 = vadd.f32 %v1255, %v1814
      %v1887 = vadd.f32 %v1260, %v1819
      %v1888 = vadd.f32 %v1265, %v1824
      %v1889 = vadd.f32 %v1270, %v1829
      %v1890 = vadd.f32 %v1275, %v1834
      %v1891 = vadd.f32 %v1280, %v1839
      %v1892 = vadd.f32 %v1285, %v1844
      %v1893 = vadd.f32 %v1290, %v1849
      %v1894 = vadd.f32 %v1295, %v1854
      %v1895 = vadd.f32 %v1300, %v1859
      %v1896 = vadd.f32 %v1305, %v1864
      %v1897 = vadd.f32 %v1310, %v1869
      %v1898 = vadd.f32 %v1315, %v1874
      %v1899 = vadd.f32 %v1320, %v1879
      %vm1900 = vcmask 1044480
      %v1901 = vrot.slane %v215, 3
      %v1902 = vrot.slane %v218, 3
      %v1903 = vsel %vm1900, %v1901, %v1902
      %v1904 = vrot.slane %v216, 3
      %v1905 = vrot.slane %v219, 3
      %v1906 = vsel %vm1900, %v1904, %v1905
      %v1907 = vrot.slane %v217, 3
      %v1908 = vrot.slane %v220, 3
      %v1909 = vsel %vm1900, %v1907, %v1908
      %v1910 = vrot.slane %v221, 3
      %v1911 = vsel %vm1900, %v1902, %v1910
      %v1912 = vrot.slane %v222, 3
      %v1913 = vsel %vm1900, %v1905, %v1912
      %v1914 = vrot.slane %v223, 3
      %v1915 = vsel %vm1900, %v1908, %v1914
      %v1916 = vrot.slane %v224, 3
      %v1917 = vrot.slane %v227, 3
      %v1918 = vsel %vm1900, %v1916, %v1917
      %v1919 = vrot.slane %v225, 3
      %v1920 = vrot.slane %v228, 3
      %v1921 = vsel %vm1900, %v1919, %v1920
      %v1922 = vrot.slane %v226, 3
      %v1923 = vrot.slane %v229, 3
      %v1924 = vsel %vm1900, %v1922, %v1923
      %v1925 = vrot.slane %v230, 3
      %v1926 = vsel %vm1900, %v1917, %v1925
      %v1927 = vrot.slane %v231, 3
      %v1928 = vsel %vm1900, %v1920, %v1927
      %v1929 = vrot.slane %v232, 3
      %v1930 = vsel %vm1900, %v1923, %v1929
      %v1931 = vrot.slane %v233, 3
      %v1932 = vrot.slane %v236, 3
      %v1933 = vsel %vm1900, %v1931, %v1932
      %v1934 = vrot.slane %v234, 3
      %v1935 = vrot.slane %v237, 3
      %v1936 = vsel %vm1900, %v1934, %v1935
      %v1937 = vrot.slane %v235, 3
      %v1938 = vrot.slane %v238, 3
      %v1939 = vsel %vm1900, %v1937, %v1938
      %v1940 = vrot.slane %v239, 3
      %v1941 = vsel %vm1900, %v1932, %v1940
      %v1942 = vrot.slane %v240, 3
      %v1943 = vsel %vm1900, %v1935, %v1942
      %v1944 = vrot.slane %v241, 3
      %v1945 = vsel %vm1900, %v1938, %v1944
      %v1946 = vrot.slane %v242, 3
      %v1947 = vrot.slane %v245, 3
      %v1948 = vsel %vm1900, %v1946, %v1947
      %v1949 = vrot.slane %v243, 3
      %v1950 = vrot.slane %v246, 3
      %v1951 = vsel %vm1900, %v1949, %v1950
      %v1952 = vrot.slane %v244, 3
      %v1953 = vrot.slane %v247, 3
      %v1954 = vsel %vm1900, %v1952, %v1953
      %v1955 = vrot.slane %v248, 3
      %v1956 = vsel %vm1900, %v1947, %v1955
      %v1957 = vrot.slane %v249, 3
      %v1958 = vsel %vm1900, %v1950, %v1957
      %v1959 = vrot.slane %v250, 3
      %v1960 = vsel %vm1900, %v1953, %v1959
      %v1961 = vrot.slane %v251, 3
      %v1962 = vrot.slane %v254, 3
      %v1963 = vsel %vm1900, %v1961, %v1962
      %v1964 = vrot.slane %v252, 3
      %v1965 = vrot.slane %v255, 3
      %v1966 = vsel %vm1900, %v1964, %v1965
      %v1967 = vrot.slane %v253, 3
      %v1968 = vrot.slane %v256, 3
      %v1969 = vsel %vm1900, %v1967, %v1968
      %v1970 = vrot.slane %v257, 3
      %v1971 = vsel %vm1900, %v1962, %v1970
      %v1972 = vrot.slane %v258, 3
      %v1973 = vsel %vm1900, %v1965, %v1972
      %v1974 = vrot.slane %v259, 3
      %v1975 = vsel %vm1900, %v1968, %v1974
      %v1976 = vrot.slane %v260, 3
      %v1977 = vrot.slane %v263, 3
      %v1978 = vsel %vm1900, %v1976, %v1977
      %v1979 = vrot.slane %v261, 3
      %v1980 = vrot.slane %v264, 3
      %v1981 = vsel %vm1900, %v1979, %v1980
      %v1982 = vrot.slane %v262, 3
      %v1983 = vrot.slane %v265, 3
      %v1984 = vsel %vm1900, %v1982, %v1983
      %v1985 = vrot.slane %v266, 3
      %v1986 = vsel %vm1900, %v1977, %v1985
      %v1987 = vrot.slane %v267, 3
      %v1988 = vsel %vm1900, %v1980, %v1987
      %v1989 = vrot.slane %v268, 3
      %v1990 = vsel %vm1900, %v1983, %v1989
      %v1991 = vrot.slane %v269, 3
      %v1992 = vrot.slane %v272, 3
      %v1993 = vsel %vm1900, %v1991, %v1992
      %v1994 = vrot.slane %v270, 3
      %v1995 = vrot.slane %v273, 3
      %v1996 = vsel %vm1900, %v1994, %v1995
      %v1997 = vrot.slane %v271, 3
      %v1998 = vrot.slane %v274, 3
      %v1999 = vsel %vm1900, %v1997, %v1998
      %v2000 = vrot.slane %v275, 3
      %v2001 = vsel %vm1900, %v1992, %v2000
      %v2002 = vrot.slane %v276, 3
      %v2003 = vsel %vm1900, %v1995, %v2002
      %v2004 = vrot.slane %v277, 3
      %v2005 = vsel %vm1900, %v1998, %v2004
      %v2006 = vrot.slane %v278, 3
      %v2007 = vrot.slane %v281, 3
      %v2008 = vsel %vm1900, %v2006, %v2007
      %v2009 = vrot.slane %v279, 3
      %v2010 = vrot.slane %v282, 3
      %v2011 = vsel %vm1900, %v2009, %v2010
      %v2012 = vrot.slane %v280, 3
      %v2013 = vrot.slane %v283, 3
      %v2014 = vsel %vm1900, %v2012, %v2013
      %v2015 = vrot.slane %v284, 3
      %v2016 = vsel %vm1900, %v2007, %v2015
      %v2017 = vrot.slane %v285, 3
      %v2018 = vsel %vm1900, %v2010, %v2017
      %v2019 = vrot.slane %v286, 3
      %v2020 = vsel %vm1900, %v2013, %v2019
      %v2021 = vrot.slane %v287, 3
      %v2022 = vrot.slane %v290, 3
      %v2023 = vsel %vm1900, %v2021, %v2022
      %v2024 = vrot.slane %v288, 3
      %v2025 = vrot.slane %v291, 3
      %v2026 = vsel %vm1900, %v2024, %v2025
      %v2027 = vrot.slane %v289, 3
      %v2028 = vrot.slane %v292, 3
      %v2029 = vsel %vm1900, %v2027, %v2028
      %v2030 = vrot.slane %v293, 3
      %v2031 = vsel %vm1900, %v2022, %v2030
      %v2032 = vrot.slane %v294, 3
      %v2033 = vsel %vm1900, %v2025, %v2032
      %v2034 = vrot.slane %v295, 3
      %v2035 = vsel %vm1900, %v2028, %v2034
      %s2072 = scalar_lea.vmem %s1, 960
      %v2073 = vld [vmem:[%s2072] sm:$0xff]
      %v2074 = vld [vmem:[%s2072 + $0x8] sm:$0xff]
      %v2075 = vld [vmem:[%s2072 + $0x10] sm:$0xff]
      %v2076 = vld [vmem:[%s2072 + $0x18] sm:$0xff]
      %v2077 = vld [vmem:[%s2072 + $0x20] sm:$0xff]
      %v2078 = vld [vmem:[%s2072 + $0x28] sm:$0xff]
      %v2079 = vld [vmem:[%s2072 + $0x30] sm:$0xff]
      %v2080 = vld [vmem:[%s2072 + $0x38] sm:$0xff]
      %v2081 = vld [vmem:[%s2072 + $0x40] sm:$0xff]
      %v2082 = vld [vmem:[%s2072 + $0x48] sm:$0xff]
      %v2083 = vld [vmem:[%s2072 + $0x50] sm:$0xff]
      %v2084 = vld [vmem:[%s2072 + $0x58] sm:$0xff]
      %v2085 = vld [vmem:[%s2072 + $0x60] sm:$0xff]
      %v2086 = vld [vmem:[%s2072 + $0x68] sm:$0xff]
      %v2087 = vld [vmem:[%s2072 + $0x70] sm:$0xff]
      %v2088 = vld [vmem:[%s2072 + $0x78] sm:$0xff]
      %v2089 = vld [vmem:[%s2072 + $0x80] sm:$0xff]
      %v2090 = vld [vmem:[%s2072 + $0x88] sm:$0xff]
      %v2091 = vld [vmem:[%s2072 + $0x90] sm:$0xff]
      %v2092 = vld [vmem:[%s2072 + $0x98] sm:$0xff]
      %v2093 = vld [vmem:[%s2072 + $0xa0] sm:$0xff]
      %v2094 = vld [vmem:[%s2072 + $0xa8] sm:$0xff]
      %v2095 = vld [vmem:[%s2072 + $0xb0] sm:$0xff]
      %v2096 = vld [vmem:[%s2072 + $0xb8] sm:$0xff]
      %v2097 = vld [vmem:[%s2072 + $0xc0] sm:$0xff]
      %v2098 = vld [vmem:[%s2072 + $0xc8] sm:$0xff]
      %v2099 = vld [vmem:[%s2072 + $0xd0] sm:$0xff]
      %v2100 = vld [vmem:[%s2072 + $0xd8] sm:$0xff]
      %v2101 = vld [vmem:[%s2072 + $0xe0] sm:$0xff]
      %v2102 = vld [vmem:[%s2072 + $0xe8] sm:$0xff]
      %v2103 = vld [vmem:[%s2072 + $0xf0] sm:$0xff]
      %v2104 = vld [vmem:[%s2072 + $0xf8] sm:$0xff]
      %v2105 = vld [vmem:[%s2072 + $0x100] sm:$0xff]
      %v2106 = vld [vmem:[%s2072 + $0x108] sm:$0xff]
      %v2107 = vld [vmem:[%s2072 + $0x110] sm:$0xff]
      %v2108 = vld [vmem:[%s2072 + $0x118] sm:$0xff]
      %v2109 = vld [vmem:[%s2072 + $0x120] sm:$0xff]
      %v2110 = vld [vmem:[%s2072 + $0x128] sm:$0xff]
      %v2111 = vld [vmem:[%s2072 + $0x130] sm:$0xff]
      %v2112 = vld [vmem:[%s2072 + $0x138] sm:$0xff]
      %v2113 = vsel %vm630, %v1909, 0
      %v2115 = vsel %vm630, %v1915, 0
      %v2117 = vsel %vm630, %v1924, 0
      %v2119 = vsel %vm630, %v1930, 0
      %v2121 = vsel %vm630, %v1939, 0
      %v2123 = vsel %vm630, %v1945, 0
      %v2125 = vsel %vm630, %v1954, 0
      %v2127 = vsel %vm630, %v1960, 0
      %v2129 = vsel %vm630, %v1969, 0
      %v2131 = vsel %vm630, %v1975, 0
      %v2133 = vsel %vm630, %v1984, 0
      %v2135 = vsel %vm630, %v1990, 0
      %v2137 = vsel %vm630, %v1999, 0
      %v2139 = vsel %vm630, %v2005, 0
      %v2141 = vsel %vm630, %v2014, 0
      %v2143 = vsel %vm630, %v2020, 0
      %v2145 = vsel %vm630, %v2029, 0
      %v2147 = vsel %vm630, %v2035, 0
      %2149 = vmatprep.subr.mxu0 0.0
      %2150 = vmatpush1.msra.mxu0 %v2073
      %2151 = vmatprep.subr.mxu0 0.0
      %2152 = vmatpush1.msra.mxu0 %v2074
      %2153 = vmatprep.subr.mxu0 0.0
      %2154 = vmatpush1.msra.mxu0 %v2075
      %2155 = vmatprep.subr.mxu0 0.0
      %2156 = vmatpush1.msra.mxu0 %v2076
      %2157 = vmatprep.subr.mxu0 0.0
      %2158 = vmatpush1.msra.mxu0 %v2077
      %2159 = vmatprep.subr.mxu0 0.0
      %2160 = vmatpush1.msra.mxu0 %v2078
      %2161 = vmatprep.subr.mxu0 0.0
      %2162 = vmatpush1.msra.mxu0 %v2079
      %2163 = vmatprep.subr.mxu0 0.0
      %2164 = vmatpush1.msra.mxu0 %v2080
      %2165 = vmatprep.subr.mxu0 0.0
      %2166 = vmatpush1.msra.mxu0 %v2081
      %2167 = vmatprep.subr.mxu0 0.0
      %2168 = vmatpush1.msra.mxu0 %v2082
      %2169 = vmatprep.subr.mxu0 0.0
      %2170 = vmatpush1.msra.mxu0 %v2083
      %2171 = vmatprep.subr.mxu0 0.0
      %2172 = vmatpush1.msra.mxu0 %v2084
      %2173 = vmatprep.subr.mxu0 0.0
      %2174 = vmatpush1.msra.mxu0 %v2085
      %2175 = vmatprep.subr.mxu0 0.0
      %2176 = vmatpush1.msra.mxu0 %v2086
      %2177 = vmatprep.subr.mxu0 0.0
      %2178 = vmatpush1.msra.mxu0 %v2087
      %2179 = vmatprep.subr.mxu0 0.0
      %2180 = vmatpush1.msra.mxu0 %v2088
      %2181 = vmatprep.subr.mxu0 0.0
      %2182 = vmatpush1.msra.mxu0 %v2089
      %2183 = vmatprep.subr.mxu0 0.0
      %2184 = vmatpush1.msra.mxu0 %v2090
      %2185 = vmatprep.subr.mxu0 0.0
      %2186 = vmatpush1.msra.mxu0 %v2091
      %2187 = vmatprep.subr.mxu0 0.0
      %2188 = vmatpush1.msra.mxu0 %v2092
      %2189 = vmatprep.subr.mxu0 0.0
      %2190 = vmatpush1.msra.mxu0 %v2093
      %2191 = vmatprep.subr.mxu0 0.0
      %2192 = vmatpush1.msra.mxu0 %v2094
      %2193 = vmatprep.subr.mxu0 0.0
      %2194 = vmatpush1.msra.mxu0 %v2095
      %2195 = vmatprep.subr.mxu0 0.0
      %2196 = vmatpush1.msra.mxu0 %v2096
      %2197 = vmatprep.subr.mxu0 0.0
      %2198 = vmatpush1.msra.mxu0 %v2097
      %2199 = vmatprep.subr.mxu0 0.0
      %2200 = vmatpush1.msra.mxu0 %v2098
      %2201 = vmatprep.subr.mxu0 0.0
      %2202 = vmatpush1.msra.mxu0 %v2099
      %2203 = vmatprep.subr.mxu0 0.0
      %2204 = vmatpush1.msra.mxu0 %v2100
      %2205 = vmatprep.subr.mxu0 0.0
      %2206 = vmatpush1.msra.mxu0 %v2101
      %2207 = vmatprep.subr.mxu0 0.0
      %2208 = vmatpush1.msra.mxu0 %v2102
      %2209 = vmatprep.subr.mxu0 0.0
      %2210 = vmatpush1.msra.mxu0 %v2103
      %2211 = vmatprep.subr.mxu0 0.0
      %2212 = vmatpush1.msra.mxu0 %v2104
      %2213 = vmatprep.mubr.f32.mxu0 %v1906
      %2214 = vmatmul.mubr.f32.gmra.mrb[0].mxu0 %v1903
      %v2215 = vpop.f32.mrb[0].mxu0
      %v2216 = vadd.f32 0.0, %v2215
      %v2217 = vpop.f32.mrb[0].mxu0
      %2218 = vmatprep.mubr.f32.mxu0 %v1913
      %2219 = vmatmul.mubr.f32.gmra.mrb[0].mxu0 %v1911
      %v2220 = vpop.f32.mrb[0].mxu0
      %v2221 = vadd.f32 0.0, %v2220
      %v2222 = vpop.f32.mrb[0].mxu0
      %2223 = vmatprep.mubr.f32.mxu0 %v1921
      %2224 = vmatmul.mubr.f32.gmra.mrb[0].mxu0 %v1918
      %v2225 = vpop.f32.mrb[0].mxu0
      %v2226 = vadd.f32 0.0, %v2225
      %v2227 = vpop.f32.mrb[0].mxu0
      %2228 = vmatprep.mubr.f32.mxu0 %v1928
      %2229 = vmatmul.mubr.f32.gmra.mrb[0].mxu0 %v1926
      %v2230 = vpop.f32.mrb[0].mxu0
      %v2231 = vadd.f32 0.0, %v2230
      %v2232 = vpop.f32.mrb[0].mxu0
      %2233 = vmatprep.mubr.f32.mxu0 %v1936
      %2234 = vmatmul.mubr.f32.gmra.mrb[0].mxu0 %v1933
      %v2235 = vpop.f32.mrb[0].mxu0
      %v2236 = vadd.f32 0.0, %v2235
      %v2237 = vpop.f32.mrb[0].mxu0
      %2238 = vmatprep.mubr.f32.mxu0 %v1943
      %2239 = vmatmul.mubr.f32.gmra.mrb[0].mxu0 %v1941
      %v2240 = vpop.f32.mrb[0].mxu0
      %v2241 = vadd.f32 0.0, %v2240
      %v2242 = vpop.f32.mrb[0].mxu0
      %2243 = vmatprep.mubr.f32.mxu0 %v1951
      %2244 = vmatmul.mubr.f32.gmra.mrb[0].mxu0 %v1948
      %v2245 = vpop.f32.mrb[0].mxu0
      %v2246 = vadd.f32 0.0, %v2245
      %v2247 = vpop.f32.mrb[0].mxu0
      %2248 = vmatprep.mubr.f32.mxu0 %v1958
      %2249 = vmatmul.mubr.f32.gmra.mrb[0].mxu0 %v1956
      %v2250 = vpop.f32.mrb[0].mxu0
      %v2251 = vadd.f32 0.0, %v2250
      %v2252 = vpop.f32.mrb[0].mxu0
      %2253 = vmatprep.mubr.f32.mxu0 %v1966
      %2254 = vmatmul.mubr.f32.gmra.mrb[0].mxu0 %v1963
      %v2255 = vpop.f32.mrb[0].mxu0
      %v2256 = vadd.f32 0.0, %v2255
      %v2257 = vpop.f32.mrb[0].mxu0
      %2258 = vmatprep.mubr.f32.mxu0 %v1973
      %2259 = vmatmul.mubr.f32.gmra.mrb[0].mxu0 %v1971
      %v2260 = vpop.f32.mrb[0].mxu0
      %v2261 = vadd.f32 0.0, %v2260
      %v2262 = vpop.f32.mrb[0].mxu0
      %2263 = vmatprep.mubr.f32.mxu0 %v1981
      %2264 = vmatmul.mubr.f32.gmra.mrb[0].mxu0 %v1978
      %v2265 = vpop.f32.mrb[0].mxu0
      %v2266 = vadd.f32 0.0, %v2265
      %v2267 = vpop.f32.mrb[0].mxu0
      %2268 = vmatprep.mubr.f32.mxu0 %v1988
      %2269 = vmatmul.mubr.f32.gmra.mrb[0].mxu0 %v1986
      %v2270 = vpop.f32.mrb[0].mxu0
      %v2271 = vadd.f32 0.0, %v2270
      %v2272 = vpop.f32.mrb[0].mxu0
      %2273 = vmatprep.mubr.f32.mxu0 %v1996
      %2274 = vmatmul.mubr.f32.gmra.mrb[0].mxu0 %v1993
      %v2275 = vpop.f32.mrb[0].mxu0
      %v2276 = vadd.f32 0.0, %v2275
      %v2277 = vpop.f32.mrb[0].mxu0
      %2278 = vmatprep.mubr.f32.mxu0 %v2003
      %2279 = vmatmul.mubr.f32.gmra.mrb[0].mxu0 %v2001
      %v2280 = vpop.f32.mrb[0].mxu0
      %v2281 = vadd.f32 0.0, %v2280
      %v2282 = vpop.f32.mrb[0].mxu0
      %2283 = vmatprep.mubr.f32.mxu0 %v2011
      %2284 = vmatmul.mubr.f32.gmra.mrb[0].mxu0 %v2008
      %v2285 = vpop.f32.mrb[0].mxu0
      %v2286 = vadd.f32 0.0, %v2285
      %v2287 = vpop.f32.mrb[0].mxu0
      %2288 = vmatprep.mubr.f32.mxu0 %v2018
      %2289 = vmatmul.mubr.f32.gmra.mrb[0].mxu0 %v2016
      %v2290 = vpop.f32.mrb[0].mxu0
      %v2291 = vadd.f32 0.0, %v2290
      %v2292 = vpop.f32.mrb[0].mxu0
      %2293 = vmatprep.mubr.f32.mxu0 %v2026
      %2294 = vmatmul.mubr.f32.gmra.mrb[0].mxu0 %v2023
      %v2295 = vpop.f32.mrb[0].mxu0
      %v2296 = vadd.f32 0.0, %v2295
      %v2297 = vpop.f32.mrb[0].mxu0
      %2298 = vmatprep.mubr.f32.mxu0 %v2033
      %2299 = vmatmul.mubr.f32.gmra.mrb[0].mxu0 %v2031
      %v2300 = vpop.f32.mrb[0].mxu0
      %v2301 = vadd.f32 0.0, %v2300
      %v2302 = vpop.f32.mrb[0].mxu0
      %2303 = vdwg.mxu0
      %2304 = vmatprep.subr.mxu0 0.0
      %2305 = vmatpush1.msra.mxu0 %v2105
      %2306 = vmatprep.subr.mxu0 0.0
      %2307 = vmatpush1.msra.mxu0 %v2106
      %2308 = vmatprep.subr.mxu0 0.0
      %2309 = vmatpush1.msra.mxu0 %v2107
      %2310 = vmatprep.subr.mxu0 0.0
      %2311 = vmatpush1.msra.mxu0 %v2108
      %2312 = vmatprep.subr.mxu0 0.0
      %2313 = vmatpush1.msra.mxu0 %v2109
      %2314 = vmatprep.subr.mxu0 0.0
      %2315 = vmatpush1.msra.mxu0 %v2110
      %2316 = vmatprep.subr.mxu0 0.0
      %2317 = vmatpush1.msra.mxu0 %v2111
      %2318 = vmatprep.subr.mxu0 0.0
      %2319 = vmatpush1.msra.mxu0 %v2112
      %2320 = vmatprep.subr.mxu0 0.0
      %2321 = vmatpush1.msra.mxu0 0.0
      %2322 = vmatprep.subr.mxu0 0.0
      %2323 = vmatpush1.msra.mxu0 0.0
      %2324 = vmatprep.subr.mxu0 0.0
      %2325 = vmatpush1.msra.mxu0 0.0
      %2326 = vmatprep.subr.mxu0 0.0
      %2327 = vmatpush1.msra.mxu0 0.0
      %2328 = vmatprep.subr.mxu0 0.0
      %2329 = vmatpush1.msra.mxu0 0.0
      %2330 = vmatprep.subr.mxu0 0.0
      %2331 = vmatpush1.msra.mxu0 0.0
      %2332 = vmatprep.subr.mxu0 0.0
      %2333 = vmatpush1.msra.mxu0 0.0
      %2334 = vmatprep.subr.mxu0 0.0
      %2335 = vmatpush1.msra.mxu0 0.0
      %2336 = vmatprep.subr.mxu0 0.0
      %2337 = vmatpush1.msra.mxu0 0.0
      %2338 = vmatprep.subr.mxu0 0.0
      %2339 = vmatpush1.msra.mxu0 0.0
      %2340 = vmatprep.subr.mxu0 0.0
      %2341 = vmatpush1.msra.mxu0 0.0
      %2342 = vmatprep.subr.mxu0 0.0
      %2343 = vmatpush1.msra.mxu0 0.0
      %2344 = vmatprep.subr.mxu0 0.0
      %2345 = vmatpush1.msra.mxu0 0.0
      %2346 = vmatprep.subr.mxu0 0.0
      %2347 = vmatpush1.msra.mxu0 0.0
      %2348 = vmatprep.subr.mxu0 0.0
      %2349 = vmatpush1.msra.mxu0 0.0
      %2350 = vmatprep.subr.mxu0 0.0
      %2351 = vmatpush1.msra.mxu0 0.0
      %2352 = vmatprep.subr.mxu0 0.0
      %2353 = vmatpush1.msra.mxu0 0.0
      %2354 = vmatprep.subr.mxu0 0.0
      %2355 = vmatpush1.msra.mxu0 0.0
      %2356 = vmatprep.subr.mxu0 0.0
      %2357 = vmatpush1.msra.mxu0 0.0
      %2358 = vmatprep.subr.mxu0 0.0
      %2359 = vmatpush1.msra.mxu0 0.0
      %2360 = vmatprep.subr.mxu0 0.0
      %2361 = vmatpush1.msra.mxu0 0.0
      %2362 = vmatprep.subr.mxu0 0.0
      %2363 = vmatpush1.msra.mxu0 0.0
      %2364 = vmatprep.subr.mxu0 0.0
      %2365 = vmatpush1.msra.mxu0 0.0
      %2366 = vmatprep.subr.mxu0 0.0
      %2367 = vmatpush1.msra.mxu0 0.0
      %2368 = vmatprep.mubr.f32.mxu0 0.0
      %2369 = vmatmul.mubr.f32.gmra.mrb[0].mxu0 %v2113
      %v2370 = vpop.f32.mrb[0].mxu0
      %v2371 = vadd.f32 %v2216, %v2370
      %v2372 = vpop.f32.mrb[0].mxu0
      %2373 = vmatprep.mubr.f32.mxu0 0.0
      %2374 = vmatmul.mubr.f32.gmra.mrb[0].mxu0 %v2115
      %v2375 = vpop.f32.mrb[0].mxu0
      %v2376 = vadd.f32 %v2221, %v2375
      %v2377 = vpop.f32.mrb[0].mxu0
      %2378 = vmatprep.mubr.f32.mxu0 0.0
      %2379 = vmatmul.mubr.f32.gmra.mrb[0].mxu0 %v2117
      %v2380 = vpop.f32.mrb[0].mxu0
      %v2381 = vadd.f32 %v2226, %v2380
      %v2382 = vpop.f32.mrb[0].mxu0
      %2383 = vmatprep.mubr.f32.mxu0 0.0
      %2384 = vmatmul.mubr.f32.gmra.mrb[0].mxu0 %v2119
      %v2385 = vpop.f32.mrb[0].mxu0
      %v2386 = vadd.f32 %v2231, %v2385
      %v2387 = vpop.f32.mrb[0].mxu0
      %2388 = vmatprep.mubr.f32.mxu0 0.0
      %2389 = vmatmul.mubr.f32.gmra.mrb[0].mxu0 %v2121
      %v2390 = vpop.f32.mrb[0].mxu0
      %v2391 = vadd.f32 %v2236, %v2390
      %v2392 = vpop.f32.mrb[0].mxu0
      %2393 = vmatprep.mubr.f32.mxu0 0.0
      %2394 = vmatmul.mubr.f32.gmra.mrb[0].mxu0 %v2123
      %v2395 = vpop.f32.mrb[0].mxu0
      %v2396 = vadd.f32 %v2241, %v2395
      %v2397 = vpop.f32.mrb[0].mxu0
      %2398 = vmatprep.mubr.f32.mxu0 0.0
      %2399 = vmatmul.mubr.f32.gmra.mrb[0].mxu0 %v2125
      %v2400 = vpop.f32.mrb[0].mxu0
      %v2401 = vadd.f32 %v2246, %v2400
      %v2402 = vpop.f32.mrb[0].mxu0
      %2403 = vmatprep.mubr.f32.mxu0 0.0
      %2404 = vmatmul.mubr.f32.gmra.mrb[0].mxu0 %v2127
      %v2405 = vpop.f32.mrb[0].mxu0
      %v2406 = vadd.f32 %v2251, %v2405
      %v2407 = vpop.f32.mrb[0].mxu0
      %2408 = vmatprep.mubr.f32.mxu0 0.0
      %2409 = vmatmul.mubr.f32.gmra.mrb[0].mxu0 %v2129
      %v2410 = vpop.f32.mrb[0].mxu0
      %v2411 = vadd.f32 %v2256, %v2410
      %v2412 = vpop.f32.mrb[0].mxu0
      %2413 = vmatprep.mubr.f32.mxu0 0.0
      %2414 = vmatmul.mubr.f32.gmra.mrb[0].mxu0 %v2131
      %v2415 = vpop.f32.mrb[0].mxu0
      %v2416 = vadd.f32 %v2261, %v2415
      %v2417 = vpop.f32.mrb[0].mxu0
      %2418 = vmatprep.mubr.f32.mxu0 0.0
      %2419 = vmatmul.mubr.f32.gmra.mrb[0].mxu0 %v2133
      %v2420 = vpop.f32.mrb[0].mxu0
      %v2421 = vadd.f32 %v2266, %v2420
      %v2422 = vpop.f32.mrb[0].mxu0
      %2423 = vmatprep.mubr.f32.mxu0 0.0
      %2424 = vmatmul.mubr.f32.gmra.mrb[0].mxu0 %v2135
      %v2425 = vpop.f32.mrb[0].mxu0
      %v2426 = vadd.f32 %v2271, %v2425
      %v2427 = vpop.f32.mrb[0].mxu0
      %2428 = vmatprep.mubr.f32.mxu0 0.0
      %2429 = vmatmul.mubr.f32.gmra.mrb[0].mxu0 %v2137
      %v2430 = vpop.f32.mrb[0].mxu0
      %v2431 = vadd.f32 %v2276, %v2430
      %v2432 = vpop.f32.mrb[0].mxu0
      %2433 = vmatprep.mubr.f32.mxu0 0.0
      %2434 = vmatmul.mubr.f32.gmra.mrb[0].mxu0 %v2139
      %v2435 = vpop.f32.mrb[0].mxu0
      %v2436 = vadd.f32 %v2281, %v2435
      %v2437 = vpop.f32.mrb[0].mxu0
      %2438 = vmatprep.mubr.f32.mxu0 0.0
      %2439 = vmatmul.mubr.f32.gmra.mrb[0].mxu0 %v2141
      %v2440 = vpop.f32.mrb[0].mxu0
      %v2441 = vadd.f32 %v2286, %v2440
      %v2442 = vpop.f32.mrb[0].mxu0
      %2443 = vmatprep.mubr.f32.mxu0 0.0
      %2444 = vmatmul.mubr.f32.gmra.mrb[0].mxu0 %v2143
      %v2445 = vpop.f32.mrb[0].mxu0
      %v2446 = vadd.f32 %v2291, %v2445
      %v2447 = vpop.f32.mrb[0].mxu0
      %2448 = vmatprep.mubr.f32.mxu0 0.0
      %2449 = vmatmul.mubr.f32.gmra.mrb[0].mxu0 %v2145
      %v2450 = vpop.f32.mrb[0].mxu0
      %v2451 = vadd.f32 %v2296, %v2450
      %v2452 = vpop.f32.mrb[0].mxu0
      %2453 = vmatprep.mubr.f32.mxu0 0.0
      %2454 = vmatmul.mubr.f32.gmra.mrb[0].mxu0 %v2147
      %v2455 = vpop.f32.mrb[0].mxu0
      %v2456 = vadd.f32 %v2301, %v2455
      %v2457 = vpop.f32.mrb[0].mxu0
      %2458 = vdwg.mxu0
      %v2459 = vadd.f32 %v1882, %v2371
      %v2460 = vadd.f32 %v1883, %v2376
      %v2461 = vadd.f32 %v1884, %v2381
      %v2462 = vadd.f32 %v1885, %v2386
      %v2463 = vadd.f32 %v1886, %v2391
      %v2464 = vadd.f32 %v1887, %v2396
      %v2465 = vadd.f32 %v1888, %v2401
      %v2466 = vadd.f32 %v1889, %v2406
      %v2467 = vadd.f32 %v1890, %v2411
      %v2468 = vadd.f32 %v1891, %v2416
      %v2469 = vadd.f32 %v1892, %v2421
      %v2470 = vadd.f32 %v1893, %v2426
      %v2471 = vadd.f32 %v1894, %v2431
      %v2472 = vadd.f32 %v1895, %v2436
      %v2473 = vadd.f32 %v1896, %v2441
      %v2474 = vadd.f32 %v1897, %v2446
      %v2475 = vadd.f32 %v1898, %v2451
      %v2476 = vadd.f32 %v1899, %v2456
      %vm2477 = vcmask 1043456
      %v2478 = vrot.slane %v215, 4
      %v2479 = vrot.slane %v218, 4
      %v2480 = vsel %vm2477, %v2478, %v2479
      %v2481 = vrot.slane %v216, 4
      %v2482 = vrot.slane %v219, 4
      %v2483 = vsel %vm2477, %v2481, %v2482
      %v2484 = vrot.slane %v217, 4
      %v2485 = vrot.slane %v220, 4
      %v2486 = vsel %vm2477, %v2484, %v2485
      %v2487 = vrot.slane %v221, 4
      %v2488 = vsel %vm2477, %v2479, %v2487
      %v2489 = vrot.slane %v222, 4
      %v2490 = vsel %vm2477, %v2482, %v2489
      %v2491 = vrot.slane %v223, 4
      %v2492 = vsel %vm2477, %v2485, %v2491
      %v2493 = vrot.slane %v224, 4
      %v2494 = vrot.slane %v227, 4
      %v2495 = vsel %vm2477, %v2493, %v2494
      %v2496 = vrot.slane %v225, 4
      %v2497 = vrot.slane %v228, 4
      %v2498 = vsel %vm2477, %v2496, %v2497
      %v2499 = vrot.slane %v226, 4
      %v2500 = vrot.slane %v229, 4
      %v2501 = vsel %vm2477, %v2499, %v2500
      %v2502 = vrot.slane %v230, 4
      %v2503 = vsel %vm2477, %v2494, %v2502
      %v2504 = vrot.slane %v231, 4
      %v2505 = vsel %vm2477, %v2497, %v2504
      %v2506 = vrot.slane %v232, 4
      %v2507 = vsel %vm2477, %v2500, %v2506
      %v2508 = vrot.slane %v233, 4
      %v2509 = vrot.slane %v236, 4
      %v2510 = vsel %vm2477, %v2508, %v2509
      %v2511 = vrot.slane %v234, 4
      %v2512 = vrot.slane %v237, 4
      %v2513 = vsel %vm2477, %v2511, %v2512
      %v2514 = vrot.slane %v235, 4
      %v2515 = vrot.slane %v238, 4
      %v2516 = vsel %vm2477, %v2514, %v2515
      %v2517 = vrot.slane %v239, 4
      %v2518 = vsel %vm2477, %v2509, %v2517
      %v2519 = vrot.slane %v240, 4
      %v2520 = vsel %vm2477, %v2512, %v2519
      %v2521 = vrot.slane %v241, 4
      %v2522 = vsel %vm2477, %v2515, %v2521
      %v2523 = vrot.slane %v242, 4
      %v2524 = vrot.slane %v245, 4
      %v2525 = vsel %vm2477, %v2523, %v2524
      %v2526 = vrot.slane %v243, 4
      %v2527 = vrot.slane %v246, 4
      %v2528 = vsel %vm2477, %v2526, %v2527
      %v2529 = vrot.slane %v244, 4
      %v2530 = vrot.slane %v247, 4
      %v2531 = vsel %vm2477, %v2529, %v2530
      %v2532 = vrot.slane %v248, 4
      %v2533 = vsel %vm2477, %v2524, %v2532
      %v2534 = vrot.slane %v249, 4
      %v2535 = vsel %vm2477, %v2527, %v2534
      %v2536 = vrot.slane %v250, 4
      %v2537 = vsel %vm2477, %v2530, %v2536
      %v2538 = vrot.slane %v251, 4
      %v2539 = vrot.slane %v254, 4
      %v2540 = vsel %vm2477, %v2538, %v2539
      %v2541 = vrot.slane %v252, 4
      %v2542 = vrot.slane %v255, 4
      %v2543 = vsel %vm2477, %v2541, %v2542
      %v2544 = vrot.slane %v253, 4
      %v2545 = vrot.slane %v256, 4
      %v2546 = vsel %vm2477, %v2544, %v2545
      %v2547 = vrot.slane %v257, 4
      %v2548 = vsel %vm2477, %v2539, %v2547
      %v2549 = vrot.slane %v258, 4
      %v2550 = vsel %vm2477, %v2542, %v2549
      %v2551 = vrot.slane %v259, 4
      %v2552 = vsel %vm2477, %v2545, %v2551
      %v2553 = vrot.slane %v260, 4
      %v2554 = vrot.slane %v263, 4
      %v2555 = vsel %vm2477, %v2553, %v2554
      %v2556 = vrot.slane %v261, 4
      %v2557 = vrot.slane %v264, 4
      %v2558 = vsel %vm2477, %v2556, %v2557
      %v2559 = vrot.slane %v262, 4
      %v2560 = vrot.slane %v265, 4
      %v2561 = vsel %vm2477, %v2559, %v2560
      %v2562 = vrot.slane %v266, 4
      %v2563 = vsel %vm2477, %v2554, %v2562
      %v2564 = vrot.slane %v267, 4
      %v2565 = vsel %vm2477, %v2557, %v2564
      %v2566 = vrot.slane %v268, 4
      %v2567 = vsel %vm2477, %v2560, %v2566
      %v2568 = vrot.slane %v269, 4
      %v2569 = vrot.slane %v272, 4
      %v2570 = vsel %vm2477, %v2568, %v2569
      %v2571 = vrot.slane %v270, 4
      %v2572 = vrot.slane %v273, 4
      %v2573 = vsel %vm2477, %v2571, %v2572
      %v2574 = vrot.slane %v271, 4
      %v2575 = vrot.slane %v274, 4
      %v2576 = vsel %vm2477, %v2574, %v2575
      %v2577 = vrot.slane %v275, 4
      %v2578 = vsel %vm2477, %v2569, %v2577
      %v2579 = vrot.slane %v276, 4
      %v2580 = vsel %vm2477, %v2572, %v2579
      %v2581 = vrot.slane %v277, 4
      %v2582 = vsel %vm2477, %v2575, %v2581
      %v2583 = vrot.slane %v278, 4
      %v2584 = vrot.slane %v281, 4
      %v2585 = vsel %vm2477, %v2583, %v2584
      %v2586 = vrot.slane %v279, 4
      %v2587 = vrot.slane %v282, 4
      %v2588 = vsel %vm2477, %v2586, %v2587
      %v2589 = vrot.slane %v280, 4
      %v2590 = vrot.slane %v283, 4
      %v2591 = vsel %vm2477, %v2589, %v2590
      %v2592 = vrot.slane %v284, 4
      %v2593 = vsel %vm2477, %v2584, %v2592
      %v2594 = vrot.slane %v285, 4
      %v2595 = vsel %vm2477, %v2587, %v2594
      %v2596 = vrot.slane %v286, 4
      %v2597 = vsel %vm2477, %v2590, %v2596
      %v2598 = vrot.slane %v287, 4
      %v2599 = vrot.slane %v290, 4
      %v2600 = vsel %vm2477, %v2598, %v2599
      %v2601 = vrot.slane %v288, 4
      %v2602 = vrot.slane %v291, 4
      %v2603 = vsel %vm2477, %v2601, %v2602
      %v2604 = vrot.slane %v289, 4
      %v2605 = vrot.slane %v292, 4
      %v2606 = vsel %vm2477, %v2604, %v2605
      %v2607 = vrot.slane %v293, 4
      %v2608 = vsel %vm2477, %v2599, %v2607
      %v2609 = vrot.slane %v294, 4
      %v2610 = vsel %vm2477, %v2602, %v2609
      %v2611 = vrot.slane %v295, 4
      %v2612 = vsel %vm2477, %v2605, %v2611
      %s2649 = scalar_lea.vmem %s1, 1280
      %v2650 = vld [vmem:[%s2649] sm:$0xff]
      %v2651 = vld [vmem:[%s2649 + $0x8] sm:$0xff]
      %v2652 = vld [vmem:[%s2649 + $0x10] sm:$0xff]
      %v2653 = vld [vmem:[%s2649 + $0x18] sm:$0xff]
      %v2654 = vld [vmem:[%s2649 + $0x20] sm:$0xff]
      %v2655 = vld [vmem:[%s2649 + $0x28] sm:$0xff]
      %v2656 = vld [vmem:[%s2649 + $0x30] sm:$0xff]
      %v2657 = vld [vmem:[%s2649 + $0x38] sm:$0xff]
      %v2658 = vld [vmem:[%s2649 + $0x40] sm:$0xff]
      %v2659 = vld [vmem:[%s2649 + $0x48] sm:$0xff]
      %v2660 = vld [vmem:[%s2649 + $0x50] sm:$0xff]
      %v2661 = vld [vmem:[%s2649 + $0x58] sm:$0xff]
      %v2662 = vld [vmem:[%s2649 + $0x60] sm:$0xff]
      %v2663 = vld [vmem:[%s2649 + $0x68] sm:$0xff]
      %v2664 = vld [vmem:[%s2649 + $0x70] sm:$0xff]
      %v2665 = vld [vmem:[%s2649 + $0x78] sm:$0xff]
      %v2666 = vld [vmem:[%s2649 + $0x80] sm:$0xff]
      %v2667 = vld [vmem:[%s2649 + $0x88] sm:$0xff]
      %v2668 = vld [vmem:[%s2649 + $0x90] sm:$0xff]
      %v2669 = vld [vmem:[%s2649 + $0x98] sm:$0xff]
      %v2670 = vld [vmem:[%s2649 + $0xa0] sm:$0xff]
      %v2671 = vld [vmem:[%s2649 + $0xa8] sm:$0xff]
      %v2672 = vld [vmem:[%s2649 + $0xb0] sm:$0xff]
      %v2673 = vld [vmem:[%s2649 + $0xb8] sm:$0xff]
      %v2674 = vld [vmem:[%s2649 + $0xc0] sm:$0xff]
      %v2675 = vld [vmem:[%s2649 + $0xc8] sm:$0xff]
      %v2676 = vld [vmem:[%s2649 + $0xd0] sm:$0xff]
      %v2677 = vld [vmem:[%s2649 + $0xd8] sm:$0xff]
      %v2678 = vld [vmem:[%s2649 + $0xe0] sm:$0xff]
      %v2679 = vld [vmem:[%s2649 + $0xe8] sm:$0xff]
      %v2680 = vld [vmem:[%s2649 + $0xf0] sm:$0xff]
      %v2681 = vld [vmem:[%s2649 + $0xf8] sm:$0xff]
      %v2682 = vld [vmem:[%s2649 + $0x100] sm:$0xff]
      %v2683 = vld [vmem:[%s2649 + $0x108] sm:$0xff]
      %v2684 = vld [vmem:[%s2649 + $0x110] sm:$0xff]
      %v2685 = vld [vmem:[%s2649 + $0x118] sm:$0xff]
      %v2686 = vld [vmem:[%s2649 + $0x120] sm:$0xff]
      %v2687 = vld [vmem:[%s2649 + $0x128] sm:$0xff]
      %v2688 = vld [vmem:[%s2649 + $0x130] sm:$0xff]
      %v2689 = vld [vmem:[%s2649 + $0x138] sm:$0xff]
      %v2690 = vsel %vm630, %v2486, 0
      %v2692 = vsel %vm630, %v2492, 0
      %v2694 = vsel %vm630, %v2501, 0
      %v2696 = vsel %vm630, %v2507, 0
      %v2698 = vsel %vm630, %v2516, 0
      %v2700 = vsel %vm630, %v2522, 0
      %v2702 = vsel %vm630, %v2531, 0
      %v2704 = vsel %vm630, %v2537, 0
      %v2706 = vsel %vm630, %v2546, 0
      %v2708 = vsel %vm630, %v2552, 0
      %v2710 = vsel %vm630, %v2561, 0
      %v2712 = vsel %vm630, %v2567, 0
      %v2714 = vsel %vm630, %v2576, 0
      %v2716 = vsel %vm630, %v2582, 0
      %v2718 = vsel %vm630, %v2591, 0
      %v2720 = vsel %vm630, %v2597, 0
      %v2722 = vsel %vm630, %v2606, 0
      %v2724 = vsel %vm630, %v2612, 0
      %2726 = vmatprep.subr.mxu0 0.0
      %2727 = vmatpush1.msra.mxu0 %v2650
      %2728 = vmatprep.subr.mxu0 0.0
      %2729 = vmatpush1.msra.mxu0 %v2651
      %2730 = vmatprep.subr.mxu0 0.0
      %2731 = vmatpush1.msra.mxu0 %v2652
      %2732 = vmatprep.subr.mxu0 0.0
      %2733 = vmatpush1.msra.mxu0 %v2653
      %2734 = vmatprep.subr.mxu0 0.0
      %2735 = vmatpush1.msra.mxu0 %v2654
      %2736 = vmatprep.subr.mxu0 0.0
      %2737 = vmatpush1.msra.mxu0 %v2655
      %2738 = vmatprep.subr.mxu0 0.0
      %2739 = vmatpush1.msra.mxu0 %v2656
      %2740 = vmatprep.subr.mxu0 0.0
      %2741 = vmatpush1.msra.mxu0 %v2657
      %2742 = vmatprep.subr.mxu0 0.0
      %2743 = vmatpush1.msra.mxu0 %v2658
      %2744 = vmatprep.subr.mxu0 0.0
      %2745 = vmatpush1.msra.mxu0 %v2659
      %2746 = vmatprep.subr.mxu0 0.0
      %2747 = vmatpush1.msra.mxu0 %v2660
      %2748 = vmatprep.subr.mxu0 0.0
      %2749 = vmatpush1.msra.mxu0 %v2661
      %2750 = vmatprep.subr.mxu0 0.0
      %2751 = vmatpush1.msra.mxu0 %v2662
      %2752 = vmatprep.subr.mxu0 0.0
      %2753 = vmatpush1.msra.mxu0 %v2663
      %2754 = vmatprep.subr.mxu0 0.0
      %2755 = vmatpush1.msra.mxu0 %v2664
      %2756 = vmatprep.subr.mxu0 0.0
      %2757 = vmatpush1.msra.mxu0 %v2665
      %2758 = vmatprep.subr.mxu0 0.0
      %2759 = vmatpush1.msra.mxu0 %v2666
      %2760 = vmatprep.subr.mxu0 0.0
      %2761 = vmatpush1.msra.mxu0 %v2667
      %2762 = vmatprep.subr.mxu0 0.0
      %2763 = vmatpush1.msra.mxu0 %v2668
      %2764 = vmatprep.subr.mxu0 0.0
      %2765 = vmatpush1.msra.mxu0 %v2669
      %2766 = vmatprep.subr.mxu0 0.0
      %2767 = vmatpush1.msra.mxu0 %v2670
      %2768 = vmatprep.subr.mxu0 0.0
      %2769 = vmatpush1.msra.mxu0 %v2671
      %2770 = vmatprep.subr.mxu0 0.0
      %2771 = vmatpush1.msra.mxu0 %v2672
      %2772 = vmatprep.subr.mxu0 0.0
      %2773 = vmatpush1.msra.mxu0 %v2673
      %2774 = vmatprep.subr.mxu0 0.0
      %2775 = vmatpush1.msra.mxu0 %v2674
      %2776 = vmatprep.subr.mxu0 0.0
      %2777 = vmatpush1.msra.mxu0 %v2675
      %2778 = vmatprep.subr.mxu0 0.0
      %2779 = vmatpush1.msra.mxu0 %v2676
      %2780 = vmatprep.subr.mxu0 0.0
      %2781 = vmatpush1.msra.mxu0 %v2677
      %2782 = vmatprep.subr.mxu0 0.0
      %2783 = vmatpush1.msra.mxu0 %v2678
      %2784 = vmatprep.subr.mxu0 0.0
      %2785 = vmatpush1.msra.mxu0 %v2679
      %2786 = vmatprep.subr.mxu0 0.0
      %2787 = vmatpush1.msra.mxu0 %v2680
      %2788 = vmatprep.subr.mxu0 0.0
      %2789 = vmatpush1.msra.mxu0 %v2681
      %2790 = vmatprep.mubr.f32.mxu0 %v2483
      %2791 = vmatmul.mubr.f32.gmra.mrb[0].mxu0 %v2480
      %v2792 = vpop.f32.mrb[0].mxu0
      %v2793 = vadd.f32 0.0, %v2792
      %v2794 = vpop.f32.mrb[0].mxu0
      %2795 = vmatprep.mubr.f32.mxu0 %v2490
      %2796 = vmatmul.mubr.f32.gmra.mrb[0].mxu0 %v2488
      %v2797 = vpop.f32.mrb[0].mxu0
      %v2798 = vadd.f32 0.0, %v2797
      %v2799 = vpop.f32.mrb[0].mxu0
      %2800 = vmatprep.mubr.f32.mxu0 %v2498
      %2801 = vmatmul.mubr.f32.gmra.mrb[0].mxu0 %v2495
      %v2802 = vpop.f32.mrb[0].mxu0
      %v2803 = vadd.f32 0.0, %v2802
      %v2804 = vpop.f32.mrb[0].mxu0
      %2805 = vmatprep.mubr.f32.mxu0 %v2505
      %2806 = vmatmul.mubr.f32.gmra.mrb[0].mxu0 %v2503
      %v2807 = vpop.f32.mrb[0].mxu0
      %v2808 = vadd.f32 0.0, %v2807
      %v2809 = vpop.f32.mrb[0].mxu0
      %2810 = vmatprep.mubr.f32.mxu0 %v2513
      %2811 = vmatmul.mubr.f32.gmra.mrb[0].mxu0 %v2510
      %v2812 = vpop.f32.mrb[0].mxu0
      %v2813 = vadd.f32 0.0, %v2812
      %v2814 = vpop.f32.mrb[0].mxu0
      %2815 = vmatprep.mubr.f32.mxu0 %v2520
      %2816 = vmatmul.mubr.f32.gmra.mrb[0].mxu0 %v2518
      %v2817 = vpop.f32.mrb[0].mxu0
      %v2818 = vadd.f32 0.0, %v2817
      %v2819 = vpop.f32.mrb[0].mxu0
      %2820 = vmatprep.mubr.f32.mxu0 %v2528
      %2821 = vmatmul.mubr.f32.gmra.mrb[0].mxu0 %v2525
      %v2822 = vpop.f32.mrb[0].mxu0
      %v2823 = vadd.f32 0.0, %v2822
      %v2824 = vpop.f32.mrb[0].mxu0
      %2825 = vmatprep.mubr.f32.mxu0 %v2535
      %2826 = vmatmul.mubr.f32.gmra.mrb[0].mxu0 %v2533
      %v2827 = vpop.f32.mrb[0].mxu0
      %v2828 = vadd.f32 0.0, %v2827
      %v2829 = vpop.f32.mrb[0].mxu0
      %2830 = vmatprep.mubr.f32.mxu0 %v2543
      %2831 = vmatmul.mubr.f32.gmra.mrb[0].mxu0 %v2540
      %v2832 = vpop.f32.mrb[0].mxu0
      %v2833 = vadd.f32 0.0, %v2832
      %v2834 = vpop.f32.mrb[0].mxu0
      %2835 = vmatprep.mubr.f32.mxu0 %v2550
      %2836 = vmatmul.mubr.f32.gmra.mrb[0].mxu0 %v2548
      %v2837 = vpop.f32.mrb[0].mxu0
      %v2838 = vadd.f32 0.0, %v2837
      %v2839 = vpop.f32.mrb[0].mxu0
      %2840 = vmatprep.mubr.f32.mxu0 %v2558
      %2841 = vmatmul.mubr.f32.gmra.mrb[0].mxu0 %v2555
      %v2842 = vpop.f32.mrb[0].mxu0
      %v2843 = vadd.f32 0.0, %v2842
      %v2844 = vpop.f32.mrb[0].mxu0
      %2845 = vmatprep.mubr.f32.mxu0 %v2565
      %2846 = vmatmul.mubr.f32.gmra.mrb[0].mxu0 %v2563
      %v2847 = vpop.f32.mrb[0].mxu0
      %v2848 = vadd.f32 0.0, %v2847
      %v2849 = vpop.f32.mrb[0].mxu0
      %2850 = vmatprep.mubr.f32.mxu0 %v2573
      %2851 = vmatmul.mubr.f32.gmra.mrb[0].mxu0 %v2570
      %v2852 = vpop.f32.mrb[0].mxu0
      %v2853 = vadd.f32 0.0, %v2852
      %v2854 = vpop.f32.mrb[0].mxu0
      %2855 = vmatprep.mubr.f32.mxu0 %v2580
      %2856 = vmatmul.mubr.f32.gmra.mrb[0].mxu0 %v2578
      %v2857 = vpop.f32.mrb[0].mxu0
      %v2858 = vadd.f32 0.0, %v2857
      %v2859 = vpop.f32.mrb[0].mxu0
      %2860 = vmatprep.mubr.f32.mxu0 %v2588
      %2861 = vmatmul.mubr.f32.gmra.mrb[0].mxu0 %v2585
      %v2862 = vpop.f32.mrb[0].mxu0
      %v2863 = vadd.f32 0.0, %v2862
      %v2864 = vpop.f32.mrb[0].mxu0
      %2865 = vmatprep.mubr.f32.mxu0 %v2595
      %2866 = vmatmul.mubr.f32.gmra.mrb[0].mxu0 %v2593
      %v2867 = vpop.f32.mrb[0].mxu0
      %v2868 = vadd.f32 0.0, %v2867
      %v2869 = vpop.f32.mrb[0].mxu0
      %2870 = vmatprep.mubr.f32.mxu0 %v2603
      %2871 = vmatmul.mubr.f32.gmra.mrb[0].mxu0 %v2600
      %v2872 = vpop.f32.mrb[0].mxu0
      %v2873 = vadd.f32 0.0, %v2872
      %v2874 = vpop.f32.mrb[0].mxu0
      %2875 = vmatprep.mubr.f32.mxu0 %v2610
      %2876 = vmatmul.mubr.f32.gmra.mrb[0].mxu0 %v2608
      %v2877 = vpop.f32.mrb[0].mxu0
      %v2878 = vadd.f32 0.0, %v2877
      %v2879 = vpop.f32.mrb[0].mxu0
      %2880 = vdwg.mxu0
      %2881 = vmatprep.subr.mxu0 0.0
      %2882 = vmatpush1.msra.mxu0 %v2682
      %2883 = vmatprep.subr.mxu0 0.0
      %2884 = vmatpush1.msra.mxu0 %v2683
      %2885 = vmatprep.subr.mxu0 0.0
      %2886 = vmatpush1.msra.mxu0 %v2684
      %2887 = vmatprep.subr.mxu0 0.0
      %2888 = vmatpush1.msra.mxu0 %v2685
      %2889 = vmatprep.subr.mxu0 0.0
      %2890 = vmatpush1.msra.mxu0 %v2686
      %2891 = vmatprep.subr.mxu0 0.0
      %2892 = vmatpush1.msra.mxu0 %v2687
      %2893 = vmatprep.subr.mxu0 0.0
      %2894 = vmatpush1.msra.mxu0 %v2688
      %2895 = vmatprep.subr.mxu0 0.0
      %2896 = vmatpush1.msra.mxu0 %v2689
      %2897 = vmatprep.subr.mxu0 0.0
      %2898 = vmatpush1.msra.mxu0 0.0
      %2899 = vmatprep.subr.mxu0 0.0
      %2900 = vmatpush1.msra.mxu0 0.0
      %2901 = vmatprep.subr.mxu0 0.0
      %2902 = vmatpush1.msra.mxu0 0.0
      %2903 = vmatprep.subr.mxu0 0.0
      %2904 = vmatpush1.msra.mxu0 0.0
      %2905 = vmatprep.subr.mxu0 0.0
      %2906 = vmatpush1.msra.mxu0 0.0
      %2907 = vmatprep.subr.mxu0 0.0
      %2908 = vmatpush1.msra.mxu0 0.0
      %2909 = vmatprep.subr.mxu0 0.0
      %2910 = vmatpush1.msra.mxu0 0.0
      %2911 = vmatprep.subr.mxu0 0.0
      %2912 = vmatpush1.msra.mxu0 0.0
      %2913 = vmatprep.subr.mxu0 0.0
      %2914 = vmatpush1.msra.mxu0 0.0
      %2915 = vmatprep.subr.mxu0 0.0
      %2916 = vmatpush1.msra.mxu0 0.0
      %2917 = vmatprep.subr.mxu0 0.0
      %2918 = vmatpush1.msra.mxu0 0.0
      %2919 = vmatprep.subr.mxu0 0.0
      %2920 = vmatpush1.msra.mxu0 0.0
      %2921 = vmatprep.subr.mxu0 0.0
      %2922 = vmatpush1.msra.mxu0 0.0
      %2923 = vmatprep.subr.mxu0 0.0
      %2924 = vmatpush1.msra.mxu0 0.0
      %2925 = vmatprep.subr.mxu0 0.0
      %2926 = vmatpush1.msra.mxu0 0.0
      %2927 = vmatprep.subr.mxu0 0.0
      %2928 = vmatpush1.msra.mxu0 0.0
      %2929 = vmatprep.subr.mxu0 0.0
      %2930 = vmatpush1.msra.mxu0 0.0
      %2931 = vmatprep.subr.mxu0 0.0
      %2932 = vmatpush1.msra.mxu0 0.0
      %2933 = vmatprep.subr.mxu0 0.0
      %2934 = vmatpush1.msra.mxu0 0.0
      %2935 = vmatprep.subr.mxu0 0.0
      %2936 = vmatpush1.msra.mxu0 0.0
      %2937 = vmatprep.subr.mxu0 0.0
      %2938 = vmatpush1.msra.mxu0 0.0
      %2939 = vmatprep.subr.mxu0 0.0
      %2940 = vmatpush1.msra.mxu0 0.0
      %2941 = vmatprep.subr.mxu0 0.0
      %2942 = vmatpush1.msra.mxu0 0.0
      %2943 = vmatprep.subr.mxu0 0.0
      %2944 = vmatpush1.msra.mxu0 0.0
      %2945 = vmatprep.mubr.f32.mxu0 0.0
      %2946 = vmatmul.mubr.f32.gmra.mrb[0].mxu0 %v2690
      %v2947 = vpop.f32.mrb[0].mxu0
      %v2948 = vadd.f32 %v2793, %v2947
      %v2949 = vpop.f32.mrb[0].mxu0
      %2950 = vmatprep.mubr.f32.mxu0 0.0
      %2951 = vmatmul.mubr.f32.gmra.mrb[0].mxu0 %v2692
      %v2952 = vpop.f32.mrb[0].mxu0
      %v2953 = vadd.f32 %v2798, %v2952
      %v2954 = vpop.f32.mrb[0].mxu0
      %2955 = vmatprep.mubr.f32.mxu0 0.0
      %2956 = vmatmul.mubr.f32.gmra.mrb[0].mxu0 %v2694
      %v2957 = vpop.f32.mrb[0].mxu0
      %v2958 = vadd.f32 %v2803, %v2957
      %v2959 = vpop.f32.mrb[0].mxu0
      %2960 = vmatprep.mubr.f32.mxu0 0.0
      %2961 = vmatmul.mubr.f32.gmra.mrb[0].mxu0 %v2696
      %v2962 = vpop.f32.mrb[0].mxu0
      %v2963 = vadd.f32 %v2808, %v2962
      %v2964 = vpop.f32.mrb[0].mxu0
      %2965 = vmatprep.mubr.f32.mxu0 0.0
      %2966 = vmatmul.mubr.f32.gmra.mrb[0].mxu0 %v2698
      %v2967 = vpop.f32.mrb[0].mxu0
      %v2968 = vadd.f32 %v2813, %v2967
      %v2969 = vpop.f32.mrb[0].mxu0
      %2970 = vmatprep.mubr.f32.mxu0 0.0
      %2971 = vmatmul.mubr.f32.gmra.mrb[0].mxu0 %v2700
      %v2972 = vpop.f32.mrb[0].mxu0
      %v2973 = vadd.f32 %v2818, %v2972
      %v2974 = vpop.f32.mrb[0].mxu0
      %2975 = vmatprep.mubr.f32.mxu0 0.0
      %2976 = vmatmul.mubr.f32.gmra.mrb[0].mxu0 %v2702
      %v2977 = vpop.f32.mrb[0].mxu0
      %v2978 = vadd.f32 %v2823, %v2977
      %v2979 = vpop.f32.mrb[0].mxu0
      %2980 = vmatprep.mubr.f32.mxu0 0.0
      %2981 = vmatmul.mubr.f32.gmra.mrb[0].mxu0 %v2704
      %v2982 = vpop.f32.mrb[0].mxu0
      %v2983 = vadd.f32 %v2828, %v2982
      %v2984 = vpop.f32.mrb[0].mxu0
      %2985 = vmatprep.mubr.f32.mxu0 0.0
      %2986 = vmatmul.mubr.f32.gmra.mrb[0].mxu0 %v2706
      %v2987 = vpop.f32.mrb[0].mxu0
      %v2988 = vadd.f32 %v2833, %v2987
      %v2989 = vpop.f32.mrb[0].mxu0
      %2990 = vmatprep.mubr.f32.mxu0 0.0
      %2991 = vmatmul.mubr.f32.gmra.mrb[0].mxu0 %v2708
      %v2992 = vpop.f32.mrb[0].mxu0
      %v2993 = vadd.f32 %v2838, %v2992
      %v2994 = vpop.f32.mrb[0].mxu0
      %2995 = vmatprep.mubr.f32.mxu0 0.0
      %2996 = vmatmul.mubr.f32.gmra.mrb[0].mxu0 %v2710
      %v2997 = vpop.f32.mrb[0].mxu0
      %v2998 = vadd.f32 %v2843, %v2997
      %v2999 = vpop.f32.mrb[0].mxu0
      %3000 = vmatprep.mubr.f32.mxu0 0.0
      %3001 = vmatmul.mubr.f32.gmra.mrb[0].mxu0 %v2712
      %v3002 = vpop.f32.mrb[0].mxu0
      %v3003 = vadd.f32 %v2848, %v3002
      %v3004 = vpop.f32.mrb[0].mxu0
      %3005 = vmatprep.mubr.f32.mxu0 0.0
      %3006 = vmatmul.mubr.f32.gmra.mrb[0].mxu0 %v2714
      %v3007 = vpop.f32.mrb[0].mxu0
      %v3008 = vadd.f32 %v2853, %v3007
      %v3009 = vpop.f32.mrb[0].mxu0
      %3010 = vmatprep.mubr.f32.mxu0 0.0
      %3011 = vmatmul.mubr.f32.gmra.mrb[0].mxu0 %v2716
      %v3012 = vpop.f32.mrb[0].mxu0
      %v3013 = vadd.f32 %v2858, %v3012
      %v3014 = vpop.f32.mrb[0].mxu0
      %3015 = vmatprep.mubr.f32.mxu0 0.0
      %3016 = vmatmul.mubr.f32.gmra.mrb[0].mxu0 %v2718
      %v3017 = vpop.f32.mrb[0].mxu0
      %v3018 = vadd.f32 %v2863, %v3017
      %v3019 = vpop.f32.mrb[0].mxu0
      %3020 = vmatprep.mubr.f32.mxu0 0.0
      %3021 = vmatmul.mubr.f32.gmra.mrb[0].mxu0 %v2720
      %v3022 = vpop.f32.mrb[0].mxu0
      %v3023 = vadd.f32 %v2868, %v3022
      %v3024 = vpop.f32.mrb[0].mxu0
      %3025 = vmatprep.mubr.f32.mxu0 0.0
      %3026 = vmatmul.mubr.f32.gmra.mrb[0].mxu0 %v2722
      %v3027 = vpop.f32.mrb[0].mxu0
      %v3028 = vadd.f32 %v2873, %v3027
      %v3029 = vpop.f32.mrb[0].mxu0
      %3030 = vmatprep.mubr.f32.mxu0 0.0
      %3031 = vmatmul.mubr.f32.gmra.mrb[0].mxu0 %v2724
      %v3032 = vpop.f32.mrb[0].mxu0
      %v3033 = vadd.f32 %v2878, %v3032
      %v3034 = vpop.f32.mrb[0].mxu0
      %3035 = vdwg.mxu0
      %v3036 = vadd.f32 %v2459, %v2948
      %v3037 = vadd.f32 %v2460, %v2953
      %v3038 = vadd.f32 %v2461, %v2958
      %v3039 = vadd.f32 %v2462, %v2963
      %v3040 = vadd.f32 %v2463, %v2968
      %v3041 = vadd.f32 %v2464, %v2973
      %v3042 = vadd.f32 %v2465, %v2978
      %v3043 = vadd.f32 %v2466, %v2983
      %v3044 = vadd.f32 %v2467, %v2988
      %v3045 = vadd.f32 %v2468, %v2993
      %v3046 = vadd.f32 %v2469, %v2998
      %v3047 = vadd.f32 %v2470, %v3003
      %v3048 = vadd.f32 %v2471, %v3008
      %v3049 = vadd.f32 %v2472, %v3013
      %v3050 = vadd.f32 %v2473, %v3018
      %v3051 = vadd.f32 %v2474, %v3023
      %v3052 = vadd.f32 %v2475, %v3028
      %v3053 = vadd.f32 %v2476, %v3033
      %v3054 = vld [vmem:[%s2] sm:$0x1]
      %v3056 = vlaneseq
      %v3057 = vshrl.u32 %v3056, 7
      %v3058 = vsub.s32 0, %v3057
      %v3059 = vrot.slane %v3054, %v3058
      %v3061 = vadd.f32 %v3036, %v3059
      %v3062 = vadd.f32 %v3037, %v3059
      %v3063 = vadd.f32 %v3038, %v3059
      %v3064 = vadd.f32 %v3039, %v3059
      %v3065 = vadd.f32 %v3040, %v3059
      %v3066 = vadd.f32 %v3041, %v3059
      %v3067 = vadd.f32 %v3042, %v3059
      %v3068 = vadd.f32 %v3043, %v3059
      %v3069 = vadd.f32 %v3044, %v3059
      %v3070 = vadd.f32 %v3045, %v3059
      %v3071 = vadd.f32 %v3046, %v3059
      %v3072 = vadd.f32 %v3047, %v3059
      %v3073 = vadd.f32 %v3048, %v3059
      %v3074 = vadd.f32 %v3049, %v3059
      %v3075 = vadd.f32 %v3050, %v3059
      %v3076 = vadd.f32 %v3051, %v3059
      %v3077 = vadd.f32 %v3052, %v3059
      %v3078 = vadd.f32 %v3053, %v3059
      %v3079 = vmax.f32 %v3061, 0.0
      %v3080 = vmax.f32 %v3062, 0.0
      %v3081 = vmax.f32 %v3063, 0.0
      %v3082 = vmax.f32 %v3064, 0.0
      %v3083 = vmax.f32 %v3065, 0.0
      %v3084 = vmax.f32 %v3066, 0.0
      %v3085 = vmax.f32 %v3067, 0.0
      %v3086 = vmax.f32 %v3068, 0.0
      %v3087 = vmax.f32 %v3069, 0.0
      %v3088 = vmax.f32 %v3070, 0.0
      %v3089 = vmax.f32 %v3071, 0.0
      %v3090 = vmax.f32 %v3072, 0.0
      %v3091 = vmax.f32 %v3073, 0.0
      %v3092 = vmax.f32 %v3074, 0.0
      %v3093 = vmax.f32 %v3075, 0.0
      %v3094 = vmax.f32 %v3076, 0.0
      %v3095 = vmax.f32 %v3077, 0.0
      %v3096 = vmax.f32 %v3078, 0.0
      %vm3097 = vcmask 261120
      %3098 = vst.msk [vmem:[%s213] sm:$0xff] %vm3097, %v3079
      %3099 = vst.msk [vmem:[%s213 + $0x8] sm:$0xff] %vm3097, %v3080
      %3100 = vst.msk [vmem:[%s213 + $0x10] sm:$0xff] %vm3097, %v3081
      %3101 = vst.msk [vmem:[%s213 + $0x18] sm:$0xff] %vm3097, %v3082
      %3102 = vst.msk [vmem:[%s213 + $0x20] sm:$0xff] %vm3097, %v3083
      %3103 = vst.msk [vmem:[%s213 + $0x28] sm:$0xff] %vm3097, %v3084
      %3104 = vst.msk [vmem:[%s213 + $0x30] sm:$0xff] %vm3097, %v3085
      %3105 = vst.msk [vmem:[%s213 + $0x38] sm:$0xff] %vm3097, %v3086
      %3106 = vst.msk [vmem:[%s213 + $0x40] sm:$0xff] %vm3097, %v3087
      %3107 = vst.msk [vmem:[%s213 + $0x48] sm:$0xff] %vm3097, %v3088
      %3108 = vst.msk [vmem:[%s213 + $0x50] sm:$0xff] %vm3097, %v3089
      %3109 = vst.msk [vmem:[%s213 + $0x58] sm:$0xff] %vm3097, %v3090
      %3110 = vst.msk [vmem:[%s213 + $0x60] sm:$0xff] %vm3097, %v3091
      %3111 = vst.msk [vmem:[%s213 + $0x68] sm:$0xff] %vm3097, %v3092
      %3112 = vst.msk [vmem:[%s213 + $0x70] sm:$0xff] %vm3097, %v3093
      %3113 = vst.msk [vmem:[%s213 + $0x78] sm:$0xff] %vm3097, %v3094
      %3114 = vst.msk [vmem:[%s213 + $0x80] sm:$0xff] %vm3097, %v3095
      %3115 = vst.msk [vmem:[%s213 + $0x88] sm:$0xff] %vm3097, %v3096
      %s3116 = smul.u32 9, %s19
      %p3117 = scmp.lt.s32.totalorder %s18, 1
      %s3118 = scalar_select %p3117, %s18, 1
      %p3119 = scmp.lt.s32.totalorder %s3116, 8
      %s3120 = scalar_select %p3119, %s3116, 8
      %s3121 = smul.addr %s3120, 2
      %s3122 = smul.addr %s3118, 18
      %s3123 = sadd.s32 %s3121, %s3122
      %s3124 = smul.addr %s3123, 8
      %s3125 = scalar_lea.vmem %s3, %s3124
      // Predicated region
      $region33: #{spatial_softmax_image_encoder.4} parent=31 // pred_check
        %p3126 = pneg %p116
      $region34: #{spatial_softmax_image_encoder.4} parent=31 // pred_check_branch
        %3128 = sbr.rel (%p3126) target = $region36
      $region35: #{spatial_softmax_image_encoder.4} parent=31 // pred_region
        %s3129 = smul.u32 9, %s19
      $region36: #{spatial_softmax_image_encoder.4} parent=31 // pred_fallthru
        _
    $region32: #{spatial_softmax_image_encoder.4} parent=5 // pred_fallthru
      _
    %p3130 = scmp.le.s32.totalorder 2, %s9
    // Predicated region
    $region37: #{spatial_softmax_image_encoder.4} parent=5 // pred_check
      %p3131 = pneg %p3130
    $region38: #{spatial_softmax_image_encoder.4} parent=5 // pred_check_branch
      %3133 = sbr.rel (%p3131) target = $region40
    $region39: #{spatial_softmax_image_encoder.4} parent=5 // pred_region
      %s3134 = ssub.s32 %s9, 2
      // Predicated region
      $region41: #{spatial_softmax_image_encoder.4} parent=39 // pred_check
        %p3135 = pneg %p122
      $region42: #{spatial_softmax_image_encoder.4} parent=39 // pred_check_branch
        %3137 = sbr.rel (%p3135) target = $region44
      $region43: #{spatial_softmax_image_encoder.4} parent=39 // pred_region
        %s3138 = smul.u32 9, %s21
        %p3139 = scmp.lt.s32.totalorder %s20, 1
        %s3140 = scalar_select %p3139, %s20, 1
        %p3141 = scmp.lt.s32.totalorder %s3138, 8
        %s3142 = scalar_select %p3141, %s3138, 8
        %s3143 = smul.addr %s3142, 2
        %s3144 = smul.addr %s3140, 18
        %s3145 = sadd.s32 %s3143, %s3144
        %s3146 = smul.addr %s3145, 8
        %s3147 = scalar_lea.vmem %s3, %s3146
      $region44: #{spatial_softmax_image_encoder.4} parent=39 // pred_fallthru
        _
    $region40: #{spatial_softmax_image_encoder.4} parent=5 // pred_fallthru
      _
  $region6: #{spatial_softmax_image_encoder.4} parent=0 // loop_footer
    %s13 = sadd.s32 1, %s9
  $region7: #{spatial_softmax_image_encoder.4} parent=0 // loop_footer_branch
    %8 = sbr.rel target = $region3
  $region8: #{spatial_softmax_image_encoder.4} parent=0 // loop_exit
    _

// kernel: spatial_softmax_image_encoder.5
$region0: #{spatial_softmax_image_encoder.5}
  #allocation0 [shape = 'u32[]', space=smem, size = 0x4, offset = 0x4, fixed_abs, tag = 'smem constant byte address 0x4 - core index']
  #allocation1 [shape = 'u32[144,128]{1,0:T(1,128)}', space=vmem, size = 0x12000, scoped, tag = 'internal scratch']
  %s0 = inlined_call_operand.vmem [shape: f32[2,5,12,160], index: 0, kind: input, shape index: {}]
  %s1 = inlined_call_operand.vmem [shape: f32[5,160,8], index: 1, kind: input, shape index: {}]
  %s2 = inlined_call_operand.vmem [shape: f32[1,8], index: 2, kind: input, shape index: {}]
  %s3 = inlined_call_operand.vmem [shape: f32[1,40], index: 3, kind: input, shape index: {}]
  %s4 = inlined_call_operand.vmem [shape: f32[40,3], index: 4, kind: input, shape index: {}]
  %s5 = inlined_call_operand.vmem [shape: f32[2,8,2], index: 5, kind: output, shape index: {}]
  %s6 = sld [smem:[#allocation0]]
  $region53: #{spatial_softmax_image_encoder.5} parent=0
    _
  %s8 = ssub.s32 1, %s6
  %s9 = scalar_select 0, %s8, %s6
  loop: start=0, step=1, limit=4
  $region2: #{spatial_softmax_image_encoder.5} parent=0 // loop_pre_header
    _
  $region3: #{spatial_softmax_image_encoder.5} parent=0 // loop_header
    %s11 = sphi 0, %s15
    %p12 = scmp.ge.s32.totalorder %s11, 4
    %s21 = sphi 0, %s23
    %s24 = sphi 0, %s21
    %s25 = sphi 0, %s24
    %s41 = sphi 0, %s25
    %s45 = sphi 0, %s45
    %s47 = sphi 0, %s45
    %s48 = sphi 0, %s47
    %s62 = sphi 0, %s48
    %s66 = sphi 0, %s66
    %s68 = sphi 0, %s66
    %s69 = sphi 0, %s68
    %s83 = sphi 0, %s69
    %s87 = sphi 0, %s87
    %s89 = sphi 0, %s87
    %s90 = sphi 0, %s89
    %s104 = sphi 0, %s90
    %s108 = sphi 0, %s108
    %s110 = sphi 0, %s108
    %s111 = sphi 0, %s110
    %s125 = sphi 0, %s111
    %s131 = sphi 0, %s133
    %s134 = sphi 0, %s131
    %s135 = sphi 0, %s134
    %s151 = sphi 0, %s135
  $region4: #{spatial_softmax_image_encoder.5} parent=0 // loop_header_branch
    %14 = sbr.rel (%p12) target = $region8
  $region5: #{spatial_softmax_image_encoder.5} parent=0 // loop_body
    %s16 = ssub.s32 %s11, 1
    %s17 = ssub.s32 %s11, 2
    %s18 = sadd.s32 %s11, 1
    %s19 = ssub.s32 %s11, %s18
    %p20 = scmp.eq.s32.totalorder %s19, 0
    %s22 = sadd.s32 %s21, 1
    %s23 = scalar_select %p20, %s21, %s22
    %p26 = pneg %p20
    %p27 = scmp.eq.s32.totalorder %s11, 1
    %p28 = por %p26, %p27
    %p29 = scmp.ne.s32.totalorder %s21, %s24
    %p30 = scmp.eq.s32.totalorder %s11, 0
    %p31 = por %p29, %p30
    %p32 = scmp.ne.s32.totalorder %s21, %s24
    %p33 = scmp.eq.s32.totalorder %s16, 1
    %p34 = por %p32, %p33
    %p35 = scmp.ne.s32.totalorder %s24, %s25
    %p36 = scmp.eq.s32.totalorder %s16, 0
    %p37 = por %p35, %p36
    %p38 = scmp.ne.s32.totalorder %s24, %s25
    %p39 = scmp.eq.s32.totalorder %s17, 1
    %p40 = por %p38, %p39
    %p42 = scmp.ne.s32.totalorder %s25, %s41
    %p43 = scmp.eq.s32.totalorder %s17, 0
    %p44 = por %p42, %p43
    %s46 = sadd.s32 %s45, 1
    %p49 = scmp.eq.s32.totalorder %s11, 1
    %p50 = scmp.ne.s32.totalorder %s45, %s47
    %p51 = scmp.eq.s32.totalorder %s11, 0
    %p52 = por %p50, %p51
    %p53 = scmp.ne.s32.totalorder %s45, %s47
    %p54 = scmp.eq.s32.totalorder %s16, 1
    %p55 = por %p53, %p54
    %p56 = scmp.ne.s32.totalorder %s47, %s48
    %p57 = scmp.eq.s32.totalorder %s16, 0
    %p58 = por %p56, %p57
    %p59 = scmp.ne.s32.totalorder %s47, %s48
    %p60 = scmp.eq.s32.totalorder %s17, 1
    %p61 = por %p59, %p60
    %p63 = scmp.ne.s32.totalorder %s48, %s62
    %p64 = scmp.eq.s32.totalorder %s17, 0
    %p65 = por %p63, %p64
    %s67 = sadd.s32 %s66, 1
    %p70 = scmp.eq.s32.totalorder %s11, 1
    %p71 = scmp.ne.s32.totalorder %s66, %s68
    %p72 = scmp.eq.s32.totalorder %s11, 0
    %p73 = por %p71, %p72
    %p74 = scmp.ne.s32.totalorder %s66, %s68
    %p75 = scmp.eq.s32.totalorder %s16, 1
    %p76 = por %p74, %p75
    %p77 = scmp.ne.s32.totalorder %s68, %s69
    %p78 = scmp.eq.s32.totalorder %s16, 0
    %p79 = por %p77, %p78
    %p80 = scmp.ne.s32.totalorder %s68, %s69
    %p81 = scmp.eq.s32.totalorder %s17, 1
    %p82 = por %p80, %p81
    %p84 = scmp.ne.s32.totalorder %s69, %s83
    %p85 = scmp.eq.s32.totalorder %s17, 0
    %p86 = por %p84, %p85
    %s88 = sadd.s32 %s87, 1
    %p91 = scmp.eq.s32.totalorder %s11, 1
    %p92 = scmp.ne.s32.totalorder %s87, %s89
    %p93 = scmp.eq.s32.totalorder %s11, 0
    %p94 = por %p92, %p93
    %p95 = scmp.ne.s32.totalorder %s87, %s89
    %p96 = scmp.eq.s32.totalorder %s16, 1
    %p97 = por %p95, %p96
    %p98 = scmp.ne.s32.totalorder %s89, %s90
    %p99 = scmp.eq.s32.totalorder %s16, 0
    %p100 = por %p98, %p99
    %p101 = scmp.ne.s32.totalorder %s89, %s90
    %p102 = scmp.eq.s32.totalorder %s17, 1
    %p103 = por %p101, %p102
    %p105 = scmp.ne.s32.totalorder %s90, %s104
    %p106 = scmp.eq.s32.totalorder %s17, 0
    %p107 = por %p105, %p106
    %s109 = sadd.s32 %s108, 1
    %p112 = scmp.eq.s32.totalorder %s11, 1
    %p113 = scmp.ne.s32.totalorder %s108, %s110
    %p114 = scmp.eq.s32.totalorder %s11, 0
    %p115 = por %p113, %p114
    %p116 = scmp.ne.s32.totalorder %s108, %s110
    %p117 = scmp.eq.s32.totalorder %s16, 1
    %p118 = por %p116, %p117
    %p119 = scmp.ne.s32.totalorder %s110, %s111
    %p120 = scmp.eq.s32.totalorder %s16, 0
    %p121 = por %p119, %p120
    %p122 = scmp.ne.s32.totalorder %s110, %s111
    %p123 = scmp.eq.s32.totalorder %s17, 1
    %p124 = por %p122, %p123
    %p126 = scmp.ne.s32.totalorder %s111, %s125
    %p127 = scmp.eq.s32.totalorder %s17, 0
    %p128 = por %p126, %p127
    %s129 = ssub.s32 %s11, %s18
    %p130 = scmp.eq.s32.totalorder %s129, 0
    %s132 = sadd.s32 %s131, 1
    %s133 = scalar_select %p130, %s131, %s132
    %p136 = pneg %p130
    %p137 = scmp.eq.s32.totalorder %s11, 1
    %p138 = por %p136, %p137
    %p139 = scmp.ne.s32.totalorder %s131, %s134
    %p140 = scmp.eq.s32.totalorder %s11, 0
    %p141 = por %p139, %p140
    %p142 = scmp.ne.s32.totalorder %s131, %s134
    %p143 = scmp.eq.s32.totalorder %s16, 1
    %p144 = por %p142, %p143
    %p145 = scmp.ne.s32.totalorder %s134, %s135
    %p146 = scmp.eq.s32.totalorder %s16, 0
    %p147 = por %p145, %p146
    %p148 = scmp.ne.s32.totalorder %s134, %s135
    %p149 = scmp.eq.s32.totalorder %s17, 1
    %p150 = por %p148, %p149
    %p152 = scmp.ne.s32.totalorder %s135, %s151
    %p153 = scmp.eq.s32.totalorder %s17, 0
    %p154 = por %p152, %p153
    %p155 = scmp.le.s32.totalorder 1, %s11
    %p156 = scmp.lt.s32.totalorder %s11, 3
    %p157 = pnand %p155, %p156
    %p158 = pneg %p157
    // Predicated region
    $region9: #{spatial_softmax_image_encoder.5} parent=5 // pred_check
      _
    $region10: #{spatial_softmax_image_encoder.5} parent=5 // pred_check_branch
      %160 = sbr.rel (%p157) target = $region12
    $region11: #{spatial_softmax_image_encoder.5} parent=5 // pred_region
      %s161 = ssub.s32 %s11, 1
      // Predicated region
      $region13: #{spatial_softmax_image_encoder.5} parent=11 // pred_check
        %p162 = pneg %p58
      $region14: #{spatial_softmax_image_encoder.5} parent=11 // pred_check_branch
        %164 = sbr.rel (%p162) target = $region16
      $region15: #{spatial_softmax_image_encoder.5} parent=11 // pred_region
        _
      $region16: #{spatial_softmax_image_encoder.5} parent=11 // pred_fallthru
        _
      // Predicated region
      $region17: #{spatial_softmax_image_encoder.5} parent=11 // pred_check
        %p165 = pneg %p79
      $region18: #{spatial_softmax_image_encoder.5} parent=11 // pred_check_branch
        %167 = sbr.rel (%p165) target = $region20
      $region19: #{spatial_softmax_image_encoder.5} parent=11 // pred_region
        _
      $region20: #{spatial_softmax_image_encoder.5} parent=11 // pred_fallthru
        _
      // Predicated region
      $region21: #{spatial_softmax_image_encoder.5} parent=11 // pred_check
        %p168 = pneg %p100
      $region22: #{spatial_softmax_image_encoder.5} parent=11 // pred_check_branch
        %170 = sbr.rel (%p168) target = $region24
      $region23: #{spatial_softmax_image_encoder.5} parent=11 // pred_region
        _
      $region24: #{spatial_softmax_image_encoder.5} parent=11 // pred_fallthru
        _
      // Predicated region
      $region25: #{spatial_softmax_image_encoder.5} parent=11 // pred_check
        %p171 = pneg %p121
      $region26: #{spatial_softmax_image_encoder.5} parent=11 // pred_check_branch
        %173 = sbr.rel (%p171) target = $region28
      $region27: #{spatial_softmax_image_encoder.5} parent=11 // pred_region
        _
      $region28: #{spatial_softmax_image_encoder.5} parent=11 // pred_fallthru
        _
    $region12: #{spatial_softmax_image_encoder.5} parent=5 // pred_fallthru
      _
    %p174 = scmp.lt.s32.totalorder %s11, 2
    // Predicated region
    $region29: #{spatial_softmax_image_encoder.5} parent=5 // pred_check
      %p175 = pneg %p174
    $region30: #{spatial_softmax_image_encoder.5} parent=5 // pred_check_branch
      %177 = sbr.rel (%p175) target = $region32
    $region31: #{spatial_softmax_image_encoder.5} parent=5 // pred_region
      // Predicated region
      $region33: #{spatial_softmax_image_encoder.5} parent=31 // pred_check
        %p178 = pneg %p31
      $region34: #{spatial_softmax_image_encoder.5} parent=31 // pred_check_branch
        %180 = sbr.rel (%p178) target = $region36
      $region35: #{spatial_softmax_image_encoder.5} parent=31 // pred_region
        %p181 = scmp.lt.s32.totalorder %s11, 1
        %s182 = scalar_select %p181, %s11, 1
        %s183 = smul.addr %s182, 20
        %s184 = smul.addr %s183, 8
        %s185 = scalar_lea.vmem %s0, %s184
      $region36: #{spatial_softmax_image_encoder.5} parent=31 // pred_fallthru
        _
    $region32: #{spatial_softmax_image_encoder.5} parent=5 // pred_fallthru
      _
    %p186 = scmp.le.s32.totalorder 1, %s11
    %p187 = scmp.lt.s32.totalorder %s11, 3
    %p188 = pnand %p186, %p187
    %p189 = pneg %p188
    // Predicated region
    $region37: #{spatial_softmax_image_encoder.5} parent=5 // pred_check
      _
    $region38: #{spatial_softmax_image_encoder.5} parent=5 // pred_check_branch
      %191 = sbr.rel (%p188) target = $region40
    $region39: #{spatial_softmax_image_encoder.5} parent=5 // pred_region
      %s192 = ssub.s32 %s11, 1
      %p193 = scmp.lt.s32.totalorder %s16, 1
      %s194 = scalar_select %p193, %s16, 1
      %s195 = smul.addr %s194, 20
      %s196 = smul.addr %s195, 8
      %s197 = scalar_lea.vmem %s0, %s196
      %p198 = pneg %p37
      %p199 = pneg %p34
      %p200 = pneg %p58
      %p201 = pneg %p55
      %p202 = pneg %p79
      %p203 = pneg %p76
      %p204 = pneg %p100
      %p205 = pneg %p97
      %p206 = pneg %p121
      %p207 = pneg %p118
      %p208 = pneg %p147
      %p209 = pneg %p144
      %p210 = scmp.lt.s32.totalorder %s16, 1
      %s211 = scalar_select %p210, %s16, 1
      %s212 = smul.addr %s211, 8
      %s213 = scalar_lea.vmem %s5, %s212
      %p214 = scmp.lt.s32.totalorder %s16, 1
      %s215 = scalar_select %p214, %s16, 1
      %s216 = smul.addr %s215, 20
      %s217 = smul.addr %s216, 8
      %s218 = scalar_lea.vmem %s0, %s217
      %p219 = scmp.lt.s32.totalorder %s16, 1
      %s220 = scalar_select %p219, %s16, 1
      %s221 = smul.addr %s220, 8
      %s222 = scalar_lea.vmem %s5, %s221
      %v223 = vld [vmem:[%s218] sm:$0xff]
      %v224 = vld [vmem:[%s218 + $0x8] sm:$0xff]
      %v225 = vld [vmem:[%s218 + $0x10] sm:$0xf]
      %v226 = vld [vmem:[%s218 + $0x18] sm:$0xf]
      %v227 = vld [vmem:[%s218 + $0x20] sm:$0xff]
      %v228 = vld [vmem:[%s218 + $0x28] sm:$0xff]
      %v229 = vld [vmem:[%s218 + $0x30] sm:$0xf]
      %v230 = vld [vmem:[%s218 + $0x38] sm:$0xf]
      %v231 = vld [vmem:[%s218 + $0x40] sm:$0xff]
      %v232 = vld [vmem:[%s218 + $0x48] sm:$0xff]
      %v233 = vld [vmem:[%s218 + $0x50] sm:$0xf]
      %v234 = vld [vmem:[%s218 + $0x58] sm:$0xf]
      %v235 = vld [vmem:[%s218 + $0x60] sm:$0xff]
      %v236 = vld [vmem:[%s218 + $0x68] sm:$0xff]
      %v237 = vld [vmem:[%s218 + $0x70] sm:$0xf]
      %v238 = vld [vmem:[%s218 + $0x78] sm:$0xf]
      %v239 = vld [vmem:[%s218 + $0x80] sm:$0xff]
      %v240 = vld [vmem:[%s218 + $0x88] sm:$0xff]
      %v241 = vld [vmem:[%s218 + $0x90] sm:$0xf]
      %v242 = vld [vmem:[%s218 + $0x98] sm:$0xf]
      %v243 = vld [vmem:[%s1] sm:$0xff]
      %v244 = vld [vmem:[%s1 + $0x8] sm:$0xff]
      %v245 = vld [vmem:[%s1 + $0x10] sm:$0xff]
      %v246 = vld [vmem:[%s1 + $0x18] sm:$0xff]
      %v247 = vld [vmem:[%s1 + $0x20] sm:$0xff]
      %v248 = vld [vmem:[%s1 + $0x28] sm:$0xff]
      %v249 = vld [vmem:[%s1 + $0x30] sm:$0xff]
      %v250 = vld [vmem:[%s1 + $0x38] sm:$0xff]
      %v251 = vld [vmem:[%s1 + $0x40] sm:$0xff]
      %v252 = vld [vmem:[%s1 + $0x48] sm:$0xff]
      %v253 = vld [vmem:[%s1 + $0x50] sm:$0xff]
      %v254 = vld [vmem:[%s1 + $0x58] sm:$0xff]
      %v255 = vld [vmem:[%s1 + $0x60] sm:$0xff]
      %v256 = vld [vmem:[%s1 + $0x68] sm:$0xff]
      %v257 = vld [vmem:[%s1 + $0x70] sm:$0xff]
      %v258 = vld [vmem:[%s1 + $0x78] sm:$0xff]
      %v259 = vld [vmem:[%s1 + $0x80] sm:$0xff]
      %v260 = vld [vmem:[%s1 + $0x88] sm:$0xff]
      %v261 = vld [vmem:[%s1 + $0x90] sm:$0xff]
      %v262 = vld [vmem:[%s1 + $0x98] sm:$0xff]
      %vm283 = vcmask 1046528
      %v284 = vrot.slane %v223, 1
      %v285 = vrot.slane %v225, 1
      %v286 = vsel %vm283, %v284, %v285
      %v287 = vrot.slane %v224, 1
      %v288 = vrot.slane %v226, 1
      %v289 = vsel %vm283, %v287, %v288
      %v290 = vrot.slane %v227, 1
      %v291 = vrot.slane %v229, 1
      %v292 = vsel %vm283, %v290, %v291
      %v293 = vrot.slane %v228, 1
      %v294 = vrot.slane %v230, 1
      %v295 = vsel %vm283, %v293, %v294
      %v296 = vrot.slane %v231, 1
      %v297 = vrot.slane %v233, 1
      %v298 = vsel %vm283, %v296, %v297
      %v299 = vrot.slane %v232, 1
      %v300 = vrot.slane %v234, 1
      %v301 = vsel %vm283, %v299, %v300
      %v302 = vrot.slane %v235, 1
      %v303 = vrot.slane %v237, 1
      %v304 = vsel %vm283, %v302, %v303
      %v305 = vrot.slane %v236, 1
      %v306 = vrot.slane %v238, 1
      %v307 = vsel %vm283, %v305, %v306
      %v308 = vrot.slane %v239, 1
      %v309 = vrot.slane %v241, 1
      %v310 = vsel %vm283, %v308, %v309
      %v311 = vrot.slane %v240, 1
      %v312 = vrot.slane %v242, 1
      %v313 = vsel %vm283, %v311, %v312
      %s319 = scalar_lea.vmem %s1, 160
      %v320 = vld [vmem:[%s319] sm:$0xff]
      %v321 = vld [vmem:[%s319 + $0x8] sm:$0xff]
      %v322 = vld [vmem:[%s319 + $0x10] sm:$0xff]
      %v323 = vld [vmem:[%s319 + $0x18] sm:$0xff]
      %v324 = vld [vmem:[%s319 + $0x20] sm:$0xff]
      %v325 = vld [vmem:[%s319 + $0x28] sm:$0xff]
      %v326 = vld [vmem:[%s319 + $0x30] sm:$0xff]
      %v327 = vld [vmem:[%s319 + $0x38] sm:$0xff]
      %v328 = vld [vmem:[%s319 + $0x40] sm:$0xff]
      %v329 = vld [vmem:[%s319 + $0x48] sm:$0xff]
      %v330 = vld [vmem:[%s319 + $0x50] sm:$0xff]
      %v331 = vld [vmem:[%s319 + $0x58] sm:$0xff]
      %v332 = vld [vmem:[%s319 + $0x60] sm:$0xff]
      %v333 = vld [vmem:[%s319 + $0x68] sm:$0xff]
      %v334 = vld [vmem:[%s319 + $0x70] sm:$0xff]
      %v335 = vld [vmem:[%s319 + $0x78] sm:$0xff]
      %v336 = vld [vmem:[%s319 + $0x80] sm:$0xff]
      %v337 = vld [vmem:[%s319 + $0x88] sm:$0xff]
      %v338 = vld [vmem:[%s319 + $0x90] sm:$0xff]
      %v339 = vld [vmem:[%s319 + $0x98] sm:$0xff]
      %vm340 = vcmask 261120
      %v341 = vsel %vm340, %v289, 0
      %v343 = vsel %vm340, %v295, 0
      %v345 = vsel %vm340, %v301, 0
      %v347 = vsel %vm340, %v307, 0
      %v349 = vsel %vm340, %v313, 0
      %351 = vmatprep.subr.mxu0 0.0
      %352 = vmatpush1.msra.mxu0 %v320
      %353 = vmatprep.subr.mxu0 0.0
      %354 = vmatpush1.msra.mxu0 %v321
      %355 = vmatprep.subr.mxu0 0.0
      %356 = vmatpush1.msra.mxu0 %v322
      %357 = vmatprep.subr.mxu0 0.0
      %358 = vmatpush1.msra.mxu0 %v323
      %359 = vmatprep.subr.mxu0 0.0
      %360 = vmatpush1.msra.mxu0 %v324
      %361 = vmatprep.subr.mxu0 0.0
      %362 = vmatpush1.msra.mxu0 %v325
      %363 = vmatprep.subr.mxu0 0.0
      %364 = vmatpush1.msra.mxu0 %v326
      %365 = vmatprep.subr.mxu0 0.0
      %366 = vmatpush1.msra.mxu0 %v327
      %367 = vmatprep.subr.mxu0 0.0
      %368 = vmatpush1.msra.mxu0 %v328
      %369 = vmatprep.subr.mxu0 0.0
      %370 = vmatpush1.msra.mxu0 %v329
      %371 = vmatprep.subr.mxu0 0.0
      %372 = vmatpush1.msra.mxu0 %v330
      %373 = vmatprep.subr.mxu0 0.0
      %374 = vmatpush1.msra.mxu0 %v331
      %375 = vmatprep.subr.mxu0 0.0
      %376 = vmatpush1.msra.mxu0 %v332
      %377 = vmatprep.subr.mxu0 0.0
      %378 = vmatpush1.msra.mxu0 %v333
      %379 = vmatprep.subr.mxu0 0.0
      %380 = vmatpush1.msra.mxu0 %v334
      %381 = vmatprep.subr.mxu0 0.0
      %382 = vmatpush1.msra.mxu0 %v335
      %383 = vmatprep.subr.mxu0 0.0
      %384 = vmatpush1.msra.mxu0 %v336
      %385 = vmatprep.subr.mxu0 0.0
      %386 = vmatpush1.msra.mxu0 %v337
      %387 = vmatprep.subr.mxu0 0.0
      %388 = vmatpush1.msra.mxu0 %v338
      %389 = vmatprep.subr.mxu0 0.0
      %390 = vmatpush1.msra.mxu0 %v339
      %391 = vmatprep.subr.mxu0 0.0
      %392 = vmatpush1.msra.mxu0 0.0
      %393 = vmatprep.subr.mxu0 0.0
      %394 = vmatpush1.msra.mxu0 0.0
      %395 = vmatprep.subr.mxu0 0.0
      %396 = vmatpush1.msra.mxu0 0.0
      %397 = vmatprep.subr.mxu0 0.0
      %398 = vmatpush1.msra.mxu0 0.0
      %399 = vmatprep.subr.mxu0 0.0
      %400 = vmatpush1.msra.mxu0 0.0
      %401 = vmatprep.subr.mxu0 0.0
      %402 = vmatpush1.msra.mxu0 0.0
      %403 = vmatprep.subr.mxu0 0.0
      %404 = vmatpush1.msra.mxu0 0.0
      %405 = vmatprep.subr.mxu0 0.0
      %406 = vmatpush1.msra.mxu0 0.0
      %407 = vmatprep.subr.mxu0 0.0
      %408 = vmatpush1.msra.mxu0 0.0
      %409 = vmatprep.subr.mxu0 0.0
      %410 = vmatpush1.msra.mxu0 0.0
      %411 = vmatprep.subr.mxu0 0.0
      %412 = vmatpush1.msra.mxu0 0.0
      %413 = vmatprep.subr.mxu0 0.0
      %414 = vmatpush1.msra.mxu0 0.0
      %415 = vmatprep.mubr.f32.mxu0 %v341
      %416 = vmatmul.mubr.f32.gmra.mrb[0].mxu0 %v286
      %v417 = vpop.f32.mrb[0].mxu0
      %v418 = vadd.f32 0.0, %v417
      %v419 = vpop.f32.mrb[0].mxu0
      %420 = vmatprep.mubr.f32.mxu0 %v343
      %421 = vmatmul.mubr.f32.gmra.mrb[0].mxu0 %v292
      %v422 = vpop.f32.mrb[0].mxu0
      %v423 = vadd.f32 0.0, %v422
      %v424 = vpop.f32.mrb[0].mxu0
      %425 = vmatprep.mubr.f32.mxu0 %v345
      %426 = vmatmul.mubr.f32.gmra.mrb[0].mxu0 %v298
      %v427 = vpop.f32.mrb[0].mxu0
      %v428 = vadd.f32 0.0, %v427
      %v429 = vpop.f32.mrb[0].mxu0
      %430 = vmatprep.mubr.f32.mxu0 %v347
      %431 = vmatmul.mubr.f32.gmra.mrb[0].mxu0 %v304
      %v432 = vpop.f32.mrb[0].mxu0
      %v433 = vadd.f32 0.0, %v432
      %v434 = vpop.f32.mrb[0].mxu0
      %435 = vmatprep.mubr.f32.mxu0 %v349
      %436 = vmatmul.mubr.f32.gmra.mrb[0].mxu0 %v310
      %v437 = vpop.f32.mrb[0].mxu0
      %v438 = vadd.f32 0.0, %v437
      %v439 = vpop.f32.mrb[0].mxu0
      %440 = vdwg.mxu0
      %v441 = vsel %vm340, %v224, 0
      %v443 = vsel %vm340, %v228, 0
      %v445 = vsel %vm340, %v232, 0
      %v447 = vsel %vm340, %v236, 0
      %v449 = vsel %vm340, %v240, 0
      %451 = vmatprep.subr.mxu0 0.0
      %452 = vmatpush1.msra.mxu0 %v243
      %453 = vmatprep.subr.mxu0 0.0
      %454 = vmatpush1.msra.mxu0 %v244
      %455 = vmatprep.subr.mxu0 0.0
      %456 = vmatpush1.msra.mxu0 %v245
      %457 = vmatprep.subr.mxu0 0.0
      %458 = vmatpush1.msra.mxu0 %v246
      %459 = vmatprep.subr.mxu0 0.0
      %460 = vmatpush1.msra.mxu0 %v247
      %461 = vmatprep.subr.mxu0 0.0
      %462 = vmatpush1.msra.mxu0 %v248
      %463 = vmatprep.subr.mxu0 0.0
      %464 = vmatpush1.msra.mxu0 %v249
      %465 = vmatprep.subr.mxu0 0.0
      %466 = vmatpush1.msra.mxu0 %v250
      %467 = vmatprep.subr.mxu0 0.0
      %468 = vmatpush1.msra.mxu0 %v251
      %469 = vmatprep.subr.mxu0 0.0
      %470 = vmatpush1.msra.mxu0 %v252
      %471 = vmatprep.subr.mxu0 0.0
      %472 = vmatpush1.msra.mxu0 %v253
      %473 = vmatprep.subr.mxu0 0.0
      %474 = vmatpush1.msra.mxu0 %v254
      %475 = vmatprep.subr.mxu0 0.0
      %476 = vmatpush1.msra.mxu0 %v255
      %477 = vmatprep.subr.mxu0 0.0
      %478 = vmatpush1.msra.mxu0 %v256
      %479 = vmatprep.subr.mxu0 0.0
      %480 = vmatpush1.msra.mxu0 %v257
      %481 = vmatprep.subr.mxu0 0.0
      %482 = vmatpush1.msra.mxu0 %v258
      %483 = vmatprep.subr.mxu0 0.0
      %484 = vmatpush1.msra.mxu0 %v259
      %485 = vmatprep.subr.mxu0 0.0
      %486 = vmatpush1.msra.mxu0 %v260
      %487 = vmatprep.subr.mxu0 0.0
      %488 = vmatpush1.msra.mxu0 %v261
      %489 = vmatprep.subr.mxu0 0.0
      %490 = vmatpush1.msra.mxu0 %v262
      %491 = vmatprep.subr.mxu0 0.0
      %492 = vmatpush1.msra.mxu0 0.0
      %493 = vmatprep.subr.mxu0 0.0
      %494 = vmatpush1.msra.mxu0 0.0
      %495 = vmatprep.subr.mxu0 0.0
      %496 = vmatpush1.msra.mxu0 0.0
      %497 = vmatprep.subr.mxu0 0.0
      %498 = vmatpush1.msra.mxu0 0.0
      %499 = vmatprep.subr.mxu0 0.0
      %500 = vmatpush1.msra.mxu0 0.0
      %501 = vmatprep.subr.mxu0 0.0
      %502 = vmatpush1.msra.mxu0 0.0
      %503 = vmatprep.subr.mxu0 0.0
      %504 = vmatpush1.msra.mxu0 0.0
      %505 = vmatprep.subr.mxu0 0.0
      %506 = vmatpush1.msra.mxu0 0.0
      %507 = vmatprep.subr.mxu0 0.0
      %508 = vmatpush1.msra.mxu0 0.0
      %509 = vmatprep.subr.mxu0 0.0
      %510 = vmatpush1.msra.mxu0 0.0
      %511 = vmatprep.subr.mxu0 0.0
      %512 = vmatpush1.msra.mxu0 0.0
      %513 = vmatprep.subr.mxu0 0.0
      %514 = vmatpush1.msra.mxu0 0.0
      %515 = vmatprep.mubr.f32.mxu0 %v441
      %516 = vmatmul.mubr.f32.gmra.mrb[0].mxu0 %v223
      %v517 = vpop.f32.mrb[0].mxu0
      %v518 = vadd.f32 %v418, %v517
      %v519 = vpop.f32.mrb[0].mxu0
      %520 = vmatprep.mubr.f32.mxu0 %v443
      %521 = vmatmul.mubr.f32.gmra.mrb[0].mxu0 %v227
      %v522 = vpop.f32.mrb[0].mxu0
      %v523 = vadd.f32 %v423, %v522
      %v524 = vpop.f32.mrb[0].mxu0
      %525 = vmatprep.mubr.f32.mxu0 %v445
      %526 = vmatmul.mubr.f32.gmra.mrb[0].mxu0 %v231
      %v527 = vpop.f32.mrb[0].mxu0
      %v528 = vadd.f32 %v428, %v527
      %v529 = vpop.f32.mrb[0].mxu0
      %530 = vmatprep.mubr.f32.mxu0 %v447
      %531 = vmatmul.mubr.f32.gmra.mrb[0].mxu0 %v235
      %v532 = vpop.f32.mrb[0].mxu0
      %v533 = vadd.f32 %v433, %v532
      %v534 = vpop.f32.mrb[0].mxu0
      %535 = vmatprep.mubr.f32.mxu0 %v449
      %536 = vmatmul.mubr.f32.gmra.mrb[0].mxu0 %v239
      %v537 = vpop.f32.mrb[0].mxu0
      %v538 = vadd.f32 %v438, %v537
      %v539 = vpop.f32.mrb[0].mxu0
      %540 = vdwg.mxu0
      %vm541 = vcmask 1045504
      %v542 = vrot.slane %v223, 2
      %v543 = vrot.slane %v225, 2
      %v544 = vsel %vm541, %v542, %v543
      %v545 = vrot.slane %v224, 2
      %v546 = vrot.slane %v226, 2
      %v547 = vsel %vm541, %v545, %v546
      %v548 = vrot.slane %v227, 2
      %v549 = vrot.slane %v229, 2
      %v550 = vsel %vm541, %v548, %v549
      %v551 = vrot.slane %v228, 2
      %v552 = vrot.slane %v230, 2
      %v553 = vsel %vm541, %v551, %v552
      %v554 = vrot.slane %v231, 2
      %v555 = vrot.slane %v233, 2
      %v556 = vsel %vm541, %v554, %v555
      %v557 = vrot.slane %v232, 2
      %v558 = vrot.slane %v234, 2
      %v559 = vsel %vm541, %v557, %v558
      %v560 = vrot.slane %v235, 2
      %v561 = vrot.slane %v237, 2
      %v562 = vsel %vm541, %v560, %v561
      %v563 = vrot.slane %v236, 2
      %v564 = vrot.slane %v238, 2
      %v565 = vsel %vm541, %v563, %v564
      %v566 = vrot.slane %v239, 2
      %v567 = vrot.slane %v241, 2
      %v568 = vsel %vm541, %v566, %v567
      %v569 = vrot.slane %v240, 2
      %v570 = vrot.slane %v242, 2
      %v571 = vsel %vm541, %v569, %v570
      %s577 = scalar_lea.vmem %s1, 320
      %v578 = vld [vmem:[%s577] sm:$0xff]
      %v579 = vld [vmem:[%s577 + $0x8] sm:$0xff]
      %v580 = vld [vmem:[%s577 + $0x10] sm:$0xff]
      %v581 = vld [vmem:[%s577 + $0x18] sm:$0xff]
      %v582 = vld [vmem:[%s577 + $0x20] sm:$0xff]
      %v583 = vld [vmem:[%s577 + $0x28] sm:$0xff]
      %v584 = vld [vmem:[%s577 + $0x30] sm:$0xff]
      %v585 = vld [vmem:[%s577 + $0x38] sm:$0xff]
      %v586 = vld [vmem:[%s577 + $0x40] sm:$0xff]
      %v587 = vld [vmem:[%s577 + $0x48] sm:$0xff]
      %v588 = vld [vmem:[%s577 + $0x50] sm:$0xff]
      %v589 = vld [vmem:[%s577 + $0x58] sm:$0xff]
      %v590 = vld [vmem:[%s577 + $0x60] sm:$0xff]
      %v591 = vld [vmem:[%s577 + $0x68] sm:$0xff]
      %v592 = vld [vmem:[%s577 + $0x70] sm:$0xff]
      %v593 = vld [vmem:[%s577 + $0x78] sm:$0xff]
      %v594 = vld [vmem:[%s577 + $0x80] sm:$0xff]
      %v595 = vld [vmem:[%s577 + $0x88] sm:$0xff]
      %v596 = vld [vmem:[%s577 + $0x90] sm:$0xff]
      %v597 = vld [vmem:[%s577 + $0x98] sm:$0xff]
      %v598 = vsel %vm340, %v547, 0
      %v600 = vsel %vm340, %v553, 0
      %v602 = vsel %vm340, %v559, 0
      %v604 = vsel %vm340, %v565, 0
      %v606 = vsel %vm340, %v571, 0
      %608 = vmatprep.subr.mxu0 0.0
      %609 = vmatpush1.msra.mxu0 %v578
      %610 = vmatprep.subr.mxu0 0.0
      %611 = vmatpush1.msra.mxu0 %v579
      %612 = vmatprep.subr.mxu0 0.0
      %613 = vmatpush1.msra.mxu0 %v580
      %614 = vmatprep.subr.mxu0 0.0
      %615 = vmatpush1.msra.mxu0 %v581
      %616 = vmatprep.subr.mxu0 0.0
      %617 = vmatpush1.msra.mxu0 %v582
      %618 = vmatprep.subr.mxu0 0.0
      %619 = vmatpush1.msra.mxu0 %v583
      %620 = vmatprep.subr.mxu0 0.0
      %621 = vmatpush1.msra.mxu0 %v584
      %622 = vmatprep.subr.mxu0 0.0
      %623 = vmatpush1.msra.mxu0 %v585
      %624 = vmatprep.subr.mxu0 0.0
      %625 = vmatpush1.msra.mxu0 %v586
      %626 = vmatprep.subr.mxu0 0.0
      %627 = vmatpush1.msra.mxu0 %v587
      %628 = vmatprep.subr.mxu0 0.0
      %629 = vmatpush1.msra.mxu0 %v588
      %630 = vmatprep.subr.mxu0 0.0
      %631 = vmatpush1.msra.mxu0 %v589
      %632 = vmatprep.subr.mxu0 0.0
      %633 = vmatpush1.msra.mxu0 %v590
      %634 = vmatprep.subr.mxu0 0.0
      %635 = vmatpush1.msra.mxu0 %v591
      %636 = vmatprep.subr.mxu0 0.0
      %637 = vmatpush1.msra.mxu0 %v592
      %638 = vmatprep.subr.mxu0 0.0
      %639 = vmatpush1.msra.mxu0 %v593
      %640 = vmatprep.subr.mxu0 0.0
      %641 = vmatpush1.msra.mxu0 %v594
      %642 = vmatprep.subr.mxu0 0.0
      %643 = vmatpush1.msra.mxu0 %v595
      %644 = vmatprep.subr.mxu0 0.0
      %645 = vmatpush1.msra.mxu0 %v596
      %646 = vmatprep.subr.mxu0 0.0
      %647 = vmatpush1.msra.mxu0 %v597
      %648 = vmatprep.subr.mxu0 0.0
      %649 = vmatpush1.msra.mxu0 0.0
      %650 = vmatprep.subr.mxu0 0.0
      %651 = vmatpush1.msra.mxu0 0.0
      %652 = vmatprep.subr.mxu0 0.0
      %653 = vmatpush1.msra.mxu0 0.0
      %654 = vmatprep.subr.mxu0 0.0
      %655 = vmatpush1.msra.mxu0 0.0
      %656 = vmatprep.subr.mxu0 0.0
      %657 = vmatpush1.msra.mxu0 0.0
      %658 = vmatprep.subr.mxu0 0.0
      %659 = vmatpush1.msra.mxu0 0.0
      %660 = vmatprep.subr.mxu0 0.0
      %661 = vmatpush1.msra.mxu0 0.0
      %662 = vmatprep.subr.mxu0 0.0
      %663 = vmatpush1.msra.mxu0 0.0
      %664 = vmatprep.subr.mxu0 0.0
      %665 = vmatpush1.msra.mxu0 0.0
      %666 = vmatprep.subr.mxu0 0.0
      %667 = vmatpush1.msra.mxu0 0.0
      %668 = vmatprep.subr.mxu0 0.0
      %669 = vmatpush1.msra.mxu0 0.0
      %670 = vmatprep.subr.mxu0 0.0
      %671 = vmatpush1.msra.mxu0 0.0
      %672 = vmatprep.mubr.f32.mxu0 %v598
      %673 = vmatmul.mubr.f32.gmra.mrb[0].mxu0 %v544
      %v674 = vpop.f32.mrb[0].mxu0
      %v675 = vadd.f32 0.0, %v674
      %v676 = vpop.f32.mrb[0].mxu0
      %677 = vmatprep.mubr.f32.mxu0 %v600
      %678 = vmatmul.mubr.f32.gmra.mrb[0].mxu0 %v550
      %v679 = vpop.f32.mrb[0].mxu0
      %v680 = vadd.f32 0.0, %v679
      %v681 = vpop.f32.mrb[0].mxu0
      %682 = vmatprep.mubr.f32.mxu0 %v602
      %683 = vmatmul.mubr.f32.gmra.mrb[0].mxu0 %v556
      %v684 = vpop.f32.mrb[0].mxu0
      %v685 = vadd.f32 0.0, %v684
      %v686 = vpop.f32.mrb[0].mxu0
      %687 = vmatprep.mubr.f32.mxu0 %v604
      %688 = vmatmul.mubr.f32.gmra.mrb[0].mxu0 %v562
      %v689 = vpop.f32.mrb[0].mxu0
      %v690 = vadd.f32 0.0, %v689
      %v691 = vpop.f32.mrb[0].mxu0
      %692 = vmatprep.mubr.f32.mxu0 %v606
      %693 = vmatmul.mubr.f32.gmra.mrb[0].mxu0 %v568
      %v694 = vpop.f32.mrb[0].mxu0
      %v695 = vadd.f32 0.0, %v694
      %v696 = vpop.f32.mrb[0].mxu0
      %697 = vdwg.mxu0
      %v698 = vadd.f32 %v518, %v675
      %v699 = vadd.f32 %v523, %v680
      %v700 = vadd.f32 %v528, %v685
      %v701 = vadd.f32 %v533, %v690
      %v702 = vadd.f32 %v538, %v695
      %vm703 = vcmask 1044480
      %v704 = vrot.slane %v223, 3
      %v705 = vrot.slane %v225, 3
      %v706 = vsel %vm703, %v704, %v705
      %v707 = vrot.slane %v224, 3
      %v708 = vrot.slane %v226, 3
      %v709 = vsel %vm703, %v707, %v708
      %v710 = vrot.slane %v227, 3
      %v711 = vrot.slane %v229, 3
      %v712 = vsel %vm703, %v710, %v711
      %v713 = vrot.slane %v228, 3
      %v714 = vrot.slane %v230, 3
      %v715 = vsel %vm703, %v713, %v714
      %v716 = vrot.slane %v231, 3
      %v717 = vrot.slane %v233, 3
      %v718 = vsel %vm703, %v716, %v717
      %v719 = vrot.slane %v232, 3
      %v720 = vrot.slane %v234, 3
      %v721 = vsel %vm703, %v719, %v720
      %v722 = vrot.slane %v235, 3
      %v723 = vrot.slane %v237, 3
      %v724 = vsel %vm703, %v722, %v723
      %v725 = vrot.slane %v236, 3
      %v726 = vrot.slane %v238, 3
      %v727 = vsel %vm703, %v725, %v726
      %v728 = vrot.slane %v239, 3
      %v729 = vrot.slane %v241, 3
      %v730 = vsel %vm703, %v728, %v729
      %v731 = vrot.slane %v240, 3
      %v732 = vrot.slane %v242, 3
      %v733 = vsel %vm703, %v731, %v732
      %s739 = scalar_lea.vmem %s1, 480
      %v740 = vld [vmem:[%s739] sm:$0xff]
      %v741 = vld [vmem:[%s739 + $0x8] sm:$0xff]
      %v742 = vld [vmem:[%s739 + $0x10] sm:$0xff]
      %v743 = vld [vmem:[%s739 + $0x18] sm:$0xff]
      %v744 = vld [vmem:[%s739 + $0x20] sm:$0xff]
      %v745 = vld [vmem:[%s739 + $0x28] sm:$0xff]
      %v746 = vld [vmem:[%s739 + $0x30] sm:$0xff]
      %v747 = vld [vmem:[%s739 + $0x38] sm:$0xff]
      %v748 = vld [vmem:[%s739 + $0x40] sm:$0xff]
      %v749 = vld [vmem:[%s739 + $0x48] sm:$0xff]
      %v750 = vld [vmem:[%s739 + $0x50] sm:$0xff]
      %v751 = vld [vmem:[%s739 + $0x58] sm:$0xff]
      %v752 = vld [vmem:[%s739 + $0x60] sm:$0xff]
      %v753 = vld [vmem:[%s739 + $0x68] sm:$0xff]
      %v754 = vld [vmem:[%s739 + $0x70] sm:$0xff]
      %v755 = vld [vmem:[%s739 + $0x78] sm:$0xff]
      %v756 = vld [vmem:[%s739 + $0x80] sm:$0xff]
      %v757 = vld [vmem:[%s739 + $0x88] sm:$0xff]
      %v758 = vld [vmem:[%s739 + $0x90] sm:$0xff]
      %v759 = vld [vmem:[%s739 + $0x98] sm:$0xff]
      %v760 = vsel %vm340, %v709, 0
      %v762 = vsel %vm340, %v715, 0
      %v764 = vsel %vm340, %v721, 0
      %v766 = vsel %vm340, %v727, 0
      %v768 = vsel %vm340, %v733, 0
      %770 = vmatprep.subr.mxu0 0.0
      %771 = vmatpush1.msra.mxu0 %v740
      %772 = vmatprep.subr.mxu0 0.0
      %773 = vmatpush1.msra.mxu0 %v741
      %774 = vmatprep.subr.mxu0 0.0
      %775 = vmatpush1.msra.mxu0 %v742
      %776 = vmatprep.subr.mxu0 0.0
      %777 = vmatpush1.msra.mxu0 %v743
      %778 = vmatprep.subr.mxu0 0.0
      %779 = vmatpush1.msra.mxu0 %v744
      %780 = vmatprep.subr.mxu0 0.0
      %781 = vmatpush1.msra.mxu0 %v745
      %782 = vmatprep.subr.mxu0 0.0
      %783 = vmatpush1.msra.mxu0 %v746
      %784 = vmatprep.subr.mxu0 0.0
      %785 = vmatpush1.msra.mxu0 %v747
      %786 = vmatprep.subr.mxu0 0.0
      %787 = vmatpush1.msra.mxu0 %v748
      %788 = vmatprep.subr.mxu0 0.0
      %789 = vmatpush1.msra.mxu0 %v749
      %790 = vmatprep.subr.mxu0 0.0
      %791 = vmatpush1.msra.mxu0 %v750
      %792 = vmatprep.subr.mxu0 0.0
      %793 = vmatpush1.msra.mxu0 %v751
      %794 = vmatprep.subr.mxu0 0.0
      %795 = vmatpush1.msra.mxu0 %v752
      %796 = vmatprep.subr.mxu0 0.0
      %797 = vmatpush1.msra.mxu0 %v753
      %798 = vmatprep.subr.mxu0 0.0
      %799 = vmatpush1.msra.mxu0 %v754
      %800 = vmatprep.subr.mxu0 0.0
      %801 = vmatpush1.msra.mxu0 %v755
      %802 = vmatprep.subr.mxu0 0.0
      %803 = vmatpush1.msra.mxu0 %v756
      %804 = vmatprep.subr.mxu0 0.0
      %805 = vmatpush1.msra.mxu0 %v757
      %806 = vmatprep.subr.mxu0 0.0
      %807 = vmatpush1.msra.mxu0 %v758
      %808 = vmatprep.subr.mxu0 0.0
      %809 = vmatpush1.msra.mxu0 %v759
      %810 = vmatprep.subr.mxu0 0.0
      %811 = vmatpush1.msra.mxu0 0.0
      %812 = vmatprep.subr.mxu0 0.0
      %813 = vmatpush1.msra.mxu0 0.0
      %814 = vmatprep.subr.mxu0 0.0
      %815 = vmatpush1.msra.mxu0 0.0
      %816 = vmatprep.subr.mxu0 0.0
      %817 = vmatpush1.msra.mxu0 0.0
      %818 = vmatprep.subr.mxu0 0.0
      %819 = vmatpush1.msra.mxu0 0.0
      %820 = vmatprep.subr.mxu0 0.0
      %821 = vmatpush1.msra.mxu0 0.0
      %822 = vmatprep.subr.mxu0 0.0
      %823 = vmatpush1.msra.mxu0 0.0
      %824 = vmatprep.subr.mxu0 0.0
      %825 = vmatpush1.msra.mxu0 0.0
      %826 = vmatprep.subr.mxu0 0.0
      %827 = vmatpush1.msra.mxu0 0.0
      %828 = vmatprep.subr.mxu0 0.0
      %829 = vmatpush1.msra.mxu0 0.0
      %830 = vmatprep.subr.mxu0 0.0
      %831 = vmatpush1.msra.mxu0 0.0
      %832 = vmatprep.subr.mxu0 0.0
      %833 = vmatpush1.msra.mxu0 0.0
      %834 = vmatprep.mubr.f32.mxu0 %v760
      %835 = vmatmul.mubr.f32.gmra.mrb[0].mxu0 %v706
      %v836 = vpop.f32.mrb[0].mxu0
      %v837 = vadd.f32 0.0, %v836
      %v838 = vpop.f32.mrb[0].mxu0
      %839 = vmatprep.mubr.f32.mxu0 %v762
      %840 = vmatmul.mubr.f32.gmra.mrb[0].mxu0 %v712
      %v841 = vpop.f32.mrb[0].mxu0
      %v842 = vadd.f32 0.0, %v841
      %v843 = vpop.f32.mrb[0].mxu0
      %844 = vmatprep.mubr.f32.mxu0 %v764
      %845 = vmatmul.mubr.f32.gmra.mrb[0].mxu0 %v718
      %v846 = vpop.f32.mrb[0].mxu0
      %v847 = vadd.f32 0.0, %v846
      %v848 = vpop.f32.mrb[0].mxu0
      %849 = vmatprep.mubr.f32.mxu0 %v766
      %850 = vmatmul.mubr.f32.gmra.mrb[0].mxu0 %v724
      %v851 = vpop.f32.mrb[0].mxu0
      %v852 = vadd.f32 0.0, %v851
      %v853 = vpop.f32.mrb[0].mxu0
      %854 = vmatprep.mubr.f32.mxu0 %v768
      %855 = vmatmul.mubr.f32.gmra.mrb[0].mxu0 %v730
      %v856 = vpop.f32.mrb[0].mxu0
      %v857 = vadd.f32 0.0, %v856
      %v858 = vpop.f32.mrb[0].mxu0
      %859 = vdwg.mxu0
      %v860 = vadd.f32 %v698, %v837
      %v861 = vadd.f32 %v699, %v842
      %v862 = vadd.f32 %v700, %v847
      %v863 = vadd.f32 %v701, %v852
      %v864 = vadd.f32 %v702, %v857
      %vm865 = vcmask 1043456
      %v866 = vrot.slane %v223, 4
      %v867 = vrot.slane %v225, 4
      %v868 = vsel %vm865, %v866, %v867
      %v869 = vrot.slane %v224, 4
      %v870 = vrot.slane %v226, 4
      %v871 = vsel %vm865, %v869, %v870
      %v872 = vrot.slane %v227, 4
      %v873 = vrot.slane %v229, 4
      %v874 = vsel %vm865, %v872, %v873
      %v875 = vrot.slane %v228, 4
      %v876 = vrot.slane %v230, 4
      %v877 = vsel %vm865, %v875, %v876
      %v878 = vrot.slane %v231, 4
      %v879 = vrot.slane %v233, 4
      %v880 = vsel %vm865, %v878, %v879
      %v881 = vrot.slane %v232, 4
      %v882 = vrot.slane %v234, 4
      %v883 = vsel %vm865, %v881, %v882
      %v884 = vrot.slane %v235, 4
      %v885 = vrot.slane %v237, 4
      %v886 = vsel %vm865, %v884, %v885
      %v887 = vrot.slane %v236, 4
      %v888 = vrot.slane %v238, 4
      %v889 = vsel %vm865, %v887, %v888
      %v890 = vrot.slane %v239, 4
      %v891 = vrot.slane %v241, 4
      %v892 = vsel %vm865, %v890, %v891
      %v893 = vrot.slane %v240, 4
      %v894 = vrot.slane %v242, 4
      %v895 = vsel %vm865, %v893, %v894
      %s901 = scalar_lea.vmem %s1, 640
      %v902 = vld [vmem:[%s901] sm:$0xff]
      %v903 = vld [vmem:[%s901 + $0x8] sm:$0xff]
      %v904 = vld [vmem:[%s901 + $0x10] sm:$0xff]
      %v905 = vld [vmem:[%s901 + $0x18] sm:$0xff]
      %v906 = vld [vmem:[%s901 + $0x20] sm:$0xff]
      %v907 = vld [vmem:[%s901 + $0x28] sm:$0xff]
      %v908 = vld [vmem:[%s901 + $0x30] sm:$0xff]
      %v909 = vld [vmem:[%s901 + $0x38] sm:$0xff]
      %v910 = vld [vmem:[%s901 + $0x40] sm:$0xff]
      %v911 = vld [vmem:[%s901 + $0x48] sm:$0xff]
      %v912 = vld [vmem:[%s901 + $0x50] sm:$0xff]
      %v913 = vld [vmem:[%s901 + $0x58] sm:$0xff]
      %v914 = vld [vmem:[%s901 + $0x60] sm:$0xff]
      %v915 = vld [vmem:[%s901 + $0x68] sm:$0xff]
      %v916 = vld [vmem:[%s901 + $0x70] sm:$0xff]
      %v917 = vld [vmem:[%s901 + $0x78] sm:$0xff]
      %v918 = vld [vmem:[%s901 + $0x80] sm:$0xff]
      %v919 = vld [vmem:[%s901 + $0x88] sm:$0xff]
      %v920 = vld [vmem:[%s901 + $0x90] sm:$0xff]
      %v921 = vld [vmem:[%s901 + $0x98] sm:$0xff]
      %v922 = vsel %vm340, %v871, 0
      %v924 = vsel %vm340, %v877, 0
      %v926 = vsel %vm340, %v883, 0
      %v928 = vsel %vm340, %v889, 0
      %v930 = vsel %vm340, %v895, 0
      %932 = vmatprep.subr.mxu0 0.0
      %933 = vmatpush1.msra.mxu0 %v902
      %934 = vmatprep.subr.mxu0 0.0
      %935 = vmatpush1.msra.mxu0 %v903
      %936 = vmatprep.subr.mxu0 0.0
      %937 = vmatpush1.msra.mxu0 %v904
      %938 = vmatprep.subr.mxu0 0.0
      %939 = vmatpush1.msra.mxu0 %v905
      %940 = vmatprep.subr.mxu0 0.0
      %941 = vmatpush1.msra.mxu0 %v906
      %942 = vmatprep.subr.mxu0 0.0
      %943 = vmatpush1.msra.mxu0 %v907
      %944 = vmatprep.subr.mxu0 0.0
      %945 = vmatpush1.msra.mxu0 %v908
      %946 = vmatprep.subr.mxu0 0.0
      %947 = vmatpush1.msra.mxu0 %v909
      %948 = vmatprep.subr.mxu0 0.0
      %949 = vmatpush1.msra.mxu0 %v910
      %950 = vmatprep.subr.mxu0 0.0
      %951 = vmatpush1.msra.mxu0 %v911
      %952 = vmatprep.subr.mxu0 0.0
      %953 = vmatpush1.msra.mxu0 %v912
      %954 = vmatprep.subr.mxu0 0.0
      %955 = vmatpush1.msra.mxu0 %v913
      %956 = vmatprep.subr.mxu0 0.0
      %957 = vmatpush1.msra.mxu0 %v914
      %958 = vmatprep.subr.mxu0 0.0
      %959 = vmatpush1.msra.mxu0 %v915
      %960 = vmatprep.subr.mxu0 0.0
      %961 = vmatpush1.msra.mxu0 %v916
      %962 = vmatprep.subr.mxu0 0.0
      %963 = vmatpush1.msra.mxu0 %v917
      %964 = vmatprep.subr.mxu0 0.0
      %965 = vmatpush1.msra.mxu0 %v918
      %966 = vmatprep.subr.mxu0 0.0
      %967 = vmatpush1.msra.mxu0 %v919
      %968 = vmatprep.subr.mxu0 0.0
      %969 = vmatpush1.msra.mxu0 %v920
      %970 = vmatprep.subr.mxu0 0.0
      %971 = vmatpush1.msra.mxu0 %v921
      %972 = vmatprep.subr.mxu0 0.0
      %973 = vmatpush1.msra.mxu0 0.0
      %974 = vmatprep.subr.mxu0 0.0
      %975 = vmatpush1.msra.mxu0 0.0
      %976 = vmatprep.subr.mxu0 0.0
      %977 = vmatpush1.msra.mxu0 0.0
      %978 = vmatprep.subr.mxu0 0.0
      %979 = vmatpush1.msra.mxu0 0.0
      %980 = vmatprep.subr.mxu0 0.0
      %981 = vmatpush1.msra.mxu0 0.0
      %982 = vmatprep.subr.mxu0 0.0
      %983 = vmatpush1.msra.mxu0 0.0
      %984 = vmatprep.subr.mxu0 0.0
      %985 = vmatpush1.msra.mxu0 0.0
      %986 = vmatprep.subr.mxu0 0.0
      %987 = vmatpush1.msra.mxu0 0.0
      %988 = vmatprep.subr.mxu0 0.0
      %989 = vmatpush1.msra.mxu0 0.0
      %990 = vmatprep.subr.mxu0 0.0
      %991 = vmatpush1.msra.mxu0 0.0
      %992 = vmatprep.subr.mxu0 0.0
      %993 = vmatpush1.msra.mxu0 0.0
      %994 = vmatprep.subr.mxu0 0.0
      %995 = vmatpush1.msra.mxu0 0.0
      %996 = vmatprep.mubr.f32.mxu0 %v922
      %997 = vmatmul.mubr.f32.gmra.mrb[0].mxu0 %v868
      %v998 = vpop.f32.mrb[0].mxu0
      %v999 = vadd.f32 0.0, %v998
      %v1000 = vpop.f32.mrb[0].mxu0
      %1001 = vmatprep.mubr.f32.mxu0 %v924
      %1002 = vmatmul.mubr.f32.gmra.mrb[0].mxu0 %v874
      %v1003 = vpop.f32.mrb[0].mxu0
      %v1004 = vadd.f32 0.0, %v1003
      %v1005 = vpop.f32.mrb[0].mxu0
      %1006 = vmatprep.mubr.f32.mxu0 %v926
      %1007 = vmatmul.mubr.f32.gmra.mrb[0].mxu0 %v880
      %v1008 = vpop.f32.mrb[0].mxu0
      %v1009 = vadd.f32 0.0, %v1008
      %v1010 = vpop.f32.mrb[0].mxu0
      %1011 = vmatprep.mubr.f32.mxu0 %v928
      %1012 = vmatmul.mubr.f32.gmra.mrb[0].mxu0 %v886
      %v1013 = vpop.f32.mrb[0].mxu0
      %v1014 = vadd.f32 0.0, %v1013
      %v1015 = vpop.f32.mrb[0].mxu0
      %1016 = vmatprep.mubr.f32.mxu0 %v930
      %1017 = vmatmul.mubr.f32.gmra.mrb[0].mxu0 %v892
      %v1018 = vpop.f32.mrb[0].mxu0
      %v1019 = vadd.f32 0.0, %v1018
      %v1020 = vpop.f32.mrb[0].mxu0
      %1021 = vdwg.mxu0
      %v1022 = vadd.f32 %v860, %v999
      %v1023 = vadd.f32 %v861, %v1004
      %v1024 = vadd.f32 %v862, %v1009
      %v1025 = vadd.f32 %v863, %v1014
      %v1026 = vadd.f32 %v864, %v1019
      %v1027 = vld [vmem:[%s2] sm:$0x1]
      %v1029 = vlaneseq
      %v1030 = vshrl.u32 %v1029, 7
      %v1031 = vsub.s32 0, %v1030
      %v1032 = vrot.slane %v1027, %v1031
      %v1034 = vadd.f32 %v1022, %v1032
      %v1035 = vadd.f32 %v1023, %v1032
      %v1036 = vadd.f32 %v1024, %v1032
      %v1037 = vadd.f32 %v1025, %v1032
      %v1038 = vadd.f32 %v1026, %v1032
      %v1039 = vmax.f32 %v1034, 0.0
      %v1040 = vmax.f32 %v1035, 0.0
      %v1041 = vmax.f32 %v1036, 0.0
      %v1042 = vmax.f32 %v1037, 0.0
      %v1043 = vmax.f32 %v1038, 0.0
      %1044 = vxpose.xlu0.b32.start [1/16] %v1039, 128
      %1045 = vxpose.xlu0.b32.cont [2/16] %v1040, 128
      %1046 = vxpose.xlu0.b32.cont [3/16] %v1041, 128
      %1047 = vxpose.xlu0.b32.cont [4/16] %v1042, 128
      %1048 = vxpose.xlu0.b32.cont [5/16] %v1043, 128
      %1049 = vxpose.xlu0.b32.cont [6/16] 0.0, 128
      %1050 = vxpose.xlu0.b32.cont [7/16] 0.0, 128
      %1051 = vxpose.xlu0.b32.cont [8/16] 0.0, 128
      %1052 = vxpose.xlu0.b32.cont [9/16] 0.0, 128
      %1053 = vxpose.xlu0.b32.cont [10/16] 0.0, 128
      %1054 = vxpose.xlu0.b32.cont [11/16] 0.0, 128
      %1055 = vxpose.xlu0.b32.cont [12/16] 0.0, 128
      %1056 = vxpose.xlu0.b32.cont [13/16] 0.0, 128
      %1057 = vxpose.xlu0.b32.cont [14/16] 0.0, 128
      %1058 = vxpose.xlu0.b32.cont [15/16] 0.0, 128
      %1059 = vxpose.xlu0.b32.end [16/16] 0.0, 128
      %v1060 = vpop.trf.xlu0
      %v1061 = vpop.trf.xlu0
      %v1062 = vpop.trf.xlu0
      %v1063 = vpop.trf.xlu0
      %v1064 = vpop.trf.xlu0
      %v1065 = vpop.trf.xlu0
      %v1066 = vpop.trf.xlu0
      %v1067 = vpop.trf.xlu0
      %v1068 = vpop.trf.xlu0
      %v1069 = vpop.trf.xlu0
      %v1070 = vpop.trf.xlu0
      %v1071 = vpop.trf.xlu0
      %v1072 = vpop.trf.xlu0
      %v1073 = vpop.trf.xlu0
      %v1074 = vpop.trf.xlu0
      %v1075 = vpop.trf.xlu0
      %v1076 = vld [vmem:[%s3] sm:$0x1]
      %v1078 = vlaneseq
      %v1079 = vshrl.u32 %v1078, 7
      %v1080 = vsub.s32 0, %v1079
      %v1081 = vrot.slane %v1076, %v1080
      %v1083 = vadd.f32 %v1060, %v1081
      %vm1084 = vcmask 326656
      %v1085 = vsel %vm1084, %v1083, -inf
      %1086 = vmax.xlane.f32.xlu0 %v1085
      %v1087 = vpop.xlane.xlu0 %1086
      %v1088 = vsub.f32 %v1083, %v1087
      %v1089 = vmul.f32 %v1088, 1.442695
      %v1090 = vpow.pop %v1089
      %v1091 = vld [vmem:[%s4] sm:$0xff]
      %v1092 = vld [vmem:[%s4 + $0x8] sm:$0xff]
      %v1093 = vld [vmem:[%s4 + $0x10] sm:$0xff]
      %v1094 = vld [vmem:[%s4 + $0x18] sm:$0xff]
      %v1095 = vld [vmem:[%s4 + $0x20] sm:$0xff]
      %v1097 = vsel %vm1084, %v1090, 0
      %1099 = vmatprep.subr.mxu0 0.0
      %1100 = vmatpush1.msra.mxu0 %v1091
      %1101 = vmatprep.subr.mxu0 0.0
      %1102 = vmatpush1.msra.mxu0 %v1092
      %1103 = vmatprep.subr.mxu0 0.0
      %1104 = vmatpush1.msra.mxu0 %v1093
      %1105 = vmatprep.subr.mxu0 0.0
      %1106 = vmatpush1.msra.mxu0 %v1094
      %1107 = vmatprep.subr.mxu0 0.0
      %1108 = vmatpush1.msra.mxu0 %v1095
      %1109 = vmatprep.subr.mxu0 0.0
      %1110 = vmatpush1.msra.mxu0 0.0
      %1111 = vmatprep.subr.mxu0 0.0
      %1112 = vmatpush1.msra.mxu0 0.0
      %1113 = vmatprep.subr.mxu0 0.0
      %1114 = vmatpush1.msra.mxu0 0.0
      %1115 = vmatprep.subr.mxu0 0.0
      %1116 = vmatpush1.msra.mxu0 0.0
      %1117 = vmatprep.subr.mxu0 0.0
      %1118 = vmatpush1.msra.mxu0 0.0
      %1119 = vmatprep.subr.mxu0 0.0
      %1120 = vmatpush1.msra.mxu0 0.0
      %1121 = vmatprep.subr.mxu0 0.0
      %1122 = vmatpush1.msra.mxu0 0.0
      %1123 = vmatprep.subr.mxu0 0.0
      %1124 = vmatpush1.msra.mxu0 0.0
      %1125 = vmatprep.subr.mxu0 0.0
      %1126 = vmatpush1.msra.mxu0 0.0
      %1127 = vmatprep.subr.mxu0 0.0
      %1128 = vmatpush1.msra.mxu0 0.0
      %1129 = vmatprep.subr.mxu0 0.0
      %1130 = vmatpush1.msra.mxu0 0.0
      %1131 = vmatprep.subr.mxu0 0.0
      %1132 = vmatpush1.msra.mxu0 0.0
      %1133 = vmatprep.subr.mxu0 0.0
      %1134 = vmatpush1.msra.mxu0 0.0
      %1135 = vmatprep.subr.mxu0 0.0
      %1136 = vmatpush1.msra.mxu0 0.0
      %1137 = vmatprep.subr.mxu0 0.0
      %1138 = vmatpush1.msra.mxu0 0.0
      %1139 = vmatprep.subr.mxu0 0.0
      %1140 = vmatpush1.msra.mxu0 0.0
      %1141 = vmatprep.subr.mxu0 0.0
      %1142 = vmatpush1.msra.mxu0 0.0
      %1143 = vmatprep.subr.mxu0 0.0
      %1144 = vmatpush1.msra.mxu0 0.0
      %1145 = vmatprep.subr.mxu0 0.0
      %1146 = vmatpush1.msra.mxu0 0.0
      %1147 = vmatprep.subr.mxu0 0.0
      %1148 = vmatpush1.msra.mxu0 0.0
      %1149 = vmatprep.subr.mxu0 0.0
      %1150 = vmatpush1.msra.mxu0 0.0
      %1151 = vmatprep.subr.mxu0 0.0
      %1152 = vmatpush1.msra.mxu0 0.0
      %1153 = vmatprep.subr.mxu0 0.0
      %1154 = vmatpush1.msra.mxu0 0.0
      %1155 = vmatprep.subr.mxu0 0.0
      %1156 = vmatpush1.msra.mxu0 0.0
      %1157 = vmatprep.subr.mxu0 0.0
      %1158 = vmatpush1.msra.mxu0 0.0
      %1159 = vmatprep.subr.mxu0 0.0
      %1160 = vmatpush1.msra.mxu0 0.0
      %1161 = vmatprep.subr.mxu0 0.0
      %1162 = vmatpush1.msra.mxu0 0.0
      %1163 = vmatprep.mubr.f32.mxu0 0.0
      %1164 = vmatmul.mubr.f32.gmra.mrb[0].mxu0 %v1097
      %v1165 = vpop.f32.mrb[0].mxu0
      %v1166 = vadd.f32 0.0, %v1165
      %v1167 = vpop.f32.mrb[0].mxu0
      %1168 = vdwg.mxu0
      %1170 = vset.pattern.permute.xlu0 0
      %1171 = vperm.xlu0 %1170, %v1166
      %v1172 = vpop.permute.xlu0 %1171
      %v1174 = vrcp.pop %v1172
      %v1175 = vmul.f32 %v1166, %v1174
      %1177 = vrot.lane.b32.xlu0 %v1175, 127
      %v1178 = vpop.permute.xlu0 %1177
      %vm1180 = vcmask 15360
      %1181 = vst.msk [vmem:[%s222] sm:$0xff] %vm1180, %v1178
      %p1182 = scmp.lt.s32.totalorder %s16, 1
      %s1183 = scalar_select %p1182, %s16, 1
      %s1184 = smul.addr %s1183, 8
      %s1185 = scalar_lea.vmem %s5, %s1184
      // Predicated region
      $region41: #{spatial_softmax_image_encoder.5} parent=39 // pred_check
        %p1186 = pneg %p144
      $region42: #{spatial_softmax_image_encoder.5} parent=39 // pred_check_branch
        %1188 = sbr.rel (%p1186) target = $region44
      $region43: #{spatial_softmax_image_encoder.5} parent=39 // pred_region
        _
      $region44: #{spatial_softmax_image_encoder.5} parent=39 // pred_fallthru
        _
    $region40: #{spatial_softmax_image_encoder.5} parent=5 // pred_fallthru
      _
    %p1189 = scmp.le.s32.totalorder 2, %s11
    // Predicated region
    $region45: #{spatial_softmax_image_encoder.5} parent=5 // pred_check
      %p1190 = pneg %p1189
    $region46: #{spatial_softmax_image_encoder.5} parent=5 // pred_check_branch
      %1192 = sbr.rel (%p1190) target = $region48
    $region47: #{spatial_softmax_image_encoder.5} parent=5 // pred_region
      %s1193 = ssub.s32 %s11, 2
      // Predicated region
      $region49: #{spatial_softmax_image_encoder.5} parent=47 // pred_check
        %p1194 = pneg %p150
      $region50: #{spatial_softmax_image_encoder.5} parent=47 // pred_check_branch
        %1196 = sbr.rel (%p1194) target = $region52
      $region51: #{spatial_softmax_image_encoder.5} parent=47 // pred_region
        %p1197 = scmp.lt.s32.totalorder %s17, 1
        %s1198 = scalar_select %p1197, %s17, 1
        %s1199 = smul.addr %s1198, 8
        %s1200 = scalar_lea.vmem %s5, %s1199
      $region52: #{spatial_softmax_image_encoder.5} parent=47 // pred_fallthru
        _
    $region48: #{spatial_softmax_image_encoder.5} parent=5 // pred_fallthru
      _
  $region6: #{spatial_softmax_image_encoder.5} parent=0 // loop_footer
    %s15 = sadd.s32 1, %s11
  $region7: #{spatial_softmax_image_encoder.5} parent=0 // loop_footer_branch
    %10 = sbr.rel target = $region3
  $region8: #{spatial_softmax_image_encoder.5} parent=0 // loop_exit
    _

</llo_original>
